<compile_context>
chip_gen: v7x
topology: tpu7x:2x2x1
jax: 0.10.0
libtpu: 0.0.40
codegen_flags: <defaults>
</compile_context>

<pallas_src>
import jax
import jax.numpy as jnp
from jax.experimental import pallas as pl
from jax.experimental.pallas import tpu as pltpu

# ----- synthetic config (stands in for CommonArgs / dataset) -----
X_DIM = 4          # dataset.x_dim
POS_DIM = 3        # dataset.pos_dim
KR = 8             # config.backbone.kr
HIDDEN = 32        # config.backbone.hidden_size
OUT_DIM = 2        # config.dataset.num_task
B = 2              # graphs per batch
M = 16             # nodes per graph (contiguous, fixed size)
N = B * M
LANES = 128        # TPU lane width; classifier output is padded to this

GRAPHS_PER_BLOCK = B            # graphs fused into one grid step (group size)
NUM_BLOCKS = B // GRAPHS_PER_BLOCK
GN = GRAPHS_PER_BLOCK * M       # nodes per grid step

assert M >= KR, "each graph must have at least KR nodes (fixed-degree kNN)"
assert B % GRAPHS_PER_BLOCK == 0


# --------------------------------------------------------------------------
# Weight-slab layout: every weight/bias lives in one (rows, 128) f32 slab,
# 8-row aligned, content starting at lane 0, zero padded elsewhere.
# --------------------------------------------------------------------------
_PARAM_SHAPES = (
    ('w_in_x',   X_DIM,       HIDDEN),
    ('w_in_p',   POS_DIM,     HIDDEN),
    ('b_in',     1,           HIDDEN),
    ('w_msg_h',  HIDDEN,      HIDDEN),
    ('w_msg_d',  1,           HIDDEN),
    ('w_msg_dir', POS_DIM,    HIDDEN),
    ('b_msg',    1,           HIDDEN),
    ('w_upd_h',  HIDDEN,      HIDDEN),
    ('w_upd_a',  HIDDEN,      HIDDEN),
    ('b_upd',    1,           HIDDEN),
    ('w1',       HIDDEN,      2 * HIDDEN),
    ('b1',       1,           2 * HIDDEN),
    ('w2',       2 * HIDDEN,  HIDDEN),
    ('b2',       1,           HIDDEN),
    ('w3',       HIDDEN,      OUT_DIM),   # carved with full 128 lanes in-kernel
    ('b3',       1,           OUT_DIM),   # -> lane-dense logits store
)


def _compute_offsets():
    offs, r = {}, 0
    for name, rows, cols in _PARAM_SHAPES:
        offs[name] = (r, rows, cols)
        r += ((rows + 7) // 8) * 8          # 8-sublane aligned sub-blocks
    return offs, r


_OFFS, _SLAB_ROWS = _compute_offsets()


def pack_weight_slab(params):
    """One pre-concatenated weight slab -> one DMA instead of 16."""
    slab = jnp.zeros((_SLAB_ROWS, LANES), jnp.float32)
    for name, rows, cols in _PARAM_SHAPES:
        r0, _, _ = _OFFS[name]
        slab = slab.at[r0:r0 + rows, :cols].set(params[name])
    return slab


# --------------------------------------------------------------------------
# Fused per-group forward kernel
# --------------------------------------------------------------------------
def _fused_forward_kernel(x_ref, pos_ref, slab_ref, out_ref):
    f32 = jnp.float32

    def wslice(name, lanes=None):
        r0, rows, cols = _OFFS[name]
        c = cols if lanes is None else lanes
        return slab_ref[r0:r0 + rows, :c]       # static, 8-aligned, lane-0 slices

    xg = x_ref[...]                               # (GN, X_DIM)
    pg = pos_ref[...]                             # (GN, POS_DIM); CoorsNorm == Identity

    # --- node embedding: relu([x||pos] @ W_in + b) via split weights (no concat) ---
    h = jnp.dot(xg, wslice('w_in_x'), preferred_element_type=f32)
    h = h + jnp.dot(pg, wslice('w_in_p'), preferred_element_type=f32)
    h = jnp.maximum(h + wslice('b_in'), 0.0)      # (GN, H)

    # --- gram + per-node squared norms (diagonal via skinny MXU matmuls) ---
    gram = jax.lax.dot_general(pg, pg, (((1,), (1,)), ((), ())),
                               preferred_element_type=f32)          # (GN, GN)
    row_i = jax.lax.broadcasted_iota(jnp.int32, (GN, GN), 0)
    col_i = jax.lax.broadcasted_iota(jnp.int32, (GN, GN), 1)
    eye = (row_i == col_i).astype(f32)
    dgram = gram * eye
    sq_row = jnp.dot(jnp.ones((1, GN), f32), dgram,
                     preferred_element_type=f32)                    # (1, GN)  |p_j|^2
    sq_col = jnp.dot(dgram, jnp.ones((GN, 1), f32),
                     preferred_element_type=f32)                    # (GN, 1)  |p_i|^2

    # --- kNN scores (ordering-equivalent to d^2: row-constant |p_i|^2 dropped) ---
    # cross-graph mask keeps neighbors inside each graph of the fused group.
    inv_m = f32(1.0 / M)
    gid_row = jnp.floor((row_i.astype(f32) + 0.5) * inv_m)
    gid_col = jnp.floor((col_i.astype(f32) + 0.5) * inv_m)
    cross = (gid_row != gid_col).astype(f32)
    score = sq_row - 2.0 * gram + cross * f32(1e30)                 # (GN, GN)

    # --- hoisted linear pieces of the message MLP: (sel@h)@W == sel@(h@W) ---
    hW = jnp.dot(h, wslice('w_msg_h'), preferred_element_type=f32)      # (GN, H)
    pW = jnp.dot(pg, wslice('w_msg_dir'), preferred_element_type=f32)   # (GN, H)
    gather_src = jnp.concatenate([hW, pW], axis=-1)                     # (GN, 2H) <= 128 lanes
    w_msg_d = wslice('w_msg_d')                                         # (1, H)
    b_msg = wslice('b_msg')                                             # (1, H)

    # --- fused top-KR selection + single one-hot MXU gather + message + mean ---
    # Self-loops are intentionally kept: reference uses knn_graph(..., loop=True),
    # and the diagonal (d^2 = 0) is each row's minimum, so node i picks itself first.
    col_f = col_i.astype(f32)
    agg = jnp.zeros((GN, HIDDEN), f32)
    d = score
    for _ in range(KR):                                            # static unrolled loop
        min_val = jnp.min(d, axis=-1, keepdims=True)               # (GN, 1)
        sel_idx = jnp.min(jnp.where(d == min_val, col_f, f32(GN)),
                          axis=-1, keepdims=True)                  # tie-break: lowest idx
        sel = (col_f == sel_idx).astype(f32)                       # (GN, GN) one-hot rows
        d = d + sel * f32(1e30)                                    # mask for next pass

        g = jnp.dot(sel, gather_src, preferred_element_type=f32)   # ONE MXU gather pass
        hW_nb = g[:, :HIDDEN]                                      # sel @ (h @ Wmsg_h)
        pW_nb = g[:, HIDDEN:2 * HIDDEN]                            # sel @ (pos @ Wmsg_dir)

        # |p_i - p_sel|^2 recovered from the selection score (no extra gather/reduce)
        sumsq = jnp.maximum(min_val + sq_col, 0.0)                 # (GN, 1)
        rel_dist = jnp.sqrt(sumsq)
        inv = 1.0 / (rel_dist + f32(1e-6))       # matches reference diff/(||diff||+1e-6)

        # message MLP on [h_nb || rel_dist || edge_dir] with all weight matmuls hoisted
        msg = hW_nb + rel_dist * w_msg_d + inv * (pW_nb - pW) + b_msg
        agg = agg + jnp.maximum(msg, 0.0)
    agg = agg * f32(1.0 / KR)                                      # mean over KR neighbors

    # --- node update: relu([h||agg] @ W_upd + b) via split weights ---
    emb = jnp.dot(h, wslice('w_upd_h'), preferred_element_type=f32)
    emb = emb + jnp.dot(agg, wslice('w_upd_a'), preferred_element_type=f32)
    emb = jnp.maximum(emb + wslice('b_upd'), 0.0)                  # (GN, H)

    # --- global_mean_pool per graph via one-hot MXU matmul ---
    pr = jax.lax.broadcasted_iota(jnp.int32, (GRAPHS_PER_BLOCK, GN), 0).astype(f32)
    pc = jax.lax.broadcasted_iota(jnp.int32, (GRAPHS_PER_BLOCK, GN), 1).astype(f32)
    pool_mat = (jnp.floor((pc + 0.5) * inv_m) == pr).astype(f32) * inv_m
    pooled = jnp.dot(pool_mat, emb, preferred_element_type=f32)    # (GB, H)

    # --- classifier MLP [H, 2H, H, OUT_DIM] ---
    # TODO(synk): dropout_p and norm_type layers are eval-mode identities here.
    z = jnp.maximum(jnp.dot(pooled, wslice('w1'), preferred_element_type=f32)
                    + wslice('b1'), 0.0)
    z = jnp.maximum(jnp.dot(z, wslice('w2'), preferred_element_type=f32)
                    + wslice('b2'), 0.0)
    # last layer lane-padded to 128 -> lane-dense unmasked store
    logits = (jnp.dot(z, wslice('w3', lanes=LANES), preferred_element_type=f32)
              + wslice('b3', lanes=LANES))                         # (GB, 128)

    out_ref[...] = logits.reshape(out_ref.shape)


# --------------------------------------------------------------------------
# Parameter init (deterministic, synthetic; weights stored pre-split)
# --------------------------------------------------------------------------
def init_params(key):
    def lin(k, fin, fout):
        scale = 1.0 / jnp.sqrt(jnp.float32(fin))
        w = jax.random.uniform(k, (fin, fout), jnp.float32, -scale, scale)
        b = jnp.zeros((1, fout), jnp.float32)
        return w, b

    ks = jax.random.split(key, 6)
    p = {}
    # node embed acts on [x || pos] -> split weight rows, no in-kernel concat
    w_in, p['b_in'] = lin(ks[0], X_DIM + POS_DIM, HIDDEN)
    p['w_in_x'], p['w_in_p'] = w_in[:X_DIM], w_in[X_DIM:]
    # message acts on [h_nb || rel_dist || edge_dir]
    w_msg, p['b_msg'] = lin(ks[1], HIDDEN + 1 + POS_DIM, HIDDEN)
    p['w_msg_h'] = w_msg[:HIDDEN]
    p['w_msg_d'] = w_msg[HIDDEN:HIDDEN + 1]
    p['w_msg_dir'] = w_msg[HIDDEN + 1:]
    # node update acts on [h || agg]
    w_upd, p['b_upd'] = lin(ks[2], 2 * HIDDEN, HIDDEN)
    p['w_upd_h'], p['w_upd_a'] = w_upd[:HIDDEN], w_upd[HIDDEN:]
    # classifier MLP [H, 2H, H, OUT_DIM]
    p['w1'], p['b1'] = lin(ks[3], HIDDEN, 2 * HIDDEN)
    p['w2'], p['b2'] = lin(ks[4], 2 * HIDDEN, HIDDEN)
    p['w3'], p['b3'] = lin(ks[5], HIDDEN, OUT_DIM)
    return p


# --------------------------------------------------------------------------
# Forward (single fused pallas_call; graph groups across grid steps / TCs)
# --------------------------------------------------------------------------
def base_model_forward(params, x, pos, batch):
    # Graphs are contiguous with exactly M nodes each; the batch vector is implied
    # by the (B, M) layout and only consumed structurally.
    # TODO(synk): ragged per-graph node counts (explicit batch vector) not handled.
    del batch
    slab = pack_weight_slab(params)

    out = pl.pallas_call(
        _fused_forward_kernel,
        out_shape=jax.ShapeDtypeStruct((NUM_BLOCKS, GRAPHS_PER_BLOCK, LANES),
                                       jnp.float32),
        grid_spec=pltpu.PrefetchScalarGridSpec(
            num_scalar_prefetch=0,
            grid=(NUM_BLOCKS,),
            in_specs=[
                pl.BlockSpec((GN, X_DIM), lambda g: (g, 0)),      # group node features
                pl.BlockSpec((GN, POS_DIM), lambda g: (g, 0)),    # group coordinates
                pl.BlockSpec((_SLAB_ROWS, LANES), lambda g: (0, 0)),  # one weight slab
            ],
            out_specs=pl.BlockSpec((1, GRAPHS_PER_BLOCK, LANES),
                                   lambda g: (g, 0, 0)),
        ),
        compiler_params=pltpu.CompilerParams(
            dimension_semantics=("parallel",)),   # graph groups split across TCs (v7x)
    )(x, pos, slab)
    return out.reshape(B, LANES)[:, :OUT_DIM]


if __name__ == "__main__":
    key = jax.random.PRNGKey(0)
    k_param, k_x, k_pos = jax.random.split(key, 3)

    params = init_params(k_param)
    x = jax.random.normal(k_x, (N, X_DIM), jnp.float32)
    pos = jax.random.normal(k_pos, (N, POS_DIM), jnp.float32)
    batch = jnp.repeat(jnp.arange(B, dtype=jnp.int32), M)

    fwd = jax.jit(base_model_forward)
    out = fwd(params, x, pos, batch)
    jax.block_until_ready(out)
    assert out.shape == (B, OUT_DIM)
    print("KERNEL_OK")
</pallas_src>

<mosaic_0001>
module attributes {stable_mosaic.version = 11 : i64} {
  func.func @_fused_forward_kernel(%arg0: i32, %arg1: memref<32x4xf32, #tpu.memory_space<vmem>>, %arg2: memref<32x3xf32, #tpu.memory_space<vmem>>, %arg3: memref<304x128xf32, #tpu.memory_space<vmem>>, %arg4: memref<1x2x128xf32, #tpu.memory_space<vmem>>) attributes {dimension_semantics = [#tpu.dimension_semantics<parallel>], iteration_bounds = array<i64: 1>, scalar_prefetch = 0 : i64, scratch_operands = 0 : i64, tpu.core_type = #tpu.core_type<tc>, window_params = [{transform_indices = @transform_0, window_bounds = array<i64: 32, 4>}, {transform_indices = @transform_1, window_bounds = array<i64: 32, 3>}, {pipeline_mode = #tpu.pipeline_mode<synchronous>, transform_indices = @transform_2, window_bounds = array<i64: 304, 128>}, {transform_indices = @transform_3, window_bounds = array<i64: 1, 2, 128>}]} {
    %c0 = arith.constant 0 : index
    %c0_0 = arith.constant 0 : index
    %0 = vector.load %arg1[%c0, %c0_0] : memref<32x4xf32, #tpu.memory_space<vmem>>, vector<32x4xf32>
    %c0_1 = arith.constant 0 : index
    %c0_2 = arith.constant 0 : index
    %1 = vector.load %arg2[%c0_1, %c0_2] : memref<32x3xf32, #tpu.memory_space<vmem>>, vector<32x3xf32>
    %c0_3 = arith.constant 0 : index
    %c0_4 = arith.constant 0 : index
    %2 = vector.load %arg3[%c0_3, %c0_4] : memref<304x128xf32, #tpu.memory_space<vmem>>, vector<4x32xf32>
    %cst = arith.constant dense<0.000000e+00> : vector<32x32xf32>
    %3 = tpu.matmul %0, %2, %cst {dimension_numbers = #tpu.dot_dimension_numbers<[1], [0], [0], [1], [0, 0, 1, 1], [], []>} : vector<32x4xf32>, vector<4x32xf32>, vector<32x32xf32> -> vector<32x32xf32>
    %c8 = arith.constant 8 : index
    %c0_5 = arith.constant 0 : index
    %4 = vector.load %arg3[%c8, %c0_5] : memref<304x128xf32, #tpu.memory_space<vmem>>, vector<3x32xf32>
    %cst_6 = arith.constant dense<0.000000e+00> : vector<32x32xf32>
    %5 = tpu.matmul %1, %4, %cst_6 {dimension_numbers = #tpu.dot_dimension_numbers<[1], [0], [0], [1], [0, 0, 1, 1], [], []>} : vector<32x3xf32>, vector<3x32xf32>, vector<32x32xf32> -> vector<32x32xf32>
    %6 = arith.addf %3, %5 : vector<32x32xf32>
    %c16 = arith.constant 16 : index
    %c0_7 = arith.constant 0 : index
    %7 = vector.load %arg3[%c16, %c0_7] : memref<304x128xf32, #tpu.memory_space<vmem>>, vector<1x32xf32>
    %8 = vector.broadcast %7 : vector<1x32xf32> to vector<32x32xf32>
    %9 = arith.addf %6, %8 : vector<32x32xf32>
    %cst_8 = arith.constant 0.000000e+00 : f32
    %10 = vector.broadcast %cst_8 : f32 to vector<32x32xf32>
    %11 = arith.maximumf %9, %10 : vector<32x32xf32>
    %cst_9 = arith.constant dense<0.000000e+00> : vector<32x32xf32>
    %12 = tpu.matmul %1, %1, %cst_9 {dimension_numbers = #tpu.dot_dimension_numbers<[1], [1], [0], [0], [0, 0, 1, 0], [], []>} : vector<32x3xf32>, vector<32x3xf32>, vector<32x32xf32> -> vector<32x32xf32>
    %13 = tpu.iota {dimensions = array<i32: 0>} : vector<32x32xi32>
    %14 = tpu.iota {dimensions = array<i32: 1>} : vector<32x32xi32>
    %15 = arith.cmpi eq, %13, %14 : vector<32x32xi32>
    %16 = arith.extui %15 : vector<32x32xi1> to vector<32x32xi32>
    %17 = arith.sitofp %16 : vector<32x32xi32> to vector<32x32xf32>
    %18 = arith.mulf %12, %17 : vector<32x32xf32>
    %cst_10 = arith.constant 1.000000e+00 : f32
    %19 = vector.broadcast %cst_10 : f32 to vector<1x32xf32>
    %cst_11 = arith.constant dense<0.000000e+00> : vector<1x32xf32>
    %20 = tpu.matmul %19, %18, %cst_11 {dimension_numbers = #tpu.dot_dimension_numbers<[1], [0], [0], [1], [0, 0, 1, 1], [], []>} : vector<1x32xf32>, vector<32x32xf32>, vector<1x32xf32> -> vector<1x32xf32>
    %cst_12 = arith.constant 1.000000e+00 : f32
    %21 = vector.broadcast %cst_12 : f32 to vector<32x1xf32>
    %cst_13 = arith.constant dense<0.000000e+00> : vector<32x1xf32>
    %22 = tpu.matmul %18, %21, %cst_13 {dimension_numbers = #tpu.dot_dimension_numbers<[1], [0], [0], [1], [0, 0, 1, 1], [], []>} : vector<32x32xf32>, vector<32x1xf32>, vector<32x1xf32> -> vector<32x1xf32>
    %23 = arith.sitofp %13 : vector<32x32xi32> to vector<32x32xf32>
    %cst_14 = arith.constant 5.000000e-01 : f32
    %24 = vector.broadcast %cst_14 : f32 to vector<32x32xf32>
    %25 = arith.addf %23, %24 : vector<32x32xf32>
    %cst_15 = arith.constant 6.250000e-02 : f32
    %26 = vector.broadcast %cst_15 : f32 to vector<32x32xf32>
    %27 = arith.mulf %25, %26 : vector<32x32xf32>
    %28 = math.floor %27 : vector<32x32xf32>
    %29 = arith.sitofp %14 : vector<32x32xi32> to vector<32x32xf32>
    %cst_16 = arith.constant 5.000000e-01 : f32
    %30 = vector.broadcast %cst_16 : f32 to vector<32x32xf32>
    %31 = arith.addf %29, %30 : vector<32x32xf32>
    %cst_17 = arith.constant 6.250000e-02 : f32
    %32 = vector.broadcast %cst_17 : f32 to vector<32x32xf32>
    %33 = arith.mulf %31, %32 : vector<32x32xf32>
    %34 = math.floor %33 : vector<32x32xf32>
    %35 = arith.cmpf one, %28, %34 : vector<32x32xf32>
    %36 = arith.extui %35 : vector<32x32xi1> to vector<32x32xi32>
    %37 = arith.sitofp %36 : vector<32x32xi32> to vector<32x32xf32>
    %cst_18 = arith.constant 2.000000e+00 : f32
    %38 = vector.broadcast %cst_18 : f32 to vector<32x32xf32>
    %39 = arith.mulf %38, %12 : vector<32x32xf32>
    %40 = vector.broadcast %20 : vector<1x32xf32> to vector<32x32xf32>
    %41 = arith.subf %40, %39 : vector<32x32xf32>
    %cst_19 = arith.constant 1.000000e+30 : f32
    %42 = vector.broadcast %cst_19 : f32 to vector<32x32xf32>
    %43 = arith.mulf %37, %42 : vector<32x32xf32>
    %44 = arith.addf %41, %43 : vector<32x32xf32>
    %c24 = arith.constant 24 : index
    %c0_20 = arith.constant 0 : index
    %45 = vector.load %arg3[%c24, %c0_20] : memref<304x128xf32, #tpu.memory_space<vmem>>, vector<32x32xf32>
    %cst_21 = arith.constant dense<0.000000e+00> : vector<32x32xf32>
    %46 = tpu.matmul %11, %45, %cst_21 {dimension_numbers = #tpu.dot_dimension_numbers<[1], [0], [0], [1], [0, 0, 1, 1], [], []>} : vector<32x32xf32>, vector<32x32xf32>, vector<32x32xf32> -> vector<32x32xf32>
    %c64 = arith.constant 64 : index
    %c0_22 = arith.constant 0 : index
    %47 = vector.load %arg3[%c64, %c0_22] : memref<304x128xf32, #tpu.memory_space<vmem>>, vector<3x32xf32>
    %cst_23 = arith.constant dense<0.000000e+00> : vector<32x32xf32>
    %48 = tpu.matmul %1, %47, %cst_23 {dimension_numbers = #tpu.dot_dimension_numbers<[1], [0], [0], [1], [0, 0, 1, 1], [], []>} : vector<32x3xf32>, vector<3x32xf32>, vector<32x32xf32> -> vector<32x32xf32>
    %49 = tpu.concatenate %46, %48 in 1 : vector<32x32xf32>, vector<32x32xf32> -> vector<32x64xf32>
    %c56 = arith.constant 56 : index
    %c0_24 = arith.constant 0 : index
    %50 = vector.load %arg3[%c56, %c0_24] : memref<304x128xf32, #tpu.memory_space<vmem>>, vector<1x32xf32>
    %c72 = arith.constant 72 : index
    %c0_25 = arith.constant 0 : index
    %51 = vector.load %arg3[%c72, %c0_25] : memref<304x128xf32, #tpu.memory_space<vmem>>, vector<1x32xf32>
    %52 = arith.sitofp %14 : vector<32x32xi32> to vector<32x32xf32>
    %cst_26 = arith.constant 0.000000e+00 : f32
    %53 = vector.broadcast %cst_26 : f32 to vector<32x32xf32>
    %cst_27 = arith.constant dense<0x7F800000> : vector<32xf32>
    %54 = vector.multi_reduction <minimumf>, %44, %cst_27 [1] : vector<32x32xf32> to vector<32xf32>
    %55 = vector.shape_cast %54 : vector<32xf32> to vector<32x1xf32>
    %56 = vector.broadcast %55 : vector<32x1xf32> to vector<32x32xf32>
    %57 = arith.cmpf oeq, %44, %56 : vector<32x32xf32>
    %cst_28 = arith.constant 3.200000e+01 : f32
    %58 = vector.broadcast %cst_28 : f32 to vector<32x32xf32>
    %59 = arith.select %57, %52, %58 : vector<32x32xi1>, vector<32x32xf32>
    %cst_29 = arith.constant dense<0x7F800000> : vector<32xf32>
    %60 = vector.multi_reduction <minimumf>, %59, %cst_29 [1] : vector<32x32xf32> to vector<32xf32>
    %61 = vector.shape_cast %60 : vector<32xf32> to vector<32x1xf32>
    %62 = vector.broadcast %61 : vector<32x1xf32> to vector<32x32xf32>
    %63 = arith.cmpf oeq, %52, %62 : vector<32x32xf32>
    %64 = arith.extui %63 : vector<32x32xi1> to vector<32x32xi32>
    %65 = arith.sitofp %64 : vector<32x32xi32> to vector<32x32xf32>
    %cst_30 = arith.constant 1.000000e+30 : f32
    %66 = vector.broadcast %cst_30 : f32 to vector<32x32xf32>
    %67 = arith.mulf %65, %66 : vector<32x32xf32>
    %68 = arith.addf %44, %67 : vector<32x32xf32>
    %cst_31 = arith.constant dense<0.000000e+00> : vector<32x64xf32>
    %69 = tpu.matmul %65, %49, %cst_31 {dimension_numbers = #tpu.dot_dimension_numbers<[1], [0], [0], [1], [0, 0, 1, 1], [], []>} : vector<32x32xf32>, vector<32x64xf32>, vector<32x64xf32> -> vector<32x64xf32>
    %70 = vector.extract_strided_slice %69 {offsets = [0, 0], sizes = [32, 32], strides = [1, 1]} : vector<32x64xf32> to vector<32x32xf32>
    %71 = vector.extract_strided_slice %69 {offsets = [0, 32], sizes = [32, 32], strides = [1, 1]} : vector<32x64xf32> to vector<32x32xf32>
    %72 = arith.addf %55, %22 : vector<32x1xf32>
    %cst_32 = arith.constant 0.000000e+00 : f32
    %73 = vector.broadcast %cst_32 : f32 to vector<32x1xf32>
    %74 = arith.maximumf %72, %73 : vector<32x1xf32>
    %75 = math.sqrt %74 : vector<32x1xf32>
    %cst_33 = arith.constant 9.99999997E-7 : f32
    %76 = vector.broadcast %cst_33 : f32 to vector<32x1xf32>
    %77 = arith.addf %75, %76 : vector<32x1xf32>
    %cst_34 = arith.constant 1.000000e+00 : f32
    %78 = vector.broadcast %cst_34 : f32 to vector<32x1xf32>
    %79 = arith.divf %78, %77 : vector<32x1xf32>
    %80 = vector.broadcast %75 : vector<32x1xf32> to vector<32x32xf32>
    %81 = vector.broadcast %50 : vector<1x32xf32> to vector<32x32xf32>
    %82 = arith.mulf %80, %81 : vector<32x32xf32>
    %83 = arith.addf %70, %82 : vector<32x32xf32>
    %84 = arith.subf %71, %48 : vector<32x32xf32>
    %85 = vector.broadcast %79 : vector<32x1xf32> to vector<32x32xf32>
    %86 = arith.mulf %85, %84 : vector<32x32xf32>
    %87 = arith.addf %83, %86 : vector<32x32xf32>
    %88 = vector.broadcast %51 : vector<1x32xf32> to vector<32x32xf32>
    %89 = arith.addf %87, %88 : vector<32x32xf32>
    %cst_35 = arith.constant 0.000000e+00 : f32
    %90 = vector.broadcast %cst_35 : f32 to vector<32x32xf32>
    %91 = arith.maximumf %89, %90 : vector<32x32xf32>
    %92 = arith.addf %53, %91 : vector<32x32xf32>
    %cst_36 = arith.constant dense<0x7F800000> : vector<32xf32>
    %93 = vector.multi_reduction <minimumf>, %68, %cst_36 [1] : vector<32x32xf32> to vector<32xf32>
    %94 = vector.shape_cast %93 : vector<32xf32> to vector<32x1xf32>
    %95 = vector.broadcast %94 : vector<32x1xf32> to vector<32x32xf32>
    %96 = arith.cmpf oeq, %68, %95 : vector<32x32xf32>
    %cst_37 = arith.constant 3.200000e+01 : f32
    %97 = vector.broadcast %cst_37 : f32 to vector<32x32xf32>
    %98 = arith.select %96, %52, %97 : vector<32x32xi1>, vector<32x32xf32>
    %cst_38 = arith.constant dense<0x7F800000> : vector<32xf32>
    %99 = vector.multi_reduction <minimumf>, %98, %cst_38 [1] : vector<32x32xf32> to vector<32xf32>
    %100 = vector.shape_cast %99 : vector<32xf32> to vector<32x1xf32>
    %101 = vector.broadcast %100 : vector<32x1xf32> to vector<32x32xf32>
    %102 = arith.cmpf oeq, %52, %101 : vector<32x32xf32>
    %103 = arith.extui %102 : vector<32x32xi1> to vector<32x32xi32>
    %104 = arith.sitofp %103 : vector<32x32xi32> to vector<32x32xf32>
    %cst_39 = arith.constant 1.000000e+30 : f32
    %105 = vector.broadcast %cst_39 : f32 to vector<32x32xf32>
    %106 = arith.mulf %104, %105 : vector<32x32xf32>
    %107 = arith.addf %68, %106 : vector<32x32xf32>
    %cst_40 = arith.constant dense<0.000000e+00> : vector<32x64xf32>
    %108 = tpu.matmul %104, %49, %cst_40 {dimension_numbers = #tpu.dot_dimension_numbers<[1], [0], [0], [1], [0, 0, 1, 1], [], []>} : vector<32x32xf32>, vector<32x64xf32>, vector<32x64xf32> -> vector<32x64xf32>
    %109 = vector.extract_strided_slice %108 {offsets = [0, 0], sizes = [32, 32], strides = [1, 1]} : vector<32x64xf32> to vector<32x32xf32>
    %110 = vector.extract_strided_slice %108 {offsets = [0, 32], sizes = [32, 32], strides = [1, 1]} : vector<32x64xf32> to vector<32x32xf32>
    %111 = arith.addf %94, %22 : vector<32x1xf32>
    %cst_41 = arith.constant 0.000000e+00 : f32
    %112 = vector.broadcast %cst_41 : f32 to vector<32x1xf32>
    %113 = arith.maximumf %111, %112 : vector<32x1xf32>
    %114 = math.sqrt %113 : vector<32x1xf32>
    %cst_42 = arith.constant 9.99999997E-7 : f32
    %115 = vector.broadcast %cst_42 : f32 to vector<32x1xf32>
    %116 = arith.addf %114, %115 : vector<32x1xf32>
    %cst_43 = arith.constant 1.000000e+00 : f32
    %117 = vector.broadcast %cst_43 : f32 to vector<32x1xf32>
    %118 = arith.divf %117, %116 : vector<32x1xf32>
    %119 = vector.broadcast %114 : vector<32x1xf32> to vector<32x32xf32>
    %120 = vector.broadcast %50 : vector<1x32xf32> to vector<32x32xf32>
    %121 = arith.mulf %119, %120 : vector<32x32xf32>
    %122 = arith.addf %109, %121 : vector<32x32xf32>
    %123 = arith.subf %110, %48 : vector<32x32xf32>
    %124 = vector.broadcast %118 : vector<32x1xf32> to vector<32x32xf32>
    %125 = arith.mulf %124, %123 : vector<32x32xf32>
    %126 = arith.addf %122, %125 : vector<32x32xf32>
    %127 = vector.broadcast %51 : vector<1x32xf32> to vector<32x32xf32>
    %128 = arith.addf %126, %127 : vector<32x32xf32>
    %cst_44 = arith.constant 0.000000e+00 : f32
    %129 = vector.broadcast %cst_44 : f32 to vector<32x32xf32>
    %130 = arith.maximumf %128, %129 : vector<32x32xf32>
    %131 = arith.addf %92, %130 : vector<32x32xf32>
    %cst_45 = arith.constant dense<0x7F800000> : vector<32xf32>
    %132 = vector.multi_reduction <minimumf>, %107, %cst_45 [1] : vector<32x32xf32> to vector<32xf32>
    %133 = vector.shape_cast %132 : vector<32xf32> to vector<32x1xf32>
    %134 = vector.broadcast %133 : vector<32x1xf32> to vector<32x32xf32>
    %135 = arith.cmpf oeq, %107, %134 : vector<32x32xf32>
    %cst_46 = arith.constant 3.200000e+01 : f32
    %136 = vector.broadcast %cst_46 : f32 to vector<32x32xf32>
    %137 = arith.select %135, %52, %136 : vector<32x32xi1>, vector<32x32xf32>
    %cst_47 = arith.constant dense<0x7F800000> : vector<32xf32>
    %138 = vector.multi_reduction <minimumf>, %137, %cst_47 [1] : vector<32x32xf32> to vector<32xf32>
    %139 = vector.shape_cast %138 : vector<32xf32> to vector<32x1xf32>
    %140 = vector.broadcast %139 : vector<32x1xf32> to vector<32x32xf32>
    %141 = arith.cmpf oeq, %52, %140 : vector<32x32xf32>
    %142 = arith.extui %141 : vector<32x32xi1> to vector<32x32xi32>
    %143 = arith.sitofp %142 : vector<32x32xi32> to vector<32x32xf32>
    %cst_48 = arith.constant 1.000000e+30 : f32
    %144 = vector.broadcast %cst_48 : f32 to vector<32x32xf32>
    %145 = arith.mulf %143, %144 : vector<32x32xf32>
    %146 = arith.addf %107, %145 : vector<32x32xf32>
    %cst_49 = arith.constant dense<0.000000e+00> : vector<32x64xf32>
    %147 = tpu.matmul %143, %49, %cst_49 {dimension_numbers = #tpu.dot_dimension_numbers<[1], [0], [0], [1], [0, 0, 1, 1], [], []>} : vector<32x32xf32>, vector<32x64xf32>, vector<32x64xf32> -> vector<32x64xf32>
    %148 = vector.extract_strided_slice %147 {offsets = [0, 0], sizes = [32, 32], strides = [1, 1]} : vector<32x64xf32> to vector<32x32xf32>
    %149 = vector.extract_strided_slice %147 {offsets = [0, 32], sizes = [32, 32], strides = [1, 1]} : vector<32x64xf32> to vector<32x32xf32>
    %150 = arith.addf %133, %22 : vector<32x1xf32>
    %cst_50 = arith.constant 0.000000e+00 : f32
    %151 = vector.broadcast %cst_50 : f32 to vector<32x1xf32>
    %152 = arith.maximumf %150, %151 : vector<32x1xf32>
    %153 = math.sqrt %152 : vector<32x1xf32>
    %cst_51 = arith.constant 9.99999997E-7 : f32
    %154 = vector.broadcast %cst_51 : f32 to vector<32x1xf32>
    %155 = arith.addf %153, %154 : vector<32x1xf32>
    %cst_52 = arith.constant 1.000000e+00 : f32
    %156 = vector.broadcast %cst_52 : f32 to vector<32x1xf32>
    %157 = arith.divf %156, %155 : vector<32x1xf32>
    %158 = vector.broadcast %153 : vector<32x1xf32> to vector<32x32xf32>
    %159 = vector.broadcast %50 : vector<1x32xf32> to vector<32x32xf32>
    %160 = arith.mulf %158, %159 : vector<32x32xf32>
    %161 = arith.addf %148, %160 : vector<32x32xf32>
    %162 = arith.subf %149, %48 : vector<32x32xf32>
    %163 = vector.broadcast %157 : vector<32x1xf32> to vector<32x32xf32>
    %164 = arith.mulf %163, %162 : vector<32x32xf32>
    %165 = arith.addf %161, %164 : vector<32x32xf32>
    %166 = vector.broadcast %51 : vector<1x32xf32> to vector<32x32xf32>
    %167 = arith.addf %165, %166 : vector<32x32xf32>
    %cst_53 = arith.constant 0.000000e+00 : f32
    %168 = vector.broadcast %cst_53 : f32 to vector<32x32xf32>
    %169 = arith.maximumf %167, %168 : vector<32x32xf32>
    %170 = arith.addf %131, %169 : vector<32x32xf32>
    %cst_54 = arith.constant dense<0x7F800000> : vector<32xf32>
    %171 = vector.multi_reduction <minimumf>, %146, %cst_54 [1] : vector<32x32xf32> to vector<32xf32>
    %172 = vector.shape_cast %171 : vector<32xf32> to vector<32x1xf32>
    %173 = vector.broadcast %172 : vector<32x1xf32> to vector<32x32xf32>
    %174 = arith.cmpf oeq, %146, %173 : vector<32x32xf32>
    %cst_55 = arith.constant 3.200000e+01 : f32
    %175 = vector.broadcast %cst_55 : f32 to vector<32x32xf32>
    %176 = arith.select %174, %52, %175 : vector<32x32xi1>, vector<32x32xf32>
    %cst_56 = arith.constant dense<0x7F800000> : vector<32xf32>
    %177 = vector.multi_reduction <minimumf>, %176, %cst_56 [1] : vector<32x32xf32> to vector<32xf32>
    %178 = vector.shape_cast %177 : vector<32xf32> to vector<32x1xf32>
    %179 = vector.broadcast %178 : vector<32x1xf32> to vector<32x32xf32>
    %180 = arith.cmpf oeq, %52, %179 : vector<32x32xf32>
    %181 = arith.extui %180 : vector<32x32xi1> to vector<32x32xi32>
    %182 = arith.sitofp %181 : vector<32x32xi32> to vector<32x32xf32>
    %cst_57 = arith.constant 1.000000e+30 : f32
    %183 = vector.broadcast %cst_57 : f32 to vector<32x32xf32>
    %184 = arith.mulf %182, %183 : vector<32x32xf32>
    %185 = arith.addf %146, %184 : vector<32x32xf32>
    %cst_58 = arith.constant dense<0.000000e+00> : vector<32x64xf32>
    %186 = tpu.matmul %182, %49, %cst_58 {dimension_numbers = #tpu.dot_dimension_numbers<[1], [0], [0], [1], [0, 0, 1, 1], [], []>} : vector<32x32xf32>, vector<32x64xf32>, vector<32x64xf32> -> vector<32x64xf32>
    %187 = vector.extract_strided_slice %186 {offsets = [0, 0], sizes = [32, 32], strides = [1, 1]} : vector<32x64xf32> to vector<32x32xf32>
    %188 = vector.extract_strided_slice %186 {offsets = [0, 32], sizes = [32, 32], strides = [1, 1]} : vector<32x64xf32> to vector<32x32xf32>
    %189 = arith.addf %172, %22 : vector<32x1xf32>
    %cst_59 = arith.constant 0.000000e+00 : f32
    %190 = vector.broadcast %cst_59 : f32 to vector<32x1xf32>
    %191 = arith.maximumf %189, %190 : vector<32x1xf32>
    %192 = math.sqrt %191 : vector<32x1xf32>
    %cst_60 = arith.constant 9.99999997E-7 : f32
    %193 = vector.broadcast %cst_60 : f32 to vector<32x1xf32>
    %194 = arith.addf %192, %193 : vector<32x1xf32>
    %cst_61 = arith.constant 1.000000e+00 : f32
    %195 = vector.broadcast %cst_61 : f32 to vector<32x1xf32>
    %196 = arith.divf %195, %194 : vector<32x1xf32>
    %197 = vector.broadcast %192 : vector<32x1xf32> to vector<32x32xf32>
    %198 = vector.broadcast %50 : vector<1x32xf32> to vector<32x32xf32>
    %199 = arith.mulf %197, %198 : vector<32x32xf32>
    %200 = arith.addf %187, %199 : vector<32x32xf32>
    %201 = arith.subf %188, %48 : vector<32x32xf32>
    %202 = vector.broadcast %196 : vector<32x1xf32> to vector<32x32xf32>
    %203 = arith.mulf %202, %201 : vector<32x32xf32>
    %204 = arith.addf %200, %203 : vector<32x32xf32>
    %205 = vector.broadcast %51 : vector<1x32xf32> to vector<32x32xf32>
    %206 = arith.addf %204, %205 : vector<32x32xf32>
    %cst_62 = arith.constant 0.000000e+00 : f32
    %207 = vector.broadcast %cst_62 : f32 to vector<32x32xf32>
    %208 = arith.maximumf %206, %207 : vector<32x32xf32>
    %209 = arith.addf %170, %208 : vector<32x32xf32>
    %cst_63 = arith.constant dense<0x7F800000> : vector<32xf32>
    %210 = vector.multi_reduction <minimumf>, %185, %cst_63 [1] : vector<32x32xf32> to vector<32xf32>
    %211 = vector.shape_cast %210 : vector<32xf32> to vector<32x1xf32>
    %212 = vector.broadcast %211 : vector<32x1xf32> to vector<32x32xf32>
    %213 = arith.cmpf oeq, %185, %212 : vector<32x32xf32>
    %cst_64 = arith.constant 3.200000e+01 : f32
    %214 = vector.broadcast %cst_64 : f32 to vector<32x32xf32>
    %215 = arith.select %213, %52, %214 : vector<32x32xi1>, vector<32x32xf32>
    %cst_65 = arith.constant dense<0x7F800000> : vector<32xf32>
    %216 = vector.multi_reduction <minimumf>, %215, %cst_65 [1] : vector<32x32xf32> to vector<32xf32>
    %217 = vector.shape_cast %216 : vector<32xf32> to vector<32x1xf32>
    %218 = vector.broadcast %217 : vector<32x1xf32> to vector<32x32xf32>
    %219 = arith.cmpf oeq, %52, %218 : vector<32x32xf32>
    %220 = arith.extui %219 : vector<32x32xi1> to vector<32x32xi32>
    %221 = arith.sitofp %220 : vector<32x32xi32> to vector<32x32xf32>
    %cst_66 = arith.constant 1.000000e+30 : f32
    %222 = vector.broadcast %cst_66 : f32 to vector<32x32xf32>
    %223 = arith.mulf %221, %222 : vector<32x32xf32>
    %224 = arith.addf %185, %223 : vector<32x32xf32>
    %cst_67 = arith.constant dense<0.000000e+00> : vector<32x64xf32>
    %225 = tpu.matmul %221, %49, %cst_67 {dimension_numbers = #tpu.dot_dimension_numbers<[1], [0], [0], [1], [0, 0, 1, 1], [], []>} : vector<32x32xf32>, vector<32x64xf32>, vector<32x64xf32> -> vector<32x64xf32>
    %226 = vector.extract_strided_slice %225 {offsets = [0, 0], sizes = [32, 32], strides = [1, 1]} : vector<32x64xf32> to vector<32x32xf32>
    %227 = vector.extract_strided_slice %225 {offsets = [0, 32], sizes = [32, 32], strides = [1, 1]} : vector<32x64xf32> to vector<32x32xf32>
    %228 = arith.addf %211, %22 : vector<32x1xf32>
    %cst_68 = arith.constant 0.000000e+00 : f32
    %229 = vector.broadcast %cst_68 : f32 to vector<32x1xf32>
    %230 = arith.maximumf %228, %229 : vector<32x1xf32>
    %231 = math.sqrt %230 : vector<32x1xf32>
    %cst_69 = arith.constant 9.99999997E-7 : f32
    %232 = vector.broadcast %cst_69 : f32 to vector<32x1xf32>
    %233 = arith.addf %231, %232 : vector<32x1xf32>
    %cst_70 = arith.constant 1.000000e+00 : f32
    %234 = vector.broadcast %cst_70 : f32 to vector<32x1xf32>
    %235 = arith.divf %234, %233 : vector<32x1xf32>
    %236 = vector.broadcast %231 : vector<32x1xf32> to vector<32x32xf32>
    %237 = vector.broadcast %50 : vector<1x32xf32> to vector<32x32xf32>
    %238 = arith.mulf %236, %237 : vector<32x32xf32>
    %239 = arith.addf %226, %238 : vector<32x32xf32>
    %240 = arith.subf %227, %48 : vector<32x32xf32>
    %241 = vector.broadcast %235 : vector<32x1xf32> to vector<32x32xf32>
    %242 = arith.mulf %241, %240 : vector<32x32xf32>
    %243 = arith.addf %239, %242 : vector<32x32xf32>
    %244 = vector.broadcast %51 : vector<1x32xf32> to vector<32x32xf32>
    %245 = arith.addf %243, %244 : vector<32x32xf32>
    %cst_71 = arith.constant 0.000000e+00 : f32
    %246 = vector.broadcast %cst_71 : f32 to vector<32x32xf32>
    %247 = arith.maximumf %245, %246 : vector<32x32xf32>
    %248 = arith.addf %209, %247 : vector<32x32xf32>
    %cst_72 = arith.constant dense<0x7F800000> : vector<32xf32>
    %249 = vector.multi_reduction <minimumf>, %224, %cst_72 [1] : vector<32x32xf32> to vector<32xf32>
    %250 = vector.shape_cast %249 : vector<32xf32> to vector<32x1xf32>
    %251 = vector.broadcast %250 : vector<32x1xf32> to vector<32x32xf32>
    %252 = arith.cmpf oeq, %224, %251 : vector<32x32xf32>
    %cst_73 = arith.constant 3.200000e+01 : f32
    %253 = vector.broadcast %cst_73 : f32 to vector<32x32xf32>
    %254 = arith.select %252, %52, %253 : vector<32x32xi1>, vector<32x32xf32>
    %cst_74 = arith.constant dense<0x7F800000> : vector<32xf32>
    %255 = vector.multi_reduction <minimumf>, %254, %cst_74 [1] : vector<32x32xf32> to vector<32xf32>
    %256 = vector.shape_cast %255 : vector<32xf32> to vector<32x1xf32>
    %257 = vector.broadcast %256 : vector<32x1xf32> to vector<32x32xf32>
    %258 = arith.cmpf oeq, %52, %257 : vector<32x32xf32>
    %259 = arith.extui %258 : vector<32x32xi1> to vector<32x32xi32>
    %260 = arith.sitofp %259 : vector<32x32xi32> to vector<32x32xf32>
    %cst_75 = arith.constant 1.000000e+30 : f32
    %261 = vector.broadcast %cst_75 : f32 to vector<32x32xf32>
    %262 = arith.mulf %260, %261 : vector<32x32xf32>
    %263 = arith.addf %224, %262 : vector<32x32xf32>
    %cst_76 = arith.constant dense<0.000000e+00> : vector<32x64xf32>
    %264 = tpu.matmul %260, %49, %cst_76 {dimension_numbers = #tpu.dot_dimension_numbers<[1], [0], [0], [1], [0, 0, 1, 1], [], []>} : vector<32x32xf32>, vector<32x64xf32>, vector<32x64xf32> -> vector<32x64xf32>
    %265 = vector.extract_strided_slice %264 {offsets = [0, 0], sizes = [32, 32], strides = [1, 1]} : vector<32x64xf32> to vector<32x32xf32>
    %266 = vector.extract_strided_slice %264 {offsets = [0, 32], sizes = [32, 32], strides = [1, 1]} : vector<32x64xf32> to vector<32x32xf32>
    %267 = arith.addf %250, %22 : vector<32x1xf32>
    %cst_77 = arith.constant 0.000000e+00 : f32
    %268 = vector.broadcast %cst_77 : f32 to vector<32x1xf32>
    %269 = arith.maximumf %267, %268 : vector<32x1xf32>
    %270 = math.sqrt %269 : vector<32x1xf32>
    %cst_78 = arith.constant 9.99999997E-7 : f32
    %271 = vector.broadcast %cst_78 : f32 to vector<32x1xf32>
    %272 = arith.addf %270, %271 : vector<32x1xf32>
    %cst_79 = arith.constant 1.000000e+00 : f32
    %273 = vector.broadcast %cst_79 : f32 to vector<32x1xf32>
    %274 = arith.divf %273, %272 : vector<32x1xf32>
    %275 = vector.broadcast %270 : vector<32x1xf32> to vector<32x32xf32>
    %276 = vector.broadcast %50 : vector<1x32xf32> to vector<32x32xf32>
    %277 = arith.mulf %275, %276 : vector<32x32xf32>
    %278 = arith.addf %265, %277 : vector<32x32xf32>
    %279 = arith.subf %266, %48 : vector<32x32xf32>
    %280 = vector.broadcast %274 : vector<32x1xf32> to vector<32x32xf32>
    %281 = arith.mulf %280, %279 : vector<32x32xf32>
    %282 = arith.addf %278, %281 : vector<32x32xf32>
    %283 = vector.broadcast %51 : vector<1x32xf32> to vector<32x32xf32>
    %284 = arith.addf %282, %283 : vector<32x32xf32>
    %cst_80 = arith.constant 0.000000e+00 : f32
    %285 = vector.broadcast %cst_80 : f32 to vector<32x32xf32>
    %286 = arith.maximumf %284, %285 : vector<32x32xf32>
    %287 = arith.addf %248, %286 : vector<32x32xf32>
    %cst_81 = arith.constant dense<0x7F800000> : vector<32xf32>
    %288 = vector.multi_reduction <minimumf>, %263, %cst_81 [1] : vector<32x32xf32> to vector<32xf32>
    %289 = vector.shape_cast %288 : vector<32xf32> to vector<32x1xf32>
    %290 = vector.broadcast %289 : vector<32x1xf32> to vector<32x32xf32>
    %291 = arith.cmpf oeq, %263, %290 : vector<32x32xf32>
    %cst_82 = arith.constant 3.200000e+01 : f32
    %292 = vector.broadcast %cst_82 : f32 to vector<32x32xf32>
    %293 = arith.select %291, %52, %292 : vector<32x32xi1>, vector<32x32xf32>
    %cst_83 = arith.constant dense<0x7F800000> : vector<32xf32>
    %294 = vector.multi_reduction <minimumf>, %293, %cst_83 [1] : vector<32x32xf32> to vector<32xf32>
    %295 = vector.shape_cast %294 : vector<32xf32> to vector<32x1xf32>
    %296 = vector.broadcast %295 : vector<32x1xf32> to vector<32x32xf32>
    %297 = arith.cmpf oeq, %52, %296 : vector<32x32xf32>
    %298 = arith.extui %297 : vector<32x32xi1> to vector<32x32xi32>
    %299 = arith.sitofp %298 : vector<32x32xi32> to vector<32x32xf32>
    %cst_84 = arith.constant 1.000000e+30 : f32
    %300 = vector.broadcast %cst_84 : f32 to vector<32x32xf32>
    %301 = arith.mulf %299, %300 : vector<32x32xf32>
    %302 = arith.addf %263, %301 : vector<32x32xf32>
    %cst_85 = arith.constant dense<0.000000e+00> : vector<32x64xf32>
    %303 = tpu.matmul %299, %49, %cst_85 {dimension_numbers = #tpu.dot_dimension_numbers<[1], [0], [0], [1], [0, 0, 1, 1], [], []>} : vector<32x32xf32>, vector<32x64xf32>, vector<32x64xf32> -> vector<32x64xf32>
    %304 = vector.extract_strided_slice %303 {offsets = [0, 0], sizes = [32, 32], strides = [1, 1]} : vector<32x64xf32> to vector<32x32xf32>
    %305 = vector.extract_strided_slice %303 {offsets = [0, 32], sizes = [32, 32], strides = [1, 1]} : vector<32x64xf32> to vector<32x32xf32>
    %306 = arith.addf %289, %22 : vector<32x1xf32>
    %cst_86 = arith.constant 0.000000e+00 : f32
    %307 = vector.broadcast %cst_86 : f32 to vector<32x1xf32>
    %308 = arith.maximumf %306, %307 : vector<32x1xf32>
    %309 = math.sqrt %308 : vector<32x1xf32>
    %cst_87 = arith.constant 9.99999997E-7 : f32
    %310 = vector.broadcast %cst_87 : f32 to vector<32x1xf32>
    %311 = arith.addf %309, %310 : vector<32x1xf32>
    %cst_88 = arith.constant 1.000000e+00 : f32
    %312 = vector.broadcast %cst_88 : f32 to vector<32x1xf32>
    %313 = arith.divf %312, %311 : vector<32x1xf32>
    %314 = vector.broadcast %309 : vector<32x1xf32> to vector<32x32xf32>
    %315 = vector.broadcast %50 : vector<1x32xf32> to vector<32x32xf32>
    %316 = arith.mulf %314, %315 : vector<32x32xf32>
    %317 = arith.addf %304, %316 : vector<32x32xf32>
    %318 = arith.subf %305, %48 : vector<32x32xf32>
    %319 = vector.broadcast %313 : vector<32x1xf32> to vector<32x32xf32>
    %320 = arith.mulf %319, %318 : vector<32x32xf32>
    %321 = arith.addf %317, %320 : vector<32x32xf32>
    %322 = vector.broadcast %51 : vector<1x32xf32> to vector<32x32xf32>
    %323 = arith.addf %321, %322 : vector<32x32xf32>
    %cst_89 = arith.constant 0.000000e+00 : f32
    %324 = vector.broadcast %cst_89 : f32 to vector<32x32xf32>
    %325 = arith.maximumf %323, %324 : vector<32x32xf32>
    %326 = arith.addf %287, %325 : vector<32x32xf32>
    %cst_90 = arith.constant dense<0x7F800000> : vector<32xf32>
    %327 = vector.multi_reduction <minimumf>, %302, %cst_90 [1] : vector<32x32xf32> to vector<32xf32>
    %328 = vector.shape_cast %327 : vector<32xf32> to vector<32x1xf32>
    %329 = vector.broadcast %328 : vector<32x1xf32> to vector<32x32xf32>
    %330 = arith.cmpf oeq, %302, %329 : vector<32x32xf32>
    %cst_91 = arith.constant 3.200000e+01 : f32
    %331 = vector.broadcast %cst_91 : f32 to vector<32x32xf32>
    %332 = arith.select %330, %52, %331 : vector<32x32xi1>, vector<32x32xf32>
    %cst_92 = arith.constant dense<0x7F800000> : vector<32xf32>
    %333 = vector.multi_reduction <minimumf>, %332, %cst_92 [1] : vector<32x32xf32> to vector<32xf32>
    %334 = vector.shape_cast %333 : vector<32xf32> to vector<32x1xf32>
    %335 = vector.broadcast %334 : vector<32x1xf32> to vector<32x32xf32>
    %336 = arith.cmpf oeq, %52, %335 : vector<32x32xf32>
    %337 = arith.extui %336 : vector<32x32xi1> to vector<32x32xi32>
    %338 = arith.sitofp %337 : vector<32x32xi32> to vector<32x32xf32>
    %cst_93 = arith.constant dense<0.000000e+00> : vector<32x64xf32>
    %339 = tpu.matmul %338, %49, %cst_93 {dimension_numbers = #tpu.dot_dimension_numbers<[1], [0], [0], [1], [0, 0, 1, 1], [], []>} : vector<32x32xf32>, vector<32x64xf32>, vector<32x64xf32> -> vector<32x64xf32>
    %340 = vector.extract_strided_slice %339 {offsets = [0, 0], sizes = [32, 32], strides = [1, 1]} : vector<32x64xf32> to vector<32x32xf32>
    %341 = vector.extract_strided_slice %339 {offsets = [0, 32], sizes = [32, 32], strides = [1, 1]} : vector<32x64xf32> to vector<32x32xf32>
    %342 = arith.addf %328, %22 : vector<32x1xf32>
    %cst_94 = arith.constant 0.000000e+00 : f32
    %343 = vector.broadcast %cst_94 : f32 to vector<32x1xf32>
    %344 = arith.maximumf %342, %343 : vector<32x1xf32>
    %345 = math.sqrt %344 : vector<32x1xf32>
    %cst_95 = arith.constant 9.99999997E-7 : f32
    %346 = vector.broadcast %cst_95 : f32 to vector<32x1xf32>
    %347 = arith.addf %345, %346 : vector<32x1xf32>
    %cst_96 = arith.constant 1.000000e+00 : f32
    %348 = vector.broadcast %cst_96 : f32 to vector<32x1xf32>
    %349 = arith.divf %348, %347 : vector<32x1xf32>
    %350 = vector.broadcast %345 : vector<32x1xf32> to vector<32x32xf32>
    %351 = vector.broadcast %50 : vector<1x32xf32> to vector<32x32xf32>
    %352 = arith.mulf %350, %351 : vector<32x32xf32>
    %353 = arith.addf %340, %352 : vector<32x32xf32>
    %354 = arith.subf %341, %48 : vector<32x32xf32>
    %355 = vector.broadcast %349 : vector<32x1xf32> to vector<32x32xf32>
    %356 = arith.mulf %355, %354 : vector<32x32xf32>
    %357 = arith.addf %353, %356 : vector<32x32xf32>
    %358 = vector.broadcast %51 : vector<1x32xf32> to vector<32x32xf32>
    %359 = arith.addf %357, %358 : vector<32x32xf32>
    %cst_97 = arith.constant 0.000000e+00 : f32
    %360 = vector.broadcast %cst_97 : f32 to vector<32x32xf32>
    %361 = arith.maximumf %359, %360 : vector<32x32xf32>
    %362 = arith.addf %326, %361 : vector<32x32xf32>
    %cst_98 = arith.constant 1.250000e-01 : f32
    %363 = vector.broadcast %cst_98 : f32 to vector<32x32xf32>
    %364 = arith.mulf %362, %363 : vector<32x32xf32>
    %c80 = arith.constant 80 : index
    %c0_99 = arith.constant 0 : index
    %365 = vector.load %arg3[%c80, %c0_99] : memref<304x128xf32, #tpu.memory_space<vmem>>, vector<32x32xf32>
    %cst_100 = arith.constant dense<0.000000e+00> : vector<32x32xf32>
    %366 = tpu.matmul %11, %365, %cst_100 {dimension_numbers = #tpu.dot_dimension_numbers<[1], [0], [0], [1], [0, 0, 1, 1], [], []>} : vector<32x32xf32>, vector<32x32xf32>, vector<32x32xf32> -> vector<32x32xf32>
    %c112 = arith.constant 112 : index
    %c0_101 = arith.constant 0 : index
    %367 = vector.load %arg3[%c112, %c0_101] : memref<304x128xf32, #tpu.memory_space<vmem>>, vector<32x32xf32>
    %cst_102 = arith.constant dense<0.000000e+00> : vector<32x32xf32>
    %368 = tpu.matmul %364, %367, %cst_102 {dimension_numbers = #tpu.dot_dimension_numbers<[1], [0], [0], [1], [0, 0, 1, 1], [], []>} : vector<32x32xf32>, vector<32x32xf32>, vector<32x32xf32> -> vector<32x32xf32>
    %369 = arith.addf %366, %368 : vector<32x32xf32>
    %c144 = arith.constant 144 : index
    %c0_103 = arith.constant 0 : index
    %370 = vector.load %arg3[%c144, %c0_103] : memref<304x128xf32, #tpu.memory_space<vmem>>, vector<1x32xf32>
    %371 = vector.broadcast %370 : vector<1x32xf32> to vector<32x32xf32>
    %372 = arith.addf %369, %371 : vector<32x32xf32>
    %cst_104 = arith.constant 0.000000e+00 : f32
    %373 = vector.broadcast %cst_104 : f32 to vector<32x32xf32>
    %374 = arith.maximumf %372, %373 : vector<32x32xf32>
    %375 = tpu.iota {dimensions = array<i32: 0>} : vector<2x32xi32>
    %376 = arith.sitofp %375 : vector<2x32xi32> to vector<2x32xf32>
    %377 = tpu.iota {dimensions = array<i32: 1>} : vector<2x32xi32>
    %378 = arith.sitofp %377 : vector<2x32xi32> to vector<2x32xf32>
    %cst_105 = arith.constant 5.000000e-01 : f32
    %379 = vector.broadcast %cst_105 : f32 to vector<2x32xf32>
    %380 = arith.addf %378, %379 : vector<2x32xf32>
    %cst_106 = arith.constant 6.250000e-02 : f32
    %381 = vector.broadcast %cst_106 : f32 to vector<2x32xf32>
    %382 = arith.mulf %380, %381 : vector<2x32xf32>
    %383 = math.floor %382 : vector<2x32xf32>
    %384 = arith.cmpf oeq, %383, %376 : vector<2x32xf32>
    %385 = arith.extui %384 : vector<2x32xi1> to vector<2x32xi32>
    %386 = arith.sitofp %385 : vector<2x32xi32> to vector<2x32xf32>
    %cst_107 = arith.constant 6.250000e-02 : f32
    %387 = vector.broadcast %cst_107 : f32 to vector<2x32xf32>
    %388 = arith.mulf %386, %387 : vector<2x32xf32>
    %cst_108 = arith.constant dense<0.000000e+00> : vector<2x32xf32>
    %389 = tpu.matmul %388, %374, %cst_108 {dimension_numbers = #tpu.dot_dimension_numbers<[1], [0], [0], [1], [0, 0, 1, 1], [], []>} : vector<2x32xf32>, vector<32x32xf32>, vector<2x32xf32> -> vector<2x32xf32>
    %c152 = arith.constant 152 : index
    %c0_109 = arith.constant 0 : index
    %390 = vector.load %arg3[%c152, %c0_109] : memref<304x128xf32, #tpu.memory_space<vmem>>, vector<32x64xf32>
    %cst_110 = arith.constant dense<0.000000e+00> : vector<2x64xf32>
    %391 = tpu.matmul %389, %390, %cst_110 {dimension_numbers = #tpu.dot_dimension_numbers<[1], [0], [0], [1], [0, 0, 1, 1], [], []>} : vector<2x32xf32>, vector<32x64xf32>, vector<2x64xf32> -> vector<2x64xf32>
    %c184 = arith.constant 184 : index
    %c0_111 = arith.constant 0 : index
    %392 = vector.load %arg3[%c184, %c0_111] : memref<304x128xf32, #tpu.memory_space<vmem>>, vector<1x64xf32>
    %393 = vector.broadcast %392 : vector<1x64xf32> to vector<2x64xf32>
    %394 = arith.addf %391, %393 : vector<2x64xf32>
    %cst_112 = arith.constant 0.000000e+00 : f32
    %395 = vector.broadcast %cst_112 : f32 to vector<2x64xf32>
    %396 = arith.maximumf %394, %395 : vector<2x64xf32>
    %c192 = arith.constant 192 : index
    %c0_113 = arith.constant 0 : index
    %397 = vector.load %arg3[%c192, %c0_113] : memref<304x128xf32, #tpu.memory_space<vmem>>, vector<64x32xf32>
    %cst_114 = arith.constant dense<0.000000e+00> : vector<2x32xf32>
    %398 = tpu.matmul %396, %397, %cst_114 {dimension_numbers = #tpu.dot_dimension_numbers<[1], [0], [0], [1], [0, 0, 1, 1], [], []>} : vector<2x64xf32>, vector<64x32xf32>, vector<2x32xf32> -> vector<2x32xf32>
    %c256 = arith.constant 256 : index
    %c0_115 = arith.constant 0 : index
    %399 = vector.load %arg3[%c256, %c0_115] : memref<304x128xf32, #tpu.memory_space<vmem>>, vector<1x32xf32>
    %400 = vector.broadcast %399 : vector<1x32xf32> to vector<2x32xf32>
    %401 = arith.addf %398, %400 : vector<2x32xf32>
    %cst_116 = arith.constant 0.000000e+00 : f32
    %402 = vector.broadcast %cst_116 : f32 to vector<2x32xf32>
    %403 = arith.maximumf %401, %402 : vector<2x32xf32>
    %c264 = arith.constant 264 : index
    %c0_117 = arith.constant 0 : index
    %404 = vector.load %arg3[%c264, %c0_117] : memref<304x128xf32, #tpu.memory_space<vmem>>, vector<32x128xf32>
    %cst_118 = arith.constant dense<0.000000e+00> : vector<2x128xf32>
    %405 = tpu.matmul %403, %404, %cst_118 {dimension_numbers = #tpu.dot_dimension_numbers<[1], [0], [0], [1], [0, 0, 1, 1], [], []>} : vector<2x32xf32>, vector<32x128xf32>, vector<2x128xf32> -> vector<2x128xf32>
    %c296 = arith.constant 296 : index
    %c0_119 = arith.constant 0 : index
    %406 = vector.load %arg3[%c296, %c0_119] : memref<304x128xf32, #tpu.memory_space<vmem>>, vector<1x128xf32>
    %407 = vector.broadcast %406 : vector<1x128xf32> to vector<2x128xf32>
    %408 = arith.addf %405, %407 : vector<2x128xf32>
    %409 = vector.shape_cast %408 : vector<2x128xf32> to vector<1x2x128xf32>
    %c0_120 = arith.constant 0 : index
    %c0_121 = arith.constant 0 : index
    %c0_122 = arith.constant 0 : index
    %410 = vector.load %arg4[%c0_120, %c0_121, %c0_122] : memref<1x2x128xf32, #tpu.memory_space<vmem>>, vector<1x2x128xf32>
    tpu.vector_store %arg4[%c0_120, %c0_121, %c0_122], %409 {strides = array<i32>} : memref<1x2x128xf32, #tpu.memory_space<vmem>>, vector<1x2x128xf32>,
    return
  }
  func.func @transform_0(%arg0: i32) -> (i32, i32) {
    %c0_i32 = arith.constant 0 : i32
    %c0_i32_0 = arith.constant 0 : i32
    return %arg0, %c0_i32 : i32, i32
  }
  func.func @transform_1(%arg0: i32) -> (i32, i32) {
    %c0_i32 = arith.constant 0 : i32
    %c0_i32_0 = arith.constant 0 : i32
    return %arg0, %c0_i32 : i32, i32
  }
  func.func @transform_2(%arg0: i32) -> (i32, i32) {
    %c0_i32 = arith.constant 0 : i32
    %c0_i32_0 = arith.constant 0 : i32
    %c0_i32_1 = arith.constant 0 : i32
    return %c0_i32, %c0_i32_0 : i32, i32
  }
  func.func @transform_3(%arg0: i32) -> (i32, i32, i32) {
    %c0_i32 = arith.constant 0 : i32
    %c0_i32_0 = arith.constant 0 : i32
    %c0_i32_1 = arith.constant 0 : i32
    return %arg0, %c0_i32, %c0_i32_0 : i32, i32, i32
  }
}

</mosaic_0001>

<llo_original>
// kernel: base_model_forward.1
$region0: #{base_model_forward.1}
  #allocation0 [shape = 'u32[]', space=smem, size = 0x4, offset = 0x4, fixed_abs, tag = 'smem constant byte address 0x4 - core index']
  #allocation1 [shape = 'u32[144,128]{1,0:T(1,128)}', space=vmem, size = 0x12000, scoped, tag = 'internal scratch']
  %s0 = inlined_call_operand.vmem [shape: f32[32,4], index: 0, kind: input, shape index: {}]
  %s1 = inlined_call_operand.vmem [shape: f32[32,3], index: 1, kind: input, shape index: {}]
  %s2 = inlined_call_operand.vmem [shape: f32[304,128], index: 2, kind: input, shape index: {}]
  %s3 = inlined_call_operand.hbm [shape: f32[1,2,128], index: 3, kind: output, shape index: {}]
  %s4 = sld [smem:[#allocation0]]
  $region22: #{base_model_forward.1} parent=0
    _
  %s6 = ssub.s32 1, %s4
  %s7 = scalar_select 0, %s6, %s4
  $region1: #{base_model_forward.1} parent=0
    #allocation2 [shape = 'u8[1024]{0}', space=vmem, size = 0x400, scoped, tag = 'output window, operand 0, single buffered']
    #allocation3 [shape = 's32[1]{0}', space=sflag, size = 0x4, scoped, tag = 'scoped memory for base_model_forward.1']
    %8 = vsyncpa [#allocation3], 0
    // Predicated region
    $region2: #{base_model_forward.1} parent=1 // pred_check
      _
    $region3: #{base_model_forward.1} parent=1 // pred_check_branch
      %10 = sbr.rel (0) target = $region5
    $region4: #{base_model_forward.1} parent=1 // pred_region
      _
    $region5: #{base_model_forward.1} parent=1 // pred_fallthru
      _
    // Predicated region
    $region6: #{base_model_forward.1} parent=1 // pred_check
      _
    $region7: #{base_model_forward.1} parent=1 // pred_check_branch
      %12 = sbr.rel (0) target = $region9
    $region8: #{base_model_forward.1} parent=1 // pred_region
      _
    $region9: #{base_model_forward.1} parent=1 // pred_fallthru
      _
    // Predicated region
    $region10: #{base_model_forward.1} parent=1 // pred_check
      _
    $region11: #{base_model_forward.1} parent=1 // pred_check_branch
      %14 = sbr.rel (0) target = $region13
    $region12: #{base_model_forward.1} parent=1 // pred_region
      _
    $region13: #{base_model_forward.1} parent=1 // pred_fallthru
      _
    %v15 = vld [vmem:[%s0] sm:$0xff]
    %v16 = vld [vmem:[%s0 + $0x8] sm:$0xff]
    %v17 = vld [vmem:[%s0 + $0x10] sm:$0xff]
    %v18 = vld [vmem:[%s0 + $0x18] sm:$0xff]
    %v19 = vld [vmem:[%s1] sm:$0xff]
    %v20 = vld [vmem:[%s1 + $0x8] sm:$0xff]
    %v21 = vld [vmem:[%s1 + $0x10] sm:$0xff]
    %v22 = vld [vmem:[%s1 + $0x18] sm:$0xff]
    %v23 = vld [vmem:[%s2] sm:$0xf]
    %v24 = vld [vmem:[%s2 + $0x8] sm:$0x7]
    %vm25 = vcmask 23552
    %v27 = vsel %vm25, %v19, 0
    %v30 = vsel %vm25, %v20, 0
    %v33 = vsel %vm25, %v21, 0
    %v36 = vsel %vm25, %v22, 0
    %vm38 = vcmask 1042432
    %v40 = vsel %vm38, %v24, 0
    %42 = vmatprep.subr.mxu0 0.0
    %43 = vmatpush1.msra.mxu0 %v40
    %44 = vmatprep.subr.mxu0 0.0
    %45 = vmatpush1.msra.mxu0 0.0
    %46 = vmatprep.subr.mxu0 0.0
    %47 = vmatpush1.msra.mxu0 0.0
    %48 = vmatprep.subr.mxu0 0.0
    %49 = vmatpush1.msra.mxu0 0.0
    %50 = vmatprep.subr.mxu0 0.0
    %51 = vmatpush1.msra.mxu0 0.0
    %52 = vmatprep.subr.mxu0 0.0
    %53 = vmatpush1.msra.mxu0 0.0
    %54 = vmatprep.subr.mxu0 0.0
    %55 = vmatpush1.msra.mxu0 0.0
    %56 = vmatprep.subr.mxu0 0.0
    %57 = vmatpush1.msra.mxu0 0.0
    %58 = vmatprep.subr.mxu0 0.0
    %59 = vmatpush1.msra.mxu0 0.0
    %60 = vmatprep.subr.mxu0 0.0
    %61 = vmatpush1.msra.mxu0 0.0
    %62 = vmatprep.subr.mxu0 0.0
    %63 = vmatpush1.msra.mxu0 0.0
    %64 = vmatprep.subr.mxu0 0.0
    %65 = vmatpush1.msra.mxu0 0.0
    %66 = vmatprep.subr.mxu0 0.0
    %67 = vmatpush1.msra.mxu0 0.0
    %68 = vmatprep.subr.mxu0 0.0
    %69 = vmatpush1.msra.mxu0 0.0
    %70 = vmatprep.subr.mxu0 0.0
    %71 = vmatpush1.msra.mxu0 0.0
    %72 = vmatprep.subr.mxu0 0.0
    %73 = vmatpush1.msra.mxu0 0.0
    %74 = vmatprep.subr.mxu0 0.0
    %75 = vmatpush1.msra.mxu0 0.0
    %76 = vmatprep.subr.mxu0 0.0
    %77 = vmatpush1.msra.mxu0 0.0
    %78 = vmatprep.subr.mxu0 0.0
    %79 = vmatpush1.msra.mxu0 0.0
    %80 = vmatprep.subr.mxu0 0.0
    %81 = vmatpush1.msra.mxu0 0.0
    %82 = vmatprep.subr.mxu0 0.0
    %83 = vmatpush1.msra.mxu0 0.0
    %84 = vmatprep.subr.mxu0 0.0
    %85 = vmatpush1.msra.mxu0 0.0
    %86 = vmatprep.subr.mxu0 0.0
    %87 = vmatpush1.msra.mxu0 0.0
    %88 = vmatprep.subr.mxu0 0.0
    %89 = vmatpush1.msra.mxu0 0.0
    %90 = vmatprep.subr.mxu0 0.0
    %91 = vmatpush1.msra.mxu0 0.0
    %92 = vmatprep.subr.mxu0 0.0
    %93 = vmatpush1.msra.mxu0 0.0
    %94 = vmatprep.subr.mxu0 0.0
    %95 = vmatpush1.msra.mxu0 0.0
    %96 = vmatprep.subr.mxu0 0.0
    %97 = vmatpush1.msra.mxu0 0.0
    %98 = vmatprep.subr.mxu0 0.0
    %99 = vmatpush1.msra.mxu0 0.0
    %100 = vmatprep.subr.mxu0 0.0
    %101 = vmatpush1.msra.mxu0 0.0
    %102 = vmatprep.subr.mxu0 0.0
    %103 = vmatpush1.msra.mxu0 0.0
    %104 = vmatprep.subr.mxu0 0.0
    %105 = vmatpush1.msra.mxu0 0.0
    %106 = vmatprep.mubr.f32.mxu0 0.0
    %107 = vmatmul.mubr.f32.gmra.mrb[0].mxu0 %v27
    %v108 = vpop.f32.mrb[0].mxu0
    %v109 = vadd.f32 0.0, %v108
    %v110 = vpop.f32.mrb[0].mxu0
    %111 = vmatprep.mubr.f32.mxu0 0.0
    %112 = vmatmul.mubr.f32.gmra.mrb[0].mxu0 %v30
    %v113 = vpop.f32.mrb[0].mxu0
    %v114 = vadd.f32 0.0, %v113
    %v115 = vpop.f32.mrb[0].mxu0
    %116 = vmatprep.mubr.f32.mxu0 0.0
    %117 = vmatmul.mubr.f32.gmra.mrb[0].mxu0 %v33
    %v118 = vpop.f32.mrb[0].mxu0
    %v119 = vadd.f32 0.0, %v118
    %v120 = vpop.f32.mrb[0].mxu0
    %121 = vmatprep.mubr.f32.mxu0 0.0
    %122 = vmatmul.mubr.f32.gmra.mrb[0].mxu0 %v36
    %v123 = vpop.f32.mrb[0].mxu0
    %v124 = vadd.f32 0.0, %v123
    %v125 = vpop.f32.mrb[0].mxu0
    %126 = vdwg.mxu0
    %vm127 = vcmask 31744
    %v129 = vsel %vm127, %v15, 0
    %v132 = vsel %vm127, %v16, 0
    %v135 = vsel %vm127, %v17, 0
    %v138 = vsel %vm127, %v18, 0
    %vm140 = vcmask 1043456
    %v142 = vsel %vm140, %v23, 0
    %144 = vmatprep.subr.mxu0 0.0
    %145 = vmatpush1.msra.mxu0 %v142
    %146 = vmatprep.subr.mxu0 0.0
    %147 = vmatpush1.msra.mxu0 0.0
    %148 = vmatprep.subr.mxu0 0.0
    %149 = vmatpush1.msra.mxu0 0.0
    %150 = vmatprep.subr.mxu0 0.0
    %151 = vmatpush1.msra.mxu0 0.0
    %152 = vmatprep.subr.mxu0 0.0
    %153 = vmatpush1.msra.mxu0 0.0
    %154 = vmatprep.subr.mxu0 0.0
    %155 = vmatpush1.msra.mxu0 0.0
    %156 = vmatprep.subr.mxu0 0.0
    %157 = vmatpush1.msra.mxu0 0.0
    %158 = vmatprep.subr.mxu0 0.0
    %159 = vmatpush1.msra.mxu0 0.0
    %160 = vmatprep.subr.mxu0 0.0
    %161 = vmatpush1.msra.mxu0 0.0
    %162 = vmatprep.subr.mxu0 0.0
    %163 = vmatpush1.msra.mxu0 0.0
    %164 = vmatprep.subr.mxu0 0.0
    %165 = vmatpush1.msra.mxu0 0.0
    %166 = vmatprep.subr.mxu0 0.0
    %167 = vmatpush1.msra.mxu0 0.0
    %168 = vmatprep.subr.mxu0 0.0
    %169 = vmatpush1.msra.mxu0 0.0
    %170 = vmatprep.subr.mxu0 0.0
    %171 = vmatpush1.msra.mxu0 0.0
    %172 = vmatprep.subr.mxu0 0.0
    %173 = vmatpush1.msra.mxu0 0.0
    %174 = vmatprep.subr.mxu0 0.0
    %175 = vmatpush1.msra.mxu0 0.0
    %176 = vmatprep.subr.mxu0 0.0
    %177 = vmatpush1.msra.mxu0 0.0
    %178 = vmatprep.subr.mxu0 0.0
    %179 = vmatpush1.msra.mxu0 0.0
    %180 = vmatprep.subr.mxu0 0.0
    %181 = vmatpush1.msra.mxu0 0.0
    %182 = vmatprep.subr.mxu0 0.0
    %183 = vmatpush1.msra.mxu0 0.0
    %184 = vmatprep.subr.mxu0 0.0
    %185 = vmatpush1.msra.mxu0 0.0
    %186 = vmatprep.subr.mxu0 0.0
    %187 = vmatpush1.msra.mxu0 0.0
    %188 = vmatprep.subr.mxu0 0.0
    %189 = vmatpush1.msra.mxu0 0.0
    %190 = vmatprep.subr.mxu0 0.0
    %191 = vmatpush1.msra.mxu0 0.0
    %192 = vmatprep.subr.mxu0 0.0
    %193 = vmatpush1.msra.mxu0 0.0
    %194 = vmatprep.subr.mxu0 0.0
    %195 = vmatpush1.msra.mxu0 0.0
    %196 = vmatprep.subr.mxu0 0.0
    %197 = vmatpush1.msra.mxu0 0.0
    %198 = vmatprep.subr.mxu0 0.0
    %199 = vmatpush1.msra.mxu0 0.0
    %200 = vmatprep.subr.mxu0 0.0
    %201 = vmatpush1.msra.mxu0 0.0
    %202 = vmatprep.subr.mxu0 0.0
    %203 = vmatpush1.msra.mxu0 0.0
    %204 = vmatprep.subr.mxu0 0.0
    %205 = vmatpush1.msra.mxu0 0.0
    %206 = vmatprep.subr.mxu0 0.0
    %207 = vmatpush1.msra.mxu0 0.0
    %208 = vmatprep.mubr.f32.mxu0 0.0
    %209 = vmatmul.mubr.f32.gmra.mrb[0].mxu0 %v129
    %v210 = vpop.f32.mrb[0].mxu0
    %v211 = vadd.f32 %v109, %v210
    %v212 = vpop.f32.mrb[0].mxu0
    %213 = vmatprep.mubr.f32.mxu0 0.0
    %214 = vmatmul.mubr.f32.gmra.mrb[0].mxu0 %v132
    %v215 = vpop.f32.mrb[0].mxu0
    %v216 = vadd.f32 %v114, %v215
    %v217 = vpop.f32.mrb[0].mxu0
    %218 = vmatprep.mubr.f32.mxu0 0.0
    %219 = vmatmul.mubr.f32.gmra.mrb[0].mxu0 %v135
    %v220 = vpop.f32.mrb[0].mxu0
    %v221 = vadd.f32 %v119, %v220
    %v222 = vpop.f32.mrb[0].mxu0
    %223 = vmatprep.mubr.f32.mxu0 0.0
    %224 = vmatmul.mubr.f32.gmra.mrb[0].mxu0 %v138
    %v225 = vpop.f32.mrb[0].mxu0
    %v226 = vadd.f32 %v124, %v225
    %v227 = vpop.f32.mrb[0].mxu0
    %228 = vdwg.mxu0
    %v229 = vld [vmem:[%s2 + $0x10] sm:$0x1]
    %v230 = vlaneseq
    %v231 = vshrl.u32 %v230, 7
    %v232 = vsub.s32 0, %v231
    %v233 = vrot.slane %v229, %v232
    %v234 = vadd.f32 %v211, %v233
    %v235 = vadd.f32 %v216, %v233
    %v236 = vadd.f32 %v221, %v233
    %v237 = vadd.f32 %v226, %v233
    %v238 = vmax.f32 %v234, 0.0
    %v239 = vmax.f32 %v235, 0.0
    %v240 = vmax.f32 %v236, 0.0
    %v241 = vmax.f32 %v237, 0.0
    %242 = vmatprep.subr.mxu0 0.0
    %243 = vmatpush1.xpose.msra.mxu0 %v27
    %244 = vmatprep.subr.mxu0 0.0
    %245 = vmatpush1.xpose.msra.mxu0 %v30
    %246 = vmatprep.subr.mxu0 0.0
    %247 = vmatpush1.xpose.msra.mxu0 %v33
    %248 = vmatprep.subr.mxu0 0.0
    %249 = vmatpush1.xpose.msra.mxu0 %v36
    %250 = vmatprep.subr.mxu0 0.0
    %251 = vmatpush1.xpose.msra.mxu0 0.0
    %252 = vmatprep.subr.mxu0 0.0
    %253 = vmatpush1.xpose.msra.mxu0 0.0
    %254 = vmatprep.subr.mxu0 0.0
    %255 = vmatpush1.xpose.msra.mxu0 0.0
    %256 = vmatprep.subr.mxu0 0.0
    %257 = vmatpush1.xpose.msra.mxu0 0.0
    %258 = vmatprep.subr.mxu0 0.0
    %259 = vmatpush1.xpose.msra.mxu0 0.0
    %260 = vmatprep.subr.mxu0 0.0
    %261 = vmatpush1.xpose.msra.mxu0 0.0
    %262 = vmatprep.subr.mxu0 0.0
    %263 = vmatpush1.xpose.msra.mxu0 0.0
    %264 = vmatprep.subr.mxu0 0.0
    %265 = vmatpush1.xpose.msra.mxu0 0.0
    %266 = vmatprep.subr.mxu0 0.0
    %267 = vmatpush1.xpose.msra.mxu0 0.0
    %268 = vmatprep.subr.mxu0 0.0
    %269 = vmatpush1.xpose.msra.mxu0 0.0
    %270 = vmatprep.subr.mxu0 0.0
    %271 = vmatpush1.xpose.msra.mxu0 0.0
    %272 = vmatprep.subr.mxu0 0.0
    %273 = vmatpush1.xpose.msra.mxu0 0.0
    %274 = vmatprep.subr.mxu0 0.0
    %275 = vmatpush1.xpose.msra.mxu0 0.0
    %276 = vmatprep.subr.mxu0 0.0
    %277 = vmatpush1.xpose.msra.mxu0 0.0
    %278 = vmatprep.subr.mxu0 0.0
    %279 = vmatpush1.xpose.msra.mxu0 0.0
    %280 = vmatprep.subr.mxu0 0.0
    %281 = vmatpush1.xpose.msra.mxu0 0.0
    %282 = vmatprep.subr.mxu0 0.0
    %283 = vmatpush1.xpose.msra.mxu0 0.0
    %284 = vmatprep.subr.mxu0 0.0
    %285 = vmatpush1.xpose.msra.mxu0 0.0
    %286 = vmatprep.subr.mxu0 0.0
    %287 = vmatpush1.xpose.msra.mxu0 0.0
    %288 = vmatprep.subr.mxu0 0.0
    %289 = vmatpush1.xpose.msra.mxu0 0.0
    %290 = vmatprep.subr.mxu0 0.0
    %291 = vmatpush1.xpose.msra.mxu0 0.0
    %292 = vmatprep.subr.mxu0 0.0
    %293 = vmatpush1.xpose.msra.mxu0 0.0
    %294 = vmatprep.subr.mxu0 0.0
    %295 = vmatpush1.xpose.msra.mxu0 0.0
    %296 = vmatprep.subr.mxu0 0.0
    %297 = vmatpush1.xpose.msra.mxu0 0.0
    %298 = vmatprep.subr.mxu0 0.0
    %299 = vmatpush1.xpose.msra.mxu0 0.0
    %300 = vmatprep.subr.mxu0 0.0
    %301 = vmatpush1.xpose.msra.mxu0 0.0
    %302 = vmatprep.subr.mxu0 0.0
    %303 = vmatpush1.xpose.msra.mxu0 0.0
    %304 = vmatprep.subr.mxu0 0.0
    %305 = vmatpush1.xpose.msra.mxu0 0.0
    %306 = vmatprep.mubr.f32.mxu0 0.0
    %307 = vmatmul.mubr.f32.gmra.mrb[0].mxu0 %v27
    %v308 = vpop.f32.mrb[0].mxu0
    %v309 = vadd.f32 0.0, %v308
    %v310 = vpop.f32.mrb[0].mxu0
    %311 = vmatprep.mubr.f32.mxu0 0.0
    %312 = vmatmul.mubr.f32.gmra.mrb[0].mxu0 %v30
    %v313 = vpop.f32.mrb[0].mxu0
    %v314 = vadd.f32 0.0, %v313
    %v315 = vpop.f32.mrb[0].mxu0
    %316 = vmatprep.mubr.f32.mxu0 0.0
    %317 = vmatmul.mubr.f32.gmra.mrb[0].mxu0 %v33
    %v318 = vpop.f32.mrb[0].mxu0
    %v319 = vadd.f32 0.0, %v318
    %v320 = vpop.f32.mrb[0].mxu0
    %321 = vmatprep.mubr.f32.mxu0 0.0
    %322 = vmatmul.mubr.f32.gmra.mrb[0].mxu0 %v36
    %v323 = vpop.f32.mrb[0].mxu0
    %v324 = vadd.f32 0.0, %v323
    %v325 = vpop.f32.mrb[0].mxu0
    %326 = vdwg.mxu0
    %v327 = vlaneseq
    %v328 = vshrl.u32 %v327, 7
    %v329 = vadd.s32 %v328, 8
    %v330 = vadd.s32 %v328, 16
    %v331 = vadd.s32 %v328, 24
    %v332 = vlaneseq
    %v333 = vand.u32 %v332, 127
    %vm334 = vcmp.eq.s32.totalorder %v328, %v333
    %vm335 = vcmp.eq.s32.totalorder %v329, %v333
    %vm336 = vcmp.eq.s32.totalorder %v330, %v333
    %vm337 = vcmp.eq.s32.totalorder %v331, %v333
    %v338 = vsel %vm334, 1, 0
    %v339 = vsel %vm335, 1, 0
    %v340 = vsel %vm336, 1, 0
    %v341 = vsel %vm337, 1, 0
    %v342 = vcvt.s32.f32 %v338
    %v343 = vcvt.s32.f32 %v339
    %v344 = vcvt.s32.f32 %v340
    %v345 = vcvt.s32.f32 %v341
    %v346 = vmul.f32 %v309, %v342
    %v347 = vmul.f32 %v314, %v343
    %v348 = vmul.f32 %v319, %v344
    %v349 = vmul.f32 %v324, %v345
    %vm350 = vcmask 261120
    %v352 = vsel %vm350, 1.0, 0
    %354 = vmatprep.subr.mxu0 0.0
    %355 = vmatpush1.msra.mxu0 %v346
    %356 = vmatprep.subr.mxu0 0.0
    %357 = vmatpush1.msra.mxu0 %v347
    %358 = vmatprep.subr.mxu0 0.0
    %359 = vmatpush1.msra.mxu0 %v348
    %360 = vmatprep.subr.mxu0 0.0
    %361 = vmatpush1.msra.mxu0 %v349
    %362 = vmatprep.subr.mxu0 0.0
    %363 = vmatpush1.msra.mxu0 0.0
    %364 = vmatprep.subr.mxu0 0.0
    %365 = vmatpush1.msra.mxu0 0.0
    %366 = vmatprep.subr.mxu0 0.0
    %367 = vmatpush1.msra.mxu0 0.0
    %368 = vmatprep.subr.mxu0 0.0
    %369 = vmatpush1.msra.mxu0 0.0
    %370 = vmatprep.subr.mxu0 0.0
    %371 = vmatpush1.msra.mxu0 0.0
    %372 = vmatprep.subr.mxu0 0.0
    %373 = vmatpush1.msra.mxu0 0.0
    %374 = vmatprep.subr.mxu0 0.0
    %375 = vmatpush1.msra.mxu0 0.0
    %376 = vmatprep.subr.mxu0 0.0
    %377 = vmatpush1.msra.mxu0 0.0
    %378 = vmatprep.subr.mxu0 0.0
    %379 = vmatpush1.msra.mxu0 0.0
    %380 = vmatprep.subr.mxu0 0.0
    %381 = vmatpush1.msra.mxu0 0.0
    %382 = vmatprep.subr.mxu0 0.0
    %383 = vmatpush1.msra.mxu0 0.0
    %384 = vmatprep.subr.mxu0 0.0
    %385 = vmatpush1.msra.mxu0 0.0
    %386 = vmatprep.subr.mxu0 0.0
    %387 = vmatpush1.msra.mxu0 0.0
    %388 = vmatprep.subr.mxu0 0.0
    %389 = vmatpush1.msra.mxu0 0.0
    %390 = vmatprep.subr.mxu0 0.0
    %391 = vmatpush1.msra.mxu0 0.0
    %392 = vmatprep.subr.mxu0 0.0
    %393 = vmatpush1.msra.mxu0 0.0
    %394 = vmatprep.subr.mxu0 0.0
    %395 = vmatpush1.msra.mxu0 0.0
    %396 = vmatprep.subr.mxu0 0.0
    %397 = vmatpush1.msra.mxu0 0.0
    %398 = vmatprep.subr.mxu0 0.0
    %399 = vmatpush1.msra.mxu0 0.0
    %400 = vmatprep.subr.mxu0 0.0
    %401 = vmatpush1.msra.mxu0 0.0
    %402 = vmatprep.subr.mxu0 0.0
    %403 = vmatpush1.msra.mxu0 0.0
    %404 = vmatprep.subr.mxu0 0.0
    %405 = vmatpush1.msra.mxu0 0.0
    %406 = vmatprep.subr.mxu0 0.0
    %407 = vmatpush1.msra.mxu0 0.0
    %408 = vmatprep.subr.mxu0 0.0
    %409 = vmatpush1.msra.mxu0 0.0
    %410 = vmatprep.subr.mxu0 0.0
    %411 = vmatpush1.msra.mxu0 0.0
    %412 = vmatprep.subr.mxu0 0.0
    %413 = vmatpush1.msra.mxu0 0.0
    %414 = vmatprep.subr.mxu0 0.0
    %415 = vmatpush1.msra.mxu0 0.0
    %416 = vmatprep.subr.mxu0 0.0
    %417 = vmatpush1.msra.mxu0 0.0
    %418 = vmatprep.mubr.f32.mxu0 0.0
    %419 = vmatmul.mubr.f32.gmra.mrb[0].mxu0 %v352
    %v420 = vpop.f32.mrb[0].mxu0
    %v421 = vadd.f32 0.0, %v420
    %v422 = vpop.f32.mrb[0].mxu0
    %423 = vdwg.mxu0
    %v425 = vsel %vm350, %v346, 0
    %v428 = vsel %vm350, %v347, 0
    %v431 = vsel %vm350, %v348, 0
    %v434 = vsel %vm350, %v349, 0
    %436 = vmatprep.subr.mxu0 0.0
    %437 = vmatpush1.msra.mxu0 1.0
    %438 = vmatprep.subr.mxu0 0.0
    %439 = vmatpush1.msra.mxu0 1.0
    %440 = vmatprep.subr.mxu0 0.0
    %441 = vmatpush1.msra.mxu0 1.0
    %442 = vmatprep.subr.mxu0 0.0
    %443 = vmatpush1.msra.mxu0 1.0
    %444 = vmatprep.subr.mxu0 0.0
    %445 = vmatpush1.msra.mxu0 0.0
    %446 = vmatprep.subr.mxu0 0.0
    %447 = vmatpush1.msra.mxu0 0.0
    %448 = vmatprep.subr.mxu0 0.0
    %449 = vmatpush1.msra.mxu0 0.0
    %450 = vmatprep.subr.mxu0 0.0
    %451 = vmatpush1.msra.mxu0 0.0
    %452 = vmatprep.subr.mxu0 0.0
    %453 = vmatpush1.msra.mxu0 0.0
    %454 = vmatprep.subr.mxu0 0.0
    %455 = vmatpush1.msra.mxu0 0.0
    %456 = vmatprep.subr.mxu0 0.0
    %457 = vmatpush1.msra.mxu0 0.0
    %458 = vmatprep.subr.mxu0 0.0
    %459 = vmatpush1.msra.mxu0 0.0
    %460 = vmatprep.subr.mxu0 0.0
    %461 = vmatpush1.msra.mxu0 0.0
    %462 = vmatprep.subr.mxu0 0.0
    %463 = vmatpush1.msra.mxu0 0.0
    %464 = vmatprep.subr.mxu0 0.0
    %465 = vmatpush1.msra.mxu0 0.0
    %466 = vmatprep.subr.mxu0 0.0
    %467 = vmatpush1.msra.mxu0 0.0
    %468 = vmatprep.subr.mxu0 0.0
    %469 = vmatpush1.msra.mxu0 0.0
    %470 = vmatprep.subr.mxu0 0.0
    %471 = vmatpush1.msra.mxu0 0.0
    %472 = vmatprep.subr.mxu0 0.0
    %473 = vmatpush1.msra.mxu0 0.0
    %474 = vmatprep.subr.mxu0 0.0
    %475 = vmatpush1.msra.mxu0 0.0
    %476 = vmatprep.subr.mxu0 0.0
    %477 = vmatpush1.msra.mxu0 0.0
    %478 = vmatprep.subr.mxu0 0.0
    %479 = vmatpush1.msra.mxu0 0.0
    %480 = vmatprep.subr.mxu0 0.0
    %481 = vmatpush1.msra.mxu0 0.0
    %482 = vmatprep.subr.mxu0 0.0
    %483 = vmatpush1.msra.mxu0 0.0
    %484 = vmatprep.subr.mxu0 0.0
    %485 = vmatpush1.msra.mxu0 0.0
    %486 = vmatprep.subr.mxu0 0.0
    %487 = vmatpush1.msra.mxu0 0.0
    %488 = vmatprep.subr.mxu0 0.0
    %489 = vmatpush1.msra.mxu0 0.0
    %490 = vmatprep.subr.mxu0 0.0
    %491 = vmatpush1.msra.mxu0 0.0
    %492 = vmatprep.subr.mxu0 0.0
    %493 = vmatpush1.msra.mxu0 0.0
    %494 = vmatprep.subr.mxu0 0.0
    %495 = vmatpush1.msra.mxu0 0.0
    %496 = vmatprep.subr.mxu0 0.0
    %497 = vmatpush1.msra.mxu0 0.0
    %498 = vmatprep.subr.mxu0 0.0
    %499 = vmatpush1.msra.mxu0 0.0
    %500 = vmatprep.mubr.f32.mxu0 0.0
    %501 = vmatmul.mubr.f32.gmra.mrb[0].mxu0 %v425
    %v502 = vpop.f32.mrb[0].mxu0
    %v503 = vadd.f32 0.0, %v502
    %v504 = vpop.f32.mrb[0].mxu0
    %505 = vmatprep.mubr.f32.mxu0 0.0
    %506 = vmatmul.mubr.f32.gmra.mrb[0].mxu0 %v428
    %v507 = vpop.f32.mrb[0].mxu0
    %v508 = vadd.f32 0.0, %v507
    %v509 = vpop.f32.mrb[0].mxu0
    %510 = vmatprep.mubr.f32.mxu0 0.0
    %511 = vmatmul.mubr.f32.gmra.mrb[0].mxu0 %v431
    %v512 = vpop.f32.mrb[0].mxu0
    %v513 = vadd.f32 0.0, %v512
    %v514 = vpop.f32.mrb[0].mxu0
    %515 = vmatprep.mubr.f32.mxu0 0.0
    %516 = vmatmul.mubr.f32.gmra.mrb[0].mxu0 %v434
    %v517 = vpop.f32.mrb[0].mxu0
    %v518 = vadd.f32 0.0, %v517
    %v519 = vpop.f32.mrb[0].mxu0
    %520 = vdwg.mxu0
    %v521 = vcvt.s32.f32 %v328
    %v522 = vcvt.s32.f32 %v329
    %v523 = vcvt.s32.f32 %v330
    %v524 = vcvt.s32.f32 %v331
    %v525 = vadd.f32 %v521, 0.5
    %v526 = vadd.f32 %v522, 0.5
    %v527 = vadd.f32 %v523, 0.5
    %v528 = vadd.f32 %v524, 0.5
    %v529 = vmul.f32 %v525, 0.0625
    %v530 = vmul.f32 %v526, 0.0625
    %v531 = vmul.f32 %v527, 0.0625
    %v532 = vmul.f32 %v528, 0.0625
    %v533 = vfloor.f32 %v529
    %v534 = vfloor.f32 %v530
    %v535 = vfloor.f32 %v531
    %v536 = vfloor.f32 %v532
    %v537 = vcvt.s32.f32 %v333
    %v538 = vadd.f32 %v537, 0.5
    %v539 = vmul.f32 %v538, 0.0625
    %v540 = vfloor.f32 %v539
    %vm541 = vcmp.ne.f32.partialorder %v533, %v540
    %vm542 = vcmp.ne.f32.partialorder %v534, %v540
    %vm543 = vcmp.ne.f32.partialorder %v535, %v540
    %vm544 = vcmp.ne.f32.partialorder %v536, %v540
    %v545 = vsel %vm541, 1, 0
    %v546 = vsel %vm542, 1, 0
    %v547 = vsel %vm543, 1, 0
    %v548 = vsel %vm544, 1, 0
    %v549 = vcvt.s32.f32 %v545
    %v550 = vcvt.s32.f32 %v546
    %v551 = vcvt.s32.f32 %v547
    %v552 = vcvt.s32.f32 %v548
    %v553 = vmul.f32 %v309, 2.0
    %v554 = vmul.f32 %v314, 2.0
    %v555 = vmul.f32 %v319, 2.0
    %v556 = vmul.f32 %v324, 2.0
    %v557 = vlaneseq
    %v558 = vshrl.u32 %v557, 7
    %v559 = vsub.s32 0, %v558
    %v560 = vrot.slane %v421, %v559
    %v561 = vsub.f32 %v560, %v553
    %v562 = vsub.f32 %v560, %v554
    %v563 = vsub.f32 %v560, %v555
    %v564 = vsub.f32 %v560, %v556
    %v565 = vmul.f32 %v549, 1e+30
    %v566 = vmul.f32 %v550, 1e+30
    %v567 = vmul.f32 %v551, 1e+30
    %v568 = vmul.f32 %v552, 1e+30
    %v569 = vadd.f32 %v561, %v565
    %v570 = vadd.f32 %v562, %v566
    %v571 = vadd.f32 %v563, %v567
    %v572 = vadd.f32 %v564, %v568
    %v573 = vld [vmem:[%s2 + $0x18] sm:$0xff]
    %v574 = vld [vmem:[%s2 + $0x20] sm:$0xff]
    %v575 = vld [vmem:[%s2 + $0x28] sm:$0xff]
    %v576 = vld [vmem:[%s2 + $0x30] sm:$0xff]
    %v578 = vsel %vm350, %v238, 0
    %v581 = vsel %vm350, %v239, 0
    %v584 = vsel %vm350, %v240, 0
    %v587 = vsel %vm350, %v241, 0
    %589 = vmatprep.subr.mxu0 0.0
    %590 = vmatpush1.msra.mxu0 %v573
    %591 = vmatprep.subr.mxu0 0.0
    %592 = vmatpush1.msra.mxu0 %v574
    %593 = vmatprep.subr.mxu0 0.0
    %594 = vmatpush1.msra.mxu0 %v575
    %595 = vmatprep.subr.mxu0 0.0
    %596 = vmatpush1.msra.mxu0 %v576
    %597 = vmatprep.subr.mxu0 0.0
    %598 = vmatpush1.msra.mxu0 0.0
    %599 = vmatprep.subr.mxu0 0.0
    %600 = vmatpush1.msra.mxu0 0.0
    %601 = vmatprep.subr.mxu0 0.0
    %602 = vmatpush1.msra.mxu0 0.0
    %603 = vmatprep.subr.mxu0 0.0
    %604 = vmatpush1.msra.mxu0 0.0
    %605 = vmatprep.subr.mxu0 0.0
    %606 = vmatpush1.msra.mxu0 0.0
    %607 = vmatprep.subr.mxu0 0.0
    %608 = vmatpush1.msra.mxu0 0.0
    %609 = vmatprep.subr.mxu0 0.0
    %610 = vmatpush1.msra.mxu0 0.0
    %611 = vmatprep.subr.mxu0 0.0
    %612 = vmatpush1.msra.mxu0 0.0
    %613 = vmatprep.subr.mxu0 0.0
    %614 = vmatpush1.msra.mxu0 0.0
    %615 = vmatprep.subr.mxu0 0.0
    %616 = vmatpush1.msra.mxu0 0.0
    %617 = vmatprep.subr.mxu0 0.0
    %618 = vmatpush1.msra.mxu0 0.0
    %619 = vmatprep.subr.mxu0 0.0
    %620 = vmatpush1.msra.mxu0 0.0
    %621 = vmatprep.subr.mxu0 0.0
    %622 = vmatpush1.msra.mxu0 0.0
    %623 = vmatprep.subr.mxu0 0.0
    %624 = vmatpush1.msra.mxu0 0.0
    %625 = vmatprep.subr.mxu0 0.0
    %626 = vmatpush1.msra.mxu0 0.0
    %627 = vmatprep.subr.mxu0 0.0
    %628 = vmatpush1.msra.mxu0 0.0
    %629 = vmatprep.subr.mxu0 0.0
    %630 = vmatpush1.msra.mxu0 0.0
    %631 = vmatprep.subr.mxu0 0.0
    %632 = vmatpush1.msra.mxu0 0.0
    %633 = vmatprep.subr.mxu0 0.0
    %634 = vmatpush1.msra.mxu0 0.0
    %635 = vmatprep.subr.mxu0 0.0
    %636 = vmatpush1.msra.mxu0 0.0
    %637 = vmatprep.subr.mxu0 0.0
    %638 = vmatpush1.msra.mxu0 0.0
    %639 = vmatprep.subr.mxu0 0.0
    %640 = vmatpush1.msra.mxu0 0.0
    %641 = vmatprep.subr.mxu0 0.0
    %642 = vmatpush1.msra.mxu0 0.0
    %643 = vmatprep.subr.mxu0 0.0
    %644 = vmatpush1.msra.mxu0 0.0
    %645 = vmatprep.subr.mxu0 0.0
    %646 = vmatpush1.msra.mxu0 0.0
    %647 = vmatprep.subr.mxu0 0.0
    %648 = vmatpush1.msra.mxu0 0.0
    %649 = vmatprep.subr.mxu0 0.0
    %650 = vmatpush1.msra.mxu0 0.0
    %651 = vmatprep.subr.mxu0 0.0
    %652 = vmatpush1.msra.mxu0 0.0
    %653 = vmatprep.mubr.f32.mxu0 0.0
    %654 = vmatmul.mubr.f32.gmra.mrb[0].mxu0 %v578
    %v655 = vpop.f32.mrb[0].mxu0
    %v656 = vadd.f32 0.0, %v655
    %v657 = vpop.f32.mrb[0].mxu0
    %658 = vmatprep.mubr.f32.mxu0 0.0
    %659 = vmatmul.mubr.f32.gmra.mrb[0].mxu0 %v581
    %v660 = vpop.f32.mrb[0].mxu0
    %v661 = vadd.f32 0.0, %v660
    %v662 = vpop.f32.mrb[0].mxu0
    %663 = vmatprep.mubr.f32.mxu0 0.0
    %664 = vmatmul.mubr.f32.gmra.mrb[0].mxu0 %v584
    %v665 = vpop.f32.mrb[0].mxu0
    %v666 = vadd.f32 0.0, %v665
    %v667 = vpop.f32.mrb[0].mxu0
    %668 = vmatprep.mubr.f32.mxu0 0.0
    %669 = vmatmul.mubr.f32.gmra.mrb[0].mxu0 %v587
    %v670 = vpop.f32.mrb[0].mxu0
    %v671 = vadd.f32 0.0, %v670
    %v672 = vpop.f32.mrb[0].mxu0
    %673 = vdwg.mxu0
    %v674 = vld [vmem:[%s2 + $0x40] sm:$0x7]
    %v676 = vsel %vm38, %v674, 0
    %678 = vmatprep.subr.mxu0 0.0
    %679 = vmatpush1.msra.mxu0 %v676
    %680 = vmatprep.subr.mxu0 0.0
    %681 = vmatpush1.msra.mxu0 0.0
    %682 = vmatprep.subr.mxu0 0.0
    %683 = vmatpush1.msra.mxu0 0.0
    %684 = vmatprep.subr.mxu0 0.0
    %685 = vmatpush1.msra.mxu0 0.0
    %686 = vmatprep.subr.mxu0 0.0
    %687 = vmatpush1.msra.mxu0 0.0
    %688 = vmatprep.subr.mxu0 0.0
    %689 = vmatpush1.msra.mxu0 0.0
    %690 = vmatprep.subr.mxu0 0.0
    %691 = vmatpush1.msra.mxu0 0.0
    %692 = vmatprep.subr.mxu0 0.0
    %693 = vmatpush1.msra.mxu0 0.0
    %694 = vmatprep.subr.mxu0 0.0
    %695 = vmatpush1.msra.mxu0 0.0
    %696 = vmatprep.subr.mxu0 0.0
    %697 = vmatpush1.msra.mxu0 0.0
    %698 = vmatprep.subr.mxu0 0.0
    %699 = vmatpush1.msra.mxu0 0.0
    %700 = vmatprep.subr.mxu0 0.0
    %701 = vmatpush1.msra.mxu0 0.0
    %702 = vmatprep.subr.mxu0 0.0
    %703 = vmatpush1.msra.mxu0 0.0
    %704 = vmatprep.subr.mxu0 0.0
    %705 = vmatpush1.msra.mxu0 0.0
    %706 = vmatprep.subr.mxu0 0.0
    %707 = vmatpush1.msra.mxu0 0.0
    %708 = vmatprep.subr.mxu0 0.0
    %709 = vmatpush1.msra.mxu0 0.0
    %710 = vmatprep.subr.mxu0 0.0
    %711 = vmatpush1.msra.mxu0 0.0
    %712 = vmatprep.subr.mxu0 0.0
    %713 = vmatpush1.msra.mxu0 0.0
    %714 = vmatprep.subr.mxu0 0.0
    %715 = vmatpush1.msra.mxu0 0.0
    %716 = vmatprep.subr.mxu0 0.0
    %717 = vmatpush1.msra.mxu0 0.0
    %718 = vmatprep.subr.mxu0 0.0
    %719 = vmatpush1.msra.mxu0 0.0
    %720 = vmatprep.subr.mxu0 0.0
    %721 = vmatpush1.msra.mxu0 0.0
    %722 = vmatprep.subr.mxu0 0.0
    %723 = vmatpush1.msra.mxu0 0.0
    %724 = vmatprep.subr.mxu0 0.0
    %725 = vmatpush1.msra.mxu0 0.0
    %726 = vmatprep.subr.mxu0 0.0
    %727 = vmatpush1.msra.mxu0 0.0
    %728 = vmatprep.subr.mxu0 0.0
    %729 = vmatpush1.msra.mxu0 0.0
    %730 = vmatprep.subr.mxu0 0.0
    %731 = vmatpush1.msra.mxu0 0.0
    %732 = vmatprep.subr.mxu0 0.0
    %733 = vmatpush1.msra.mxu0 0.0
    %734 = vmatprep.subr.mxu0 0.0
    %735 = vmatpush1.msra.mxu0 0.0
    %736 = vmatprep.subr.mxu0 0.0
    %737 = vmatpush1.msra.mxu0 0.0
    %738 = vmatprep.subr.mxu0 0.0
    %739 = vmatpush1.msra.mxu0 0.0
    %740 = vmatprep.subr.mxu0 0.0
    %741 = vmatpush1.msra.mxu0 0.0
    %742 = vmatprep.mubr.f32.mxu0 0.0
    %743 = vmatmul.mubr.f32.gmra.mrb[0].mxu0 %v27
    %v744 = vpop.f32.mrb[0].mxu0
    %v745 = vadd.f32 0.0, %v744
    %v746 = vpop.f32.mrb[0].mxu0
    %747 = vmatprep.mubr.f32.mxu0 0.0
    %748 = vmatmul.mubr.f32.gmra.mrb[0].mxu0 %v30
    %v749 = vpop.f32.mrb[0].mxu0
    %v750 = vadd.f32 0.0, %v749
    %v751 = vpop.f32.mrb[0].mxu0
    %752 = vmatprep.mubr.f32.mxu0 0.0
    %753 = vmatmul.mubr.f32.gmra.mrb[0].mxu0 %v33
    %v754 = vpop.f32.mrb[0].mxu0
    %v755 = vadd.f32 0.0, %v754
    %v756 = vpop.f32.mrb[0].mxu0
    %757 = vmatprep.mubr.f32.mxu0 0.0
    %758 = vmatmul.mubr.f32.gmra.mrb[0].mxu0 %v36
    %v759 = vpop.f32.mrb[0].mxu0
    %v760 = vadd.f32 0.0, %v759
    %v761 = vpop.f32.mrb[0].mxu0
    %762 = vdwg.mxu0
    %767 = vrot.lane.b32.xlu0 %v745, 32
    %v768 = vpop.permute.xlu0 %767
    %769 = vrot.lane.b32.xlu0 %v750, 32
    %v770 = vpop.permute.xlu0 %769
    %771 = vrot.lane.b32.xlu0 %v755, 32
    %v772 = vpop.permute.xlu0 %771
    %773 = vrot.lane.b32.xlu0 %v760, 32
    %v774 = vpop.permute.xlu0 %773
    %v779 = vsel %vm350, %v656, %v768
    %v780 = vsel %vm350, %v661, %v770
    %v781 = vsel %vm350, %v666, %v772
    %v782 = vsel %vm350, %v671, %v774
    %v783 = vld [vmem:[%s2 + $0x38] sm:$0x1]
    %v784 = vld [vmem:[%s2 + $0x48] sm:$0x1]
    %v785 = vsel %vm350, %v569, inf
    %786 = vmin.xlane.f32.xlu0 %v785
    %v787 = vpop.xlane.xlu0 %786
    %v788 = vsel %vm350, %v570, inf
    %789 = vmin.xlane.f32.xlu0 %v788
    %v790 = vpop.xlane.xlu0 %789
    %v791 = vsel %vm350, %v571, inf
    %792 = vmin.xlane.f32.xlu0 %v791
    %v793 = vpop.xlane.xlu0 %792
    %v794 = vsel %vm350, %v572, inf
    %795 = vmin.xlane.f32.xlu0 %v794
    %v796 = vpop.xlane.xlu0 %795
    %vm797 = vcmp.eq.f32.partialorder %v569, %v787
    %vm798 = vcmp.eq.f32.partialorder %v570, %v790
    %vm799 = vcmp.eq.f32.partialorder %v571, %v793
    %vm800 = vcmp.eq.f32.partialorder %v572, %v796
    %v801 = vsel %vm797, %v537, 32.0
    %v802 = vsel %vm798, %v537, 32.0
    %v803 = vsel %vm799, %v537, 32.0
    %v804 = vsel %vm800, %v537, 32.0
    %v805 = vsel %vm350, %v801, inf
    %806 = vmin.xlane.f32.xlu0 %v805
    %v807 = vpop.xlane.xlu0 %806
    %v808 = vsel %vm350, %v802, inf
    %809 = vmin.xlane.f32.xlu0 %v808
    %v810 = vpop.xlane.xlu0 %809
    %v811 = vsel %vm350, %v803, inf
    %812 = vmin.xlane.f32.xlu0 %v811
    %v813 = vpop.xlane.xlu0 %812
    %v814 = vsel %vm350, %v804, inf
    %815 = vmin.xlane.f32.xlu0 %v814
    %v816 = vpop.xlane.xlu0 %815
    %vm817 = vcmp.eq.f32.partialorder %v537, %v807
    %vm818 = vcmp.eq.f32.partialorder %v537, %v810
    %vm819 = vcmp.eq.f32.partialorder %v537, %v813
    %vm820 = vcmp.eq.f32.partialorder %v537, %v816
    %v821 = vsel %vm817, 1, 0
    %v822 = vsel %vm818, 1, 0
    %v823 = vsel %vm819, 1, 0
    %v824 = vsel %vm820, 1, 0
    %v825 = vcvt.s32.f32 %v821
    %v826 = vcvt.s32.f32 %v822
    %v827 = vcvt.s32.f32 %v823
    %v828 = vcvt.s32.f32 %v824
    %v829 = vmul.f32 %v825, 1e+30
    %v830 = vmul.f32 %v826, 1e+30
    %v831 = vmul.f32 %v827, 1e+30
    %v832 = vmul.f32 %v828, 1e+30
    %v833 = vadd.f32 %v569, %v829
    %v834 = vadd.f32 %v570, %v830
    %v835 = vadd.f32 %v571, %v831
    %v836 = vadd.f32 %v572, %v832
    %v838 = vsel %vm350, %v825, 0
    %v841 = vsel %vm350, %v826, 0
    %v844 = vsel %vm350, %v827, 0
    %v847 = vsel %vm350, %v828, 0
    %849 = vmatprep.subr.mxu0 0.0
    %850 = vmatpush1.msra.mxu0 %v779
    %851 = vmatprep.subr.mxu0 0.0
    %852 = vmatpush1.msra.mxu0 %v780
    %853 = vmatprep.subr.mxu0 0.0
    %854 = vmatpush1.msra.mxu0 %v781
    %855 = vmatprep.subr.mxu0 0.0
    %856 = vmatpush1.msra.mxu0 %v782
    %857 = vmatprep.subr.mxu0 0.0
    %858 = vmatpush1.msra.mxu0 0.0
    %859 = vmatprep.subr.mxu0 0.0
    %860 = vmatpush1.msra.mxu0 0.0
    %861 = vmatprep.subr.mxu0 0.0
    %862 = vmatpush1.msra.mxu0 0.0
    %863 = vmatprep.subr.mxu0 0.0
    %864 = vmatpush1.msra.mxu0 0.0
    %865 = vmatprep.subr.mxu0 0.0
    %866 = vmatpush1.msra.mxu0 0.0
    %867 = vmatprep.subr.mxu0 0.0
    %868 = vmatpush1.msra.mxu0 0.0
    %869 = vmatprep.subr.mxu0 0.0
    %870 = vmatpush1.msra.mxu0 0.0
    %871 = vmatprep.subr.mxu0 0.0
    %872 = vmatpush1.msra.mxu0 0.0
    %873 = vmatprep.subr.mxu0 0.0
    %874 = vmatpush1.msra.mxu0 0.0
    %875 = vmatprep.subr.mxu0 0.0
    %876 = vmatpush1.msra.mxu0 0.0
    %877 = vmatprep.subr.mxu0 0.0
    %878 = vmatpush1.msra.mxu0 0.0
    %879 = vmatprep.subr.mxu0 0.0
    %880 = vmatpush1.msra.mxu0 0.0
    %881 = vmatprep.subr.mxu0 0.0
    %882 = vmatpush1.msra.mxu0 0.0
    %883 = vmatprep.subr.mxu0 0.0
    %884 = vmatpush1.msra.mxu0 0.0
    %885 = vmatprep.subr.mxu0 0.0
    %886 = vmatpush1.msra.mxu0 0.0
    %887 = vmatprep.subr.mxu0 0.0
    %888 = vmatpush1.msra.mxu0 0.0
    %889 = vmatprep.subr.mxu0 0.0
    %890 = vmatpush1.msra.mxu0 0.0
    %891 = vmatprep.subr.mxu0 0.0
    %892 = vmatpush1.msra.mxu0 0.0
    %893 = vmatprep.subr.mxu0 0.0
    %894 = vmatpush1.msra.mxu0 0.0
    %895 = vmatprep.subr.mxu0 0.0
    %896 = vmatpush1.msra.mxu0 0.0
    %897 = vmatprep.subr.mxu0 0.0
    %898 = vmatpush1.msra.mxu0 0.0
    %899 = vmatprep.subr.mxu0 0.0
    %900 = vmatpush1.msra.mxu0 0.0
    %901 = vmatprep.subr.mxu0 0.0
    %902 = vmatpush1.msra.mxu0 0.0
    %903 = vmatprep.subr.mxu0 0.0
    %904 = vmatpush1.msra.mxu0 0.0
    %905 = vmatprep.subr.mxu0 0.0
    %906 = vmatpush1.msra.mxu0 0.0
    %907 = vmatprep.subr.mxu0 0.0
    %908 = vmatpush1.msra.mxu0 0.0
    %909 = vmatprep.subr.mxu0 0.0
    %910 = vmatpush1.msra.mxu0 0.0
    %911 = vmatprep.subr.mxu0 0.0
    %912 = vmatpush1.msra.mxu0 0.0
    %913 = vmatprep.mubr.f32.mxu0 0.0
    %914 = vmatmul.mubr.f32.gmra.mrb[0].mxu0 %v838
    %v915 = vpop.f32.mrb[0].mxu0
    %v916 = vadd.f32 0.0, %v915
    %v917 = vpop.f32.mrb[0].mxu0
    %918 = vmatprep.mubr.f32.mxu0 0.0
    %919 = vmatmul.mubr.f32.gmra.mrb[0].mxu0 %v841
    %v920 = vpop.f32.mrb[0].mxu0
    %v921 = vadd.f32 0.0, %v920
    %v922 = vpop.f32.mrb[0].mxu0
    %923 = vmatprep.mubr.f32.mxu0 0.0
    %924 = vmatmul.mubr.f32.gmra.mrb[0].mxu0 %v844
    %v925 = vpop.f32.mrb[0].mxu0
    %v926 = vadd.f32 0.0, %v925
    %v927 = vpop.f32.mrb[0].mxu0
    %928 = vmatprep.mubr.f32.mxu0 0.0
    %929 = vmatmul.mubr.f32.gmra.mrb[0].mxu0 %v847
    %v930 = vpop.f32.mrb[0].mxu0
    %v931 = vadd.f32 0.0, %v930
    %v932 = vpop.f32.mrb[0].mxu0
    %933 = vdwg.mxu0
    %v934 = vadd.f32 %v787, %v503
    %v935 = vadd.f32 %v790, %v508
    %v936 = vadd.f32 %v793, %v513
    %v937 = vadd.f32 %v796, %v518
    %v938 = vmax.f32 %v934, 0.0
    %v939 = vmax.f32 %v935, 0.0
    %v940 = vmax.f32 %v936, 0.0
    %v941 = vmax.f32 %v937, 0.0
    %v942 = vrsqrt.pop %v938
    %v943 = vmul.f32 %v938, %v942
    %vm944 = vcmp.eq.f32.partialorder %v938, inf
    %v945 = vsel %vm944, %v938, %v943
    %vm946 = vcmp.eq.f32.partialorder %v938, 0.0
    %v947 = vand.u32 %v938, 2147483648
    %v948 = vsel %vm946, %v947, %v945
    %v949 = vrsqrt.pop %v939
    %v950 = vmul.f32 %v939, %v949
    %vm951 = vcmp.eq.f32.partialorder %v939, inf
    %v952 = vsel %vm951, %v939, %v950
    %vm953 = vcmp.eq.f32.partialorder %v939, 0.0
    %v954 = vand.u32 %v939, 2147483648
    %v955 = vsel %vm953, %v954, %v952
    %v956 = vrsqrt.pop %v940
    %v957 = vmul.f32 %v940, %v956
    %vm958 = vcmp.eq.f32.partialorder %v940, inf
    %v959 = vsel %vm958, %v940, %v957
    %vm960 = vcmp.eq.f32.partialorder %v940, 0.0
    %v961 = vand.u32 %v940, 2147483648
    %v962 = vsel %vm960, %v961, %v959
    %v963 = vrsqrt.pop %v941
    %v964 = vmul.f32 %v941, %v963
    %vm965 = vcmp.eq.f32.partialorder %v941, inf
    %v966 = vsel %vm965, %v941, %v964
    %vm967 = vcmp.eq.f32.partialorder %v941, 0.0
    %v968 = vand.u32 %v941, 2147483648
    %v969 = vsel %vm967, %v968, %v966
    %v970 = vadd.f32 %v948, 1e-06
    %v971 = vadd.f32 %v955, 1e-06
    %v972 = vadd.f32 %v962, 1e-06
    %v973 = vadd.f32 %v969, 1e-06
    %v974 = vrcp.pop %v970
    %v975 = vmul.f32 1.0, %v974
    %v976 = vrcp.pop %v971
    %v977 = vmul.f32 1.0, %v976
    %v978 = vrcp.pop %v972
    %v979 = vmul.f32 1.0, %v978
    %v980 = vrcp.pop %v973
    %v981 = vmul.f32 1.0, %v980
    %983 = vset.pattern.permute.xlu0 0
    %984 = vperm.xlu0 %983, %v948
    %v985 = vpop.permute.xlu0 %984
    %988 = vset.pattern.permute.xlu0 0
    %989 = vperm.xlu0 %988, %v955
    %v990 = vpop.permute.xlu0 %989
    %993 = vset.pattern.permute.xlu0 0
    %994 = vperm.xlu0 %993, %v962
    %v995 = vpop.permute.xlu0 %994
    %998 = vset.pattern.permute.xlu0 0
    %999 = vperm.xlu0 %998, %v969
    %v1000 = vpop.permute.xlu0 %999
    %v1002 = vlaneseq
    %v1003 = vshrl.u32 %v1002, 7
    %v1004 = vsub.s32 0, %v1003
    %v1005 = vrot.slane %v783, %v1004
    %v1006 = vmul.f32 %v985, %v1005
    %v1007 = vmul.f32 %v990, %v1005
    %v1008 = vmul.f32 %v995, %v1005
    %v1009 = vmul.f32 %v1000, %v1005
    %v1010 = vadd.f32 %v916, %v1006
    %v1011 = vadd.f32 %v921, %v1007
    %v1012 = vadd.f32 %v926, %v1008
    %v1013 = vadd.f32 %v931, %v1009
    %v1014 = vsub.f32 %v916, %v768
    %v1015 = vsub.f32 %v921, %v770
    %v1016 = vsub.f32 %v926, %v772
    %v1017 = vsub.f32 %v931, %v774
    %1019 = vset.pattern.permute.xlu0 0
    %1020 = vperm.xlu0 %1019, %v975
    %v1021 = vpop.permute.xlu0 %1020
    %1024 = vset.pattern.permute.xlu0 0
    %1025 = vperm.xlu0 %1024, %v977
    %v1026 = vpop.permute.xlu0 %1025
    %1029 = vset.pattern.permute.xlu0 0
    %1030 = vperm.xlu0 %1029, %v979
    %v1031 = vpop.permute.xlu0 %1030
    %1034 = vset.pattern.permute.xlu0 0
    %1035 = vperm.xlu0 %1034, %v981
    %v1036 = vpop.permute.xlu0 %1035
    %v1038 = vmul.f32 %v1021, %v1014
    %v1039 = vmul.f32 %v1026, %v1015
    %v1040 = vmul.f32 %v1031, %v1016
    %v1041 = vmul.f32 %v1036, %v1017
    %1046 = vrot.lane.b32.xlu0 %v1038, 96
    %v1047 = vpop.permute.xlu0 %1046
    %1048 = vrot.lane.b32.xlu0 %v1039, 96
    %v1049 = vpop.permute.xlu0 %1048
    %1050 = vrot.lane.b32.xlu0 %v1040, 96
    %v1051 = vpop.permute.xlu0 %1050
    %1052 = vrot.lane.b32.xlu0 %v1041, 96
    %v1053 = vpop.permute.xlu0 %1052
    %v1058 = vadd.f32 %v1010, %v1047
    %v1059 = vadd.f32 %v1011, %v1049
    %v1060 = vadd.f32 %v1012, %v1051
    %v1061 = vadd.f32 %v1013, %v1053
    %v1062 = vlaneseq
    %v1063 = vshrl.u32 %v1062, 7
    %v1064 = vsub.s32 0, %v1063
    %v1065 = vrot.slane %v784, %v1064
    %v1066 = vadd.f32 %v1058, %v1065
    %v1067 = vadd.f32 %v1059, %v1065
    %v1068 = vadd.f32 %v1060, %v1065
    %v1069 = vadd.f32 %v1061, %v1065
    %v1070 = vmax.f32 %v1066, 0.0
    %v1071 = vmax.f32 %v1067, 0.0
    %v1072 = vmax.f32 %v1068, 0.0
    %v1073 = vmax.f32 %v1069, 0.0
    %v1074 = vadd.f32 %v1070, 0.0
    %v1075 = vadd.f32 %v1071, 0.0
    %v1076 = vadd.f32 %v1072, 0.0
    %v1077 = vadd.f32 %v1073, 0.0
    %v1078 = vsel %vm350, %v833, inf
    %1079 = vmin.xlane.f32.xlu0 %v1078
    %v1080 = vpop.xlane.xlu0 %1079
    %v1081 = vsel %vm350, %v834, inf
    %1082 = vmin.xlane.f32.xlu0 %v1081
    %v1083 = vpop.xlane.xlu0 %1082
    %v1084 = vsel %vm350, %v835, inf
    %1085 = vmin.xlane.f32.xlu0 %v1084
    %v1086 = vpop.xlane.xlu0 %1085
    %v1087 = vsel %vm350, %v836, inf
    %1088 = vmin.xlane.f32.xlu0 %v1087
    %v1089 = vpop.xlane.xlu0 %1088
    %vm1090 = vcmp.eq.f32.partialorder %v833, %v1080
    %vm1091 = vcmp.eq.f32.partialorder %v834, %v1083
    %vm1092 = vcmp.eq.f32.partialorder %v835, %v1086
    %vm1093 = vcmp.eq.f32.partialorder %v836, %v1089
    %v1094 = vsel %vm1090, %v537, 32.0
    %v1095 = vsel %vm1091, %v537, 32.0
    %v1096 = vsel %vm1092, %v537, 32.0
    %v1097 = vsel %vm1093, %v537, 32.0
    %v1098 = vsel %vm350, %v1094, inf
    %1099 = vmin.xlane.f32.xlu0 %v1098
    %v1100 = vpop.xlane.xlu0 %1099
    %v1101 = vsel %vm350, %v1095, inf
    %1102 = vmin.xlane.f32.xlu0 %v1101
    %v1103 = vpop.xlane.xlu0 %1102
    %v1104 = vsel %vm350, %v1096, inf
    %1105 = vmin.xlane.f32.xlu0 %v1104
    %v1106 = vpop.xlane.xlu0 %1105
    %v1107 = vsel %vm350, %v1097, inf
    %1108 = vmin.xlane.f32.xlu0 %v1107
    %v1109 = vpop.xlane.xlu0 %1108
    %vm1110 = vcmp.eq.f32.partialorder %v537, %v1100
    %vm1111 = vcmp.eq.f32.partialorder %v537, %v1103
    %vm1112 = vcmp.eq.f32.partialorder %v537, %v1106
    %vm1113 = vcmp.eq.f32.partialorder %v537, %v1109
    %v1114 = vsel %vm1110, 1, 0
    %v1115 = vsel %vm1111, 1, 0
    %v1116 = vsel %vm1112, 1, 0
    %v1117 = vsel %vm1113, 1, 0
    %v1118 = vcvt.s32.f32 %v1114
    %v1119 = vcvt.s32.f32 %v1115
    %v1120 = vcvt.s32.f32 %v1116
    %v1121 = vcvt.s32.f32 %v1117
    %v1122 = vmul.f32 %v1118, 1e+30
    %v1123 = vmul.f32 %v1119, 1e+30
    %v1124 = vmul.f32 %v1120, 1e+30
    %v1125 = vmul.f32 %v1121, 1e+30
    %v1126 = vadd.f32 %v833, %v1122
    %v1127 = vadd.f32 %v834, %v1123
    %v1128 = vadd.f32 %v835, %v1124
    %v1129 = vadd.f32 %v836, %v1125
    %v1131 = vsel %vm350, %v1118, 0
    %v1134 = vsel %vm350, %v1119, 0
    %v1137 = vsel %vm350, %v1120, 0
    %v1140 = vsel %vm350, %v1121, 0
    %1142 = vmatprep.subr.mxu0 0.0
    %1143 = vmatpush1.msra.mxu0 %v779
    %1144 = vmatprep.subr.mxu0 0.0
    %1145 = vmatpush1.msra.mxu0 %v780
    %1146 = vmatprep.subr.mxu0 0.0
    %1147 = vmatpush1.msra.mxu0 %v781
    %1148 = vmatprep.subr.mxu0 0.0
    %1149 = vmatpush1.msra.mxu0 %v782
    %1150 = vmatprep.subr.mxu0 0.0
    %1151 = vmatpush1.msra.mxu0 0.0
    %1152 = vmatprep.subr.mxu0 0.0
    %1153 = vmatpush1.msra.mxu0 0.0
    %1154 = vmatprep.subr.mxu0 0.0
    %1155 = vmatpush1.msra.mxu0 0.0
    %1156 = vmatprep.subr.mxu0 0.0
    %1157 = vmatpush1.msra.mxu0 0.0
    %1158 = vmatprep.subr.mxu0 0.0
    %1159 = vmatpush1.msra.mxu0 0.0
    %1160 = vmatprep.subr.mxu0 0.0
    %1161 = vmatpush1.msra.mxu0 0.0
    %1162 = vmatprep.subr.mxu0 0.0
    %1163 = vmatpush1.msra.mxu0 0.0
    %1164 = vmatprep.subr.mxu0 0.0
    %1165 = vmatpush1.msra.mxu0 0.0
    %1166 = vmatprep.subr.mxu0 0.0
    %1167 = vmatpush1.msra.mxu0 0.0
    %1168 = vmatprep.subr.mxu0 0.0
    %1169 = vmatpush1.msra.mxu0 0.0
    %1170 = vmatprep.subr.mxu0 0.0
    %1171 = vmatpush1.msra.mxu0 0.0
    %1172 = vmatprep.subr.mxu0 0.0
    %1173 = vmatpush1.msra.mxu0 0.0
    %1174 = vmatprep.subr.mxu0 0.0
    %1175 = vmatpush1.msra.mxu0 0.0
    %1176 = vmatprep.subr.mxu0 0.0
    %1177 = vmatpush1.msra.mxu0 0.0
    %1178 = vmatprep.subr.mxu0 0.0
    %1179 = vmatpush1.msra.mxu0 0.0
    %1180 = vmatprep.subr.mxu0 0.0
    %1181 = vmatpush1.msra.mxu0 0.0
    %1182 = vmatprep.subr.mxu0 0.0
    %1183 = vmatpush1.msra.mxu0 0.0
    %1184 = vmatprep.subr.mxu0 0.0
    %1185 = vmatpush1.msra.mxu0 0.0
    %1186 = vmatprep.subr.mxu0 0.0
    %1187 = vmatpush1.msra.mxu0 0.0
    %1188 = vmatprep.subr.mxu0 0.0
    %1189 = vmatpush1.msra.mxu0 0.0
    %1190 = vmatprep.subr.mxu0 0.0
    %1191 = vmatpush1.msra.mxu0 0.0
    %1192 = vmatprep.subr.mxu0 0.0
    %1193 = vmatpush1.msra.mxu0 0.0
    %1194 = vmatprep.subr.mxu0 0.0
    %1195 = vmatpush1.msra.mxu0 0.0
    %1196 = vmatprep.subr.mxu0 0.0
    %1197 = vmatpush1.msra.mxu0 0.0
    %1198 = vmatprep.subr.mxu0 0.0
    %1199 = vmatpush1.msra.mxu0 0.0
    %1200 = vmatprep.subr.mxu0 0.0
    %1201 = vmatpush1.msra.mxu0 0.0
    %1202 = vmatprep.subr.mxu0 0.0
    %1203 = vmatpush1.msra.mxu0 0.0
    %1204 = vmatprep.subr.mxu0 0.0
    %1205 = vmatpush1.msra.mxu0 0.0
    %1206 = vmatprep.mubr.f32.mxu0 0.0
    %1207 = vmatmul.mubr.f32.gmra.mrb[0].mxu0 %v1131
    %v1208 = vpop.f32.mrb[0].mxu0
    %v1209 = vadd.f32 0.0, %v1208
    %v1210 = vpop.f32.mrb[0].mxu0
    %1211 = vmatprep.mubr.f32.mxu0 0.0
    %1212 = vmatmul.mubr.f32.gmra.mrb[0].mxu0 %v1134
    %v1213 = vpop.f32.mrb[0].mxu0
    %v1214 = vadd.f32 0.0, %v1213
    %v1215 = vpop.f32.mrb[0].mxu0
    %1216 = vmatprep.mubr.f32.mxu0 0.0
    %1217 = vmatmul.mubr.f32.gmra.mrb[0].mxu0 %v1137
    %v1218 = vpop.f32.mrb[0].mxu0
    %v1219 = vadd.f32 0.0, %v1218
    %v1220 = vpop.f32.mrb[0].mxu0
    %1221 = vmatprep.mubr.f32.mxu0 0.0
    %1222 = vmatmul.mubr.f32.gmra.mrb[0].mxu0 %v1140
    %v1223 = vpop.f32.mrb[0].mxu0
    %v1224 = vadd.f32 0.0, %v1223
    %v1225 = vpop.f32.mrb[0].mxu0
    %1226 = vdwg.mxu0
    %v1227 = vadd.f32 %v1080, %v503
    %v1228 = vadd.f32 %v1083, %v508
    %v1229 = vadd.f32 %v1086, %v513
    %v1230 = vadd.f32 %v1089, %v518
    %v1231 = vmax.f32 %v1227, 0.0
    %v1232 = vmax.f32 %v1228, 0.0
    %v1233 = vmax.f32 %v1229, 0.0
    %v1234 = vmax.f32 %v1230, 0.0
    %v1235 = vrsqrt.pop %v1231
    %v1236 = vmul.f32 %v1231, %v1235
    %vm1237 = vcmp.eq.f32.partialorder %v1231, inf
    %v1238 = vsel %vm1237, %v1231, %v1236
    %vm1239 = vcmp.eq.f32.partialorder %v1231, 0.0
    %v1240 = vand.u32 %v1231, 2147483648
    %v1241 = vsel %vm1239, %v1240, %v1238
    %v1242 = vrsqrt.pop %v1232
    %v1243 = vmul.f32 %v1232, %v1242
    %vm1244 = vcmp.eq.f32.partialorder %v1232, inf
    %v1245 = vsel %vm1244, %v1232, %v1243
    %vm1246 = vcmp.eq.f32.partialorder %v1232, 0.0
    %v1247 = vand.u32 %v1232, 2147483648
    %v1248 = vsel %vm1246, %v1247, %v1245
    %v1249 = vrsqrt.pop %v1233
    %v1250 = vmul.f32 %v1233, %v1249
    %vm1251 = vcmp.eq.f32.partialorder %v1233, inf
    %v1252 = vsel %vm1251, %v1233, %v1250
    %vm1253 = vcmp.eq.f32.partialorder %v1233, 0.0
    %v1254 = vand.u32 %v1233, 2147483648
    %v1255 = vsel %vm1253, %v1254, %v1252
    %v1256 = vrsqrt.pop %v1234
    %v1257 = vmul.f32 %v1234, %v1256
    %vm1258 = vcmp.eq.f32.partialorder %v1234, inf
    %v1259 = vsel %vm1258, %v1234, %v1257
    %vm1260 = vcmp.eq.f32.partialorder %v1234, 0.0
    %v1261 = vand.u32 %v1234, 2147483648
    %v1262 = vsel %vm1260, %v1261, %v1259
    %v1263 = vadd.f32 %v1241, 1e-06
    %v1264 = vadd.f32 %v1248, 1e-06
    %v1265 = vadd.f32 %v1255, 1e-06
    %v1266 = vadd.f32 %v1262, 1e-06
    %v1267 = vrcp.pop %v1263
    %v1268 = vmul.f32 1.0, %v1267
    %v1269 = vrcp.pop %v1264
    %v1270 = vmul.f32 1.0, %v1269
    %v1271 = vrcp.pop %v1265
    %v1272 = vmul.f32 1.0, %v1271
    %v1273 = vrcp.pop %v1266
    %v1274 = vmul.f32 1.0, %v1273
    %1276 = vset.pattern.permute.xlu0 0
    %1277 = vperm.xlu0 %1276, %v1241
    %v1278 = vpop.permute.xlu0 %1277
    %1281 = vset.pattern.permute.xlu0 0
    %1282 = vperm.xlu0 %1281, %v1248
    %v1283 = vpop.permute.xlu0 %1282
    %1286 = vset.pattern.permute.xlu0 0
    %1287 = vperm.xlu0 %1286, %v1255
    %v1288 = vpop.permute.xlu0 %1287
    %1291 = vset.pattern.permute.xlu0 0
    %1292 = vperm.xlu0 %1291, %v1262
    %v1293 = vpop.permute.xlu0 %1292
    %v1295 = vmul.f32 %v1278, %v1005
    %v1296 = vmul.f32 %v1283, %v1005
    %v1297 = vmul.f32 %v1288, %v1005
    %v1298 = vmul.f32 %v1293, %v1005
    %v1299 = vadd.f32 %v1209, %v1295
    %v1300 = vadd.f32 %v1214, %v1296
    %v1301 = vadd.f32 %v1219, %v1297
    %v1302 = vadd.f32 %v1224, %v1298
    %v1303 = vsub.f32 %v1209, %v768
    %v1304 = vsub.f32 %v1214, %v770
    %v1305 = vsub.f32 %v1219, %v772
    %v1306 = vsub.f32 %v1224, %v774
    %1308 = vset.pattern.permute.xlu0 0
    %1309 = vperm.xlu0 %1308, %v1268
    %v1310 = vpop.permute.xlu0 %1309
    %1313 = vset.pattern.permute.xlu0 0
    %1314 = vperm.xlu0 %1313, %v1270
    %v1315 = vpop.permute.xlu0 %1314
    %1318 = vset.pattern.permute.xlu0 0
    %1319 = vperm.xlu0 %1318, %v1272
    %v1320 = vpop.permute.xlu0 %1319
    %1323 = vset.pattern.permute.xlu0 0
    %1324 = vperm.xlu0 %1323, %v1274
    %v1325 = vpop.permute.xlu0 %1324
    %v1327 = vmul.f32 %v1310, %v1303
    %v1328 = vmul.f32 %v1315, %v1304
    %v1329 = vmul.f32 %v1320, %v1305
    %v1330 = vmul.f32 %v1325, %v1306
    %1335 = vrot.lane.b32.xlu0 %v1327, 96
    %v1336 = vpop.permute.xlu0 %1335
    %1337 = vrot.lane.b32.xlu0 %v1328, 96
    %v1338 = vpop.permute.xlu0 %1337
    %1339 = vrot.lane.b32.xlu0 %v1329, 96
    %v1340 = vpop.permute.xlu0 %1339
    %1341 = vrot.lane.b32.xlu0 %v1330, 96
    %v1342 = vpop.permute.xlu0 %1341
    %v1347 = vadd.f32 %v1299, %v1336
    %v1348 = vadd.f32 %v1300, %v1338
    %v1349 = vadd.f32 %v1301, %v1340
    %v1350 = vadd.f32 %v1302, %v1342
    %v1351 = vadd.f32 %v1347, %v1065
    %v1352 = vadd.f32 %v1348, %v1065
    %v1353 = vadd.f32 %v1349, %v1065
    %v1354 = vadd.f32 %v1350, %v1065
    %v1355 = vmax.f32 %v1351, 0.0
    %v1356 = vmax.f32 %v1352, 0.0
    %v1357 = vmax.f32 %v1353, 0.0
    %v1358 = vmax.f32 %v1354, 0.0
    %v1359 = vadd.f32 %v1074, %v1355
    %v1360 = vadd.f32 %v1075, %v1356
    %v1361 = vadd.f32 %v1076, %v1357
    %v1362 = vadd.f32 %v1077, %v1358
    %v1363 = vsel %vm350, %v1126, inf
    %1364 = vmin.xlane.f32.xlu0 %v1363
    %v1365 = vpop.xlane.xlu0 %1364
    %v1366 = vsel %vm350, %v1127, inf
    %1367 = vmin.xlane.f32.xlu0 %v1366
    %v1368 = vpop.xlane.xlu0 %1367
    %v1369 = vsel %vm350, %v1128, inf
    %1370 = vmin.xlane.f32.xlu0 %v1369
    %v1371 = vpop.xlane.xlu0 %1370
    %v1372 = vsel %vm350, %v1129, inf
    %1373 = vmin.xlane.f32.xlu0 %v1372
    %v1374 = vpop.xlane.xlu0 %1373
    %vm1375 = vcmp.eq.f32.partialorder %v1126, %v1365
    %vm1376 = vcmp.eq.f32.partialorder %v1127, %v1368
    %vm1377 = vcmp.eq.f32.partialorder %v1128, %v1371
    %vm1378 = vcmp.eq.f32.partialorder %v1129, %v1374
    %v1379 = vsel %vm1375, %v537, 32.0
    %v1380 = vsel %vm1376, %v537, 32.0
    %v1381 = vsel %vm1377, %v537, 32.0
    %v1382 = vsel %vm1378, %v537, 32.0
    %v1383 = vsel %vm350, %v1379, inf
    %1384 = vmin.xlane.f32.xlu0 %v1383
    %v1385 = vpop.xlane.xlu0 %1384
    %v1386 = vsel %vm350, %v1380, inf
    %1387 = vmin.xlane.f32.xlu0 %v1386
    %v1388 = vpop.xlane.xlu0 %1387
    %v1389 = vsel %vm350, %v1381, inf
    %1390 = vmin.xlane.f32.xlu0 %v1389
    %v1391 = vpop.xlane.xlu0 %1390
    %v1392 = vsel %vm350, %v1382, inf
    %1393 = vmin.xlane.f32.xlu0 %v1392
    %v1394 = vpop.xlane.xlu0 %1393
    %vm1395 = vcmp.eq.f32.partialorder %v537, %v1385
    %vm1396 = vcmp.eq.f32.partialorder %v537, %v1388
    %vm1397 = vcmp.eq.f32.partialorder %v537, %v1391
    %vm1398 = vcmp.eq.f32.partialorder %v537, %v1394
    %v1399 = vsel %vm1395, 1, 0
    %v1400 = vsel %vm1396, 1, 0
    %v1401 = vsel %vm1397, 1, 0
    %v1402 = vsel %vm1398, 1, 0
    %v1403 = vcvt.s32.f32 %v1399
    %v1404 = vcvt.s32.f32 %v1400
    %v1405 = vcvt.s32.f32 %v1401
    %v1406 = vcvt.s32.f32 %v1402
    %v1407 = vmul.f32 %v1403, 1e+30
    %v1408 = vmul.f32 %v1404, 1e+30
    %v1409 = vmul.f32 %v1405, 1e+30
    %v1410 = vmul.f32 %v1406, 1e+30
    %v1411 = vadd.f32 %v1126, %v1407
    %v1412 = vadd.f32 %v1127, %v1408
    %v1413 = vadd.f32 %v1128, %v1409
    %v1414 = vadd.f32 %v1129, %v1410
    %v1416 = vsel %vm350, %v1403, 0
    %v1419 = vsel %vm350, %v1404, 0
    %v1422 = vsel %vm350, %v1405, 0
    %v1425 = vsel %vm350, %v1406, 0
    %1427 = vmatprep.subr.mxu0 0.0
    %1428 = vmatpush1.msra.mxu0 %v779
    %1429 = vmatprep.subr.mxu0 0.0
    %1430 = vmatpush1.msra.mxu0 %v780
    %1431 = vmatprep.subr.mxu0 0.0
    %1432 = vmatpush1.msra.mxu0 %v781
    %1433 = vmatprep.subr.mxu0 0.0
    %1434 = vmatpush1.msra.mxu0 %v782
    %1435 = vmatprep.subr.mxu0 0.0
    %1436 = vmatpush1.msra.mxu0 0.0
    %1437 = vmatprep.subr.mxu0 0.0
    %1438 = vmatpush1.msra.mxu0 0.0
    %1439 = vmatprep.subr.mxu0 0.0
    %1440 = vmatpush1.msra.mxu0 0.0
    %1441 = vmatprep.subr.mxu0 0.0
    %1442 = vmatpush1.msra.mxu0 0.0
    %1443 = vmatprep.subr.mxu0 0.0
    %1444 = vmatpush1.msra.mxu0 0.0
    %1445 = vmatprep.subr.mxu0 0.0
    %1446 = vmatpush1.msra.mxu0 0.0
    %1447 = vmatprep.subr.mxu0 0.0
    %1448 = vmatpush1.msra.mxu0 0.0
    %1449 = vmatprep.subr.mxu0 0.0
    %1450 = vmatpush1.msra.mxu0 0.0
    %1451 = vmatprep.subr.mxu0 0.0
    %1452 = vmatpush1.msra.mxu0 0.0
    %1453 = vmatprep.subr.mxu0 0.0
    %1454 = vmatpush1.msra.mxu0 0.0
    %1455 = vmatprep.subr.mxu0 0.0
    %1456 = vmatpush1.msra.mxu0 0.0
    %1457 = vmatprep.subr.mxu0 0.0
    %1458 = vmatpush1.msra.mxu0 0.0
    %1459 = vmatprep.subr.mxu0 0.0
    %1460 = vmatpush1.msra.mxu0 0.0
    %1461 = vmatprep.subr.mxu0 0.0
    %1462 = vmatpush1.msra.mxu0 0.0
    %1463 = vmatprep.subr.mxu0 0.0
    %1464 = vmatpush1.msra.mxu0 0.0
    %1465 = vmatprep.subr.mxu0 0.0
    %1466 = vmatpush1.msra.mxu0 0.0
    %1467 = vmatprep.subr.mxu0 0.0
    %1468 = vmatpush1.msra.mxu0 0.0
    %1469 = vmatprep.subr.mxu0 0.0
    %1470 = vmatpush1.msra.mxu0 0.0
    %1471 = vmatprep.subr.mxu0 0.0
    %1472 = vmatpush1.msra.mxu0 0.0
    %1473 = vmatprep.subr.mxu0 0.0
    %1474 = vmatpush1.msra.mxu0 0.0
    %1475 = vmatprep.subr.mxu0 0.0
    %1476 = vmatpush1.msra.mxu0 0.0
    %1477 = vmatprep.subr.mxu0 0.0
    %1478 = vmatpush1.msra.mxu0 0.0
    %1479 = vmatprep.subr.mxu0 0.0
    %1480 = vmatpush1.msra.mxu0 0.0
    %1481 = vmatprep.subr.mxu0 0.0
    %1482 = vmatpush1.msra.mxu0 0.0
    %1483 = vmatprep.subr.mxu0 0.0
    %1484 = vmatpush1.msra.mxu0 0.0
    %1485 = vmatprep.subr.mxu0 0.0
    %1486 = vmatpush1.msra.mxu0 0.0
    %1487 = vmatprep.subr.mxu0 0.0
    %1488 = vmatpush1.msra.mxu0 0.0
    %1489 = vmatprep.subr.mxu0 0.0
    %1490 = vmatpush1.msra.mxu0 0.0
    %1491 = vmatprep.mubr.f32.mxu0 0.0
    %1492 = vmatmul.mubr.f32.gmra.mrb[0].mxu0 %v1416
    %v1493 = vpop.f32.mrb[0].mxu0
    %v1494 = vadd.f32 0.0, %v1493
    %v1495 = vpop.f32.mrb[0].mxu0
    %1496 = vmatprep.mubr.f32.mxu0 0.0
    %1497 = vmatmul.mubr.f32.gmra.mrb[0].mxu0 %v1419
    %v1498 = vpop.f32.mrb[0].mxu0
    %v1499 = vadd.f32 0.0, %v1498
    %v1500 = vpop.f32.mrb[0].mxu0
    %1501 = vmatprep.mubr.f32.mxu0 0.0
    %1502 = vmatmul.mubr.f32.gmra.mrb[0].mxu0 %v1422
    %v1503 = vpop.f32.mrb[0].mxu0
    %v1504 = vadd.f32 0.0, %v1503
    %v1505 = vpop.f32.mrb[0].mxu0
    %1506 = vmatprep.mubr.f32.mxu0 0.0
    %1507 = vmatmul.mubr.f32.gmra.mrb[0].mxu0 %v1425
    %v1508 = vpop.f32.mrb[0].mxu0
    %v1509 = vadd.f32 0.0, %v1508
    %v1510 = vpop.f32.mrb[0].mxu0
    %1511 = vdwg.mxu0
    %v1512 = vadd.f32 %v1365, %v503
    %v1513 = vadd.f32 %v1368, %v508
    %v1514 = vadd.f32 %v1371, %v513
    %v1515 = vadd.f32 %v1374, %v518
    %v1516 = vmax.f32 %v1512, 0.0
    %v1517 = vmax.f32 %v1513, 0.0
    %v1518 = vmax.f32 %v1514, 0.0
    %v1519 = vmax.f32 %v1515, 0.0
    %v1520 = vrsqrt.pop %v1516
    %v1521 = vmul.f32 %v1516, %v1520
    %vm1522 = vcmp.eq.f32.partialorder %v1516, inf
    %v1523 = vsel %vm1522, %v1516, %v1521
    %vm1524 = vcmp.eq.f32.partialorder %v1516, 0.0
    %v1525 = vand.u32 %v1516, 2147483648
    %v1526 = vsel %vm1524, %v1525, %v1523
    %v1527 = vrsqrt.pop %v1517
    %v1528 = vmul.f32 %v1517, %v1527
    %vm1529 = vcmp.eq.f32.partialorder %v1517, inf
    %v1530 = vsel %vm1529, %v1517, %v1528
    %vm1531 = vcmp.eq.f32.partialorder %v1517, 0.0
    %v1532 = vand.u32 %v1517, 2147483648
    %v1533 = vsel %vm1531, %v1532, %v1530
    %v1534 = vrsqrt.pop %v1518
    %v1535 = vmul.f32 %v1518, %v1534
    %vm1536 = vcmp.eq.f32.partialorder %v1518, inf
    %v1537 = vsel %vm1536, %v1518, %v1535
    %vm1538 = vcmp.eq.f32.partialorder %v1518, 0.0
    %v1539 = vand.u32 %v1518, 2147483648
    %v1540 = vsel %vm1538, %v1539, %v1537
    %v1541 = vrsqrt.pop %v1519
    %v1542 = vmul.f32 %v1519, %v1541
    %vm1543 = vcmp.eq.f32.partialorder %v1519, inf
    %v1544 = vsel %vm1543, %v1519, %v1542
    %vm1545 = vcmp.eq.f32.partialorder %v1519, 0.0
    %v1546 = vand.u32 %v1519, 2147483648
    %v1547 = vsel %vm1545, %v1546, %v1544
    %v1548 = vadd.f32 %v1526, 1e-06
    %v1549 = vadd.f32 %v1533, 1e-06
    %v1550 = vadd.f32 %v1540, 1e-06
    %v1551 = vadd.f32 %v1547, 1e-06
    %v1552 = vrcp.pop %v1548
    %v1553 = vmul.f32 1.0, %v1552
    %v1554 = vrcp.pop %v1549
    %v1555 = vmul.f32 1.0, %v1554
    %v1556 = vrcp.pop %v1550
    %v1557 = vmul.f32 1.0, %v1556
    %v1558 = vrcp.pop %v1551
    %v1559 = vmul.f32 1.0, %v1558
    %1561 = vset.pattern.permute.xlu0 0
    %1562 = vperm.xlu0 %1561, %v1526
    %v1563 = vpop.permute.xlu0 %1562
    %1566 = vset.pattern.permute.xlu0 0
    %1567 = vperm.xlu0 %1566, %v1533
    %v1568 = vpop.permute.xlu0 %1567
    %1571 = vset.pattern.permute.xlu0 0
    %1572 = vperm.xlu0 %1571, %v1540
    %v1573 = vpop.permute.xlu0 %1572
    %1576 = vset.pattern.permute.xlu0 0
    %1577 = vperm.xlu0 %1576, %v1547
    %v1578 = vpop.permute.xlu0 %1577
    %v1580 = vmul.f32 %v1563, %v1005
    %v1581 = vmul.f32 %v1568, %v1005
    %v1582 = vmul.f32 %v1573, %v1005
    %v1583 = vmul.f32 %v1578, %v1005
    %v1584 = vadd.f32 %v1494, %v1580
    %v1585 = vadd.f32 %v1499, %v1581
    %v1586 = vadd.f32 %v1504, %v1582
    %v1587 = vadd.f32 %v1509, %v1583
    %v1588 = vsub.f32 %v1494, %v768
    %v1589 = vsub.f32 %v1499, %v770
    %v1590 = vsub.f32 %v1504, %v772
    %v1591 = vsub.f32 %v1509, %v774
    %1593 = vset.pattern.permute.xlu0 0
    %1594 = vperm.xlu0 %1593, %v1553
    %v1595 = vpop.permute.xlu0 %1594
    %1598 = vset.pattern.permute.xlu0 0
    %1599 = vperm.xlu0 %1598, %v1555
    %v1600 = vpop.permute.xlu0 %1599
    %1603 = vset.pattern.permute.xlu0 0
    %1604 = vperm.xlu0 %1603, %v1557
    %v1605 = vpop.permute.xlu0 %1604
    %1608 = vset.pattern.permute.xlu0 0
    %1609 = vperm.xlu0 %1608, %v1559
    %v1610 = vpop.permute.xlu0 %1609
    %v1612 = vmul.f32 %v1595, %v1588
    %v1613 = vmul.f32 %v1600, %v1589
    %v1614 = vmul.f32 %v1605, %v1590
    %v1615 = vmul.f32 %v1610, %v1591
    %1620 = vrot.lane.b32.xlu0 %v1612, 96
    %v1621 = vpop.permute.xlu0 %1620
    %1622 = vrot.lane.b32.xlu0 %v1613, 96
    %v1623 = vpop.permute.xlu0 %1622
    %1624 = vrot.lane.b32.xlu0 %v1614, 96
    %v1625 = vpop.permute.xlu0 %1624
    %1626 = vrot.lane.b32.xlu0 %v1615, 96
    %v1627 = vpop.permute.xlu0 %1626
    %v1632 = vadd.f32 %v1584, %v1621
    %v1633 = vadd.f32 %v1585, %v1623
    %v1634 = vadd.f32 %v1586, %v1625
    %v1635 = vadd.f32 %v1587, %v1627
    %v1636 = vadd.f32 %v1632, %v1065
    %v1637 = vadd.f32 %v1633, %v1065
    %v1638 = vadd.f32 %v1634, %v1065
    %v1639 = vadd.f32 %v1635, %v1065
    %v1640 = vmax.f32 %v1636, 0.0
    %v1641 = vmax.f32 %v1637, 0.0
    %v1642 = vmax.f32 %v1638, 0.0
    %v1643 = vmax.f32 %v1639, 0.0
    %v1644 = vadd.f32 %v1359, %v1640
    %v1645 = vadd.f32 %v1360, %v1641
    %v1646 = vadd.f32 %v1361, %v1642
    %v1647 = vadd.f32 %v1362, %v1643
    %v1648 = vsel %vm350, %v1411, inf
    %1649 = vmin.xlane.f32.xlu0 %v1648
    %v1650 = vpop.xlane.xlu0 %1649
    %v1651 = vsel %vm350, %v1412, inf
    %1652 = vmin.xlane.f32.xlu0 %v1651
    %v1653 = vpop.xlane.xlu0 %1652
    %v1654 = vsel %vm350, %v1413, inf
    %1655 = vmin.xlane.f32.xlu0 %v1654
    %v1656 = vpop.xlane.xlu0 %1655
    %v1657 = vsel %vm350, %v1414, inf
    %1658 = vmin.xlane.f32.xlu0 %v1657
    %v1659 = vpop.xlane.xlu0 %1658
    %vm1660 = vcmp.eq.f32.partialorder %v1411, %v1650
    %vm1661 = vcmp.eq.f32.partialorder %v1412, %v1653
    %vm1662 = vcmp.eq.f32.partialorder %v1413, %v1656
    %vm1663 = vcmp.eq.f32.partialorder %v1414, %v1659
    %v1664 = vsel %vm1660, %v537, 32.0
    %v1665 = vsel %vm1661, %v537, 32.0
    %v1666 = vsel %vm1662, %v537, 32.0
    %v1667 = vsel %vm1663, %v537, 32.0
    %v1668 = vsel %vm350, %v1664, inf
    %1669 = vmin.xlane.f32.xlu0 %v1668
    %v1670 = vpop.xlane.xlu0 %1669
    %v1671 = vsel %vm350, %v1665, inf
    %1672 = vmin.xlane.f32.xlu0 %v1671
    %v1673 = vpop.xlane.xlu0 %1672
    %v1674 = vsel %vm350, %v1666, inf
    %1675 = vmin.xlane.f32.xlu0 %v1674
    %v1676 = vpop.xlane.xlu0 %1675
    %v1677 = vsel %vm350, %v1667, inf
    %1678 = vmin.xlane.f32.xlu0 %v1677
    %v1679 = vpop.xlane.xlu0 %1678
    %vm1680 = vcmp.eq.f32.partialorder %v537, %v1670
    %vm1681 = vcmp.eq.f32.partialorder %v537, %v1673
    %vm1682 = vcmp.eq.f32.partialorder %v537, %v1676
    %vm1683 = vcmp.eq.f32.partialorder %v537, %v1679
    %v1684 = vsel %vm1680, 1, 0
    %v1685 = vsel %vm1681, 1, 0
    %v1686 = vsel %vm1682, 1, 0
    %v1687 = vsel %vm1683, 1, 0
    %v1688 = vcvt.s32.f32 %v1684
    %v1689 = vcvt.s32.f32 %v1685
    %v1690 = vcvt.s32.f32 %v1686
    %v1691 = vcvt.s32.f32 %v1687
    %v1692 = vmul.f32 %v1688, 1e+30
    %v1693 = vmul.f32 %v1689, 1e+30
    %v1694 = vmul.f32 %v1690, 1e+30
    %v1695 = vmul.f32 %v1691, 1e+30
    %v1696 = vadd.f32 %v1411, %v1692
    %v1697 = vadd.f32 %v1412, %v1693
    %v1698 = vadd.f32 %v1413, %v1694
    %v1699 = vadd.f32 %v1414, %v1695
    %v1701 = vsel %vm350, %v1688, 0
    %v1704 = vsel %vm350, %v1689, 0
    %v1707 = vsel %vm350, %v1690, 0
    %v1710 = vsel %vm350, %v1691, 0
    %1712 = vmatprep.subr.mxu0 0.0
    %1713 = vmatpush1.msra.mxu0 %v779
    %1714 = vmatprep.subr.mxu0 0.0
    %1715 = vmatpush1.msra.mxu0 %v780
    %1716 = vmatprep.subr.mxu0 0.0
    %1717 = vmatpush1.msra.mxu0 %v781
    %1718 = vmatprep.subr.mxu0 0.0
    %1719 = vmatpush1.msra.mxu0 %v782
    %1720 = vmatprep.subr.mxu0 0.0
    %1721 = vmatpush1.msra.mxu0 0.0
    %1722 = vmatprep.subr.mxu0 0.0
    %1723 = vmatpush1.msra.mxu0 0.0
    %1724 = vmatprep.subr.mxu0 0.0
    %1725 = vmatpush1.msra.mxu0 0.0
    %1726 = vmatprep.subr.mxu0 0.0
    %1727 = vmatpush1.msra.mxu0 0.0
    %1728 = vmatprep.subr.mxu0 0.0
    %1729 = vmatpush1.msra.mxu0 0.0
    %1730 = vmatprep.subr.mxu0 0.0
    %1731 = vmatpush1.msra.mxu0 0.0
    %1732 = vmatprep.subr.mxu0 0.0
    %1733 = vmatpush1.msra.mxu0 0.0
    %1734 = vmatprep.subr.mxu0 0.0
    %1735 = vmatpush1.msra.mxu0 0.0
    %1736 = vmatprep.subr.mxu0 0.0
    %1737 = vmatpush1.msra.mxu0 0.0
    %1738 = vmatprep.subr.mxu0 0.0
    %1739 = vmatpush1.msra.mxu0 0.0
    %1740 = vmatprep.subr.mxu0 0.0
    %1741 = vmatpush1.msra.mxu0 0.0
    %1742 = vmatprep.subr.mxu0 0.0
    %1743 = vmatpush1.msra.mxu0 0.0
    %1744 = vmatprep.subr.mxu0 0.0
    %1745 = vmatpush1.msra.mxu0 0.0
    %1746 = vmatprep.subr.mxu0 0.0
    %1747 = vmatpush1.msra.mxu0 0.0
    %1748 = vmatprep.subr.mxu0 0.0
    %1749 = vmatpush1.msra.mxu0 0.0
    %1750 = vmatprep.subr.mxu0 0.0
    %1751 = vmatpush1.msra.mxu0 0.0
    %1752 = vmatprep.subr.mxu0 0.0
    %1753 = vmatpush1.msra.mxu0 0.0
    %1754 = vmatprep.subr.mxu0 0.0
    %1755 = vmatpush1.msra.mxu0 0.0
    %1756 = vmatprep.subr.mxu0 0.0
    %1757 = vmatpush1.msra.mxu0 0.0
    %1758 = vmatprep.subr.mxu0 0.0
    %1759 = vmatpush1.msra.mxu0 0.0
    %1760 = vmatprep.subr.mxu0 0.0
    %1761 = vmatpush1.msra.mxu0 0.0
    %1762 = vmatprep.subr.mxu0 0.0
    %1763 = vmatpush1.msra.mxu0 0.0
    %1764 = vmatprep.subr.mxu0 0.0
    %1765 = vmatpush1.msra.mxu0 0.0
    %1766 = vmatprep.subr.mxu0 0.0
    %1767 = vmatpush1.msra.mxu0 0.0
    %1768 = vmatprep.subr.mxu0 0.0
    %1769 = vmatpush1.msra.mxu0 0.0
    %1770 = vmatprep.subr.mxu0 0.0
    %1771 = vmatpush1.msra.mxu0 0.0
    %1772 = vmatprep.subr.mxu0 0.0
    %1773 = vmatpush1.msra.mxu0 0.0
    %1774 = vmatprep.subr.mxu0 0.0
    %1775 = vmatpush1.msra.mxu0 0.0
    %1776 = vmatprep.mubr.f32.mxu0 0.0
    %1777 = vmatmul.mubr.f32.gmra.mrb[0].mxu0 %v1701
    %v1778 = vpop.f32.mrb[0].mxu0
    %v1779 = vadd.f32 0.0, %v1778
    %v1780 = vpop.f32.mrb[0].mxu0
    %1781 = vmatprep.mubr.f32.mxu0 0.0
    %1782 = vmatmul.mubr.f32.gmra.mrb[0].mxu0 %v1704
    %v1783 = vpop.f32.mrb[0].mxu0
    %v1784 = vadd.f32 0.0, %v1783
    %v1785 = vpop.f32.mrb[0].mxu0
    %1786 = vmatprep.mubr.f32.mxu0 0.0
    %1787 = vmatmul.mubr.f32.gmra.mrb[0].mxu0 %v1707
    %v1788 = vpop.f32.mrb[0].mxu0
    %v1789 = vadd.f32 0.0, %v1788
    %v1790 = vpop.f32.mrb[0].mxu0
    %1791 = vmatprep.mubr.f32.mxu0 0.0
    %1792 = vmatmul.mubr.f32.gmra.mrb[0].mxu0 %v1710
    %v1793 = vpop.f32.mrb[0].mxu0
    %v1794 = vadd.f32 0.0, %v1793
    %v1795 = vpop.f32.mrb[0].mxu0
    %1796 = vdwg.mxu0
    %v1797 = vadd.f32 %v1650, %v503
    %v1798 = vadd.f32 %v1653, %v508
    %v1799 = vadd.f32 %v1656, %v513
    %v1800 = vadd.f32 %v1659, %v518
    %v1801 = vmax.f32 %v1797, 0.0
    %v1802 = vmax.f32 %v1798, 0.0
    %v1803 = vmax.f32 %v1799, 0.0
    %v1804 = vmax.f32 %v1800, 0.0
    %v1805 = vrsqrt.pop %v1801
    %v1806 = vmul.f32 %v1801, %v1805
    %vm1807 = vcmp.eq.f32.partialorder %v1801, inf
    %v1808 = vsel %vm1807, %v1801, %v1806
    %vm1809 = vcmp.eq.f32.partialorder %v1801, 0.0
    %v1810 = vand.u32 %v1801, 2147483648
    %v1811 = vsel %vm1809, %v1810, %v1808
    %v1812 = vrsqrt.pop %v1802
    %v1813 = vmul.f32 %v1802, %v1812
    %vm1814 = vcmp.eq.f32.partialorder %v1802, inf
    %v1815 = vsel %vm1814, %v1802, %v1813
    %vm1816 = vcmp.eq.f32.partialorder %v1802, 0.0
    %v1817 = vand.u32 %v1802, 2147483648
    %v1818 = vsel %vm1816, %v1817, %v1815
    %v1819 = vrsqrt.pop %v1803
    %v1820 = vmul.f32 %v1803, %v1819
    %vm1821 = vcmp.eq.f32.partialorder %v1803, inf
    %v1822 = vsel %vm1821, %v1803, %v1820
    %vm1823 = vcmp.eq.f32.partialorder %v1803, 0.0
    %v1824 = vand.u32 %v1803, 2147483648
    %v1825 = vsel %vm1823, %v1824, %v1822
    %v1826 = vrsqrt.pop %v1804
    %v1827 = vmul.f32 %v1804, %v1826
    %vm1828 = vcmp.eq.f32.partialorder %v1804, inf
    %v1829 = vsel %vm1828, %v1804, %v1827
    %vm1830 = vcmp.eq.f32.partialorder %v1804, 0.0
    %v1831 = vand.u32 %v1804, 2147483648
    %v1832 = vsel %vm1830, %v1831, %v1829
    %v1833 = vadd.f32 %v1811, 1e-06
    %v1834 = vadd.f32 %v1818, 1e-06
    %v1835 = vadd.f32 %v1825, 1e-06
    %v1836 = vadd.f32 %v1832, 1e-06
    %v1837 = vrcp.pop %v1833
    %v1838 = vmul.f32 1.0, %v1837
    %v1839 = vrcp.pop %v1834
    %v1840 = vmul.f32 1.0, %v1839
    %v1841 = vrcp.pop %v1835
    %v1842 = vmul.f32 1.0, %v1841
    %v1843 = vrcp.pop %v1836
    %v1844 = vmul.f32 1.0, %v1843
    %1846 = vset.pattern.permute.xlu0 0
    %1847 = vperm.xlu0 %1846, %v1811
    %v1848 = vpop.permute.xlu0 %1847
    %1851 = vset.pattern.permute.xlu0 0
    %1852 = vperm.xlu0 %1851, %v1818
    %v1853 = vpop.permute.xlu0 %1852
    %1856 = vset.pattern.permute.xlu0 0
    %1857 = vperm.xlu0 %1856, %v1825
    %v1858 = vpop.permute.xlu0 %1857
    %1861 = vset.pattern.permute.xlu0 0
    %1862 = vperm.xlu0 %1861, %v1832
    %v1863 = vpop.permute.xlu0 %1862
    %v1865 = vmul.f32 %v1848, %v1005
    %v1866 = vmul.f32 %v1853, %v1005
    %v1867 = vmul.f32 %v1858, %v1005
    %v1868 = vmul.f32 %v1863, %v1005
    %v1869 = vadd.f32 %v1779, %v1865
    %v1870 = vadd.f32 %v1784, %v1866
    %v1871 = vadd.f32 %v1789, %v1867
    %v1872 = vadd.f32 %v1794, %v1868
    %v1873 = vsub.f32 %v1779, %v768
    %v1874 = vsub.f32 %v1784, %v770
    %v1875 = vsub.f32 %v1789, %v772
    %v1876 = vsub.f32 %v1794, %v774
    %1878 = vset.pattern.permute.xlu0 0
    %1879 = vperm.xlu0 %1878, %v1838
    %v1880 = vpop.permute.xlu0 %1879
    %1883 = vset.pattern.permute.xlu0 0
    %1884 = vperm.xlu0 %1883, %v1840
    %v1885 = vpop.permute.xlu0 %1884
    %1888 = vset.pattern.permute.xlu0 0
    %1889 = vperm.xlu0 %1888, %v1842
    %v1890 = vpop.permute.xlu0 %1889
    %1893 = vset.pattern.permute.xlu0 0
    %1894 = vperm.xlu0 %1893, %v1844
    %v1895 = vpop.permute.xlu0 %1894
    %v1897 = vmul.f32 %v1880, %v1873
    %v1898 = vmul.f32 %v1885, %v1874
    %v1899 = vmul.f32 %v1890, %v1875
    %v1900 = vmul.f32 %v1895, %v1876
    %1905 = vrot.lane.b32.xlu0 %v1897, 96
    %v1906 = vpop.permute.xlu0 %1905
    %1907 = vrot.lane.b32.xlu0 %v1898, 96
    %v1908 = vpop.permute.xlu0 %1907
    %1909 = vrot.lane.b32.xlu0 %v1899, 96
    %v1910 = vpop.permute.xlu0 %1909
    %1911 = vrot.lane.b32.xlu0 %v1900, 96
    %v1912 = vpop.permute.xlu0 %1911
    %v1917 = vadd.f32 %v1869, %v1906
    %v1918 = vadd.f32 %v1870, %v1908
    %v1919 = vadd.f32 %v1871, %v1910
    %v1920 = vadd.f32 %v1872, %v1912
    %v1921 = vadd.f32 %v1917, %v1065
    %v1922 = vadd.f32 %v1918, %v1065
    %v1923 = vadd.f32 %v1919, %v1065
    %v1924 = vadd.f32 %v1920, %v1065
    %v1925 = vmax.f32 %v1921, 0.0
    %v1926 = vmax.f32 %v1922, 0.0
    %v1927 = vmax.f32 %v1923, 0.0
    %v1928 = vmax.f32 %v1924, 0.0
    %v1929 = vadd.f32 %v1644, %v1925
    %v1930 = vadd.f32 %v1645, %v1926
    %v1931 = vadd.f32 %v1646, %v1927
    %v1932 = vadd.f32 %v1647, %v1928
    %v1933 = vsel %vm350, %v1696, inf
    %1934 = vmin.xlane.f32.xlu0 %v1933
    %v1935 = vpop.xlane.xlu0 %1934
    %v1936 = vsel %vm350, %v1697, inf
    %1937 = vmin.xlane.f32.xlu0 %v1936
    %v1938 = vpop.xlane.xlu0 %1937
    %v1939 = vsel %vm350, %v1698, inf
    %1940 = vmin.xlane.f32.xlu0 %v1939
    %v1941 = vpop.xlane.xlu0 %1940
    %v1942 = vsel %vm350, %v1699, inf
    %1943 = vmin.xlane.f32.xlu0 %v1942
    %v1944 = vpop.xlane.xlu0 %1943
    %vm1945 = vcmp.eq.f32.partialorder %v1696, %v1935
    %vm1946 = vcmp.eq.f32.partialorder %v1697, %v1938
    %vm1947 = vcmp.eq.f32.partialorder %v1698, %v1941
    %vm1948 = vcmp.eq.f32.partialorder %v1699, %v1944
    %v1949 = vsel %vm1945, %v537, 32.0
    %v1950 = vsel %vm1946, %v537, 32.0
    %v1951 = vsel %vm1947, %v537, 32.0
    %v1952 = vsel %vm1948, %v537, 32.0
    %v1953 = vsel %vm350, %v1949, inf
    %1954 = vmin.xlane.f32.xlu0 %v1953
    %v1955 = vpop.xlane.xlu0 %1954
    %v1956 = vsel %vm350, %v1950, inf
    %1957 = vmin.xlane.f32.xlu0 %v1956
    %v1958 = vpop.xlane.xlu0 %1957
    %v1959 = vsel %vm350, %v1951, inf
    %1960 = vmin.xlane.f32.xlu0 %v1959
    %v1961 = vpop.xlane.xlu0 %1960
    %v1962 = vsel %vm350, %v1952, inf
    %1963 = vmin.xlane.f32.xlu0 %v1962
    %v1964 = vpop.xlane.xlu0 %1963
    %vm1965 = vcmp.eq.f32.partialorder %v537, %v1955
    %vm1966 = vcmp.eq.f32.partialorder %v537, %v1958
    %vm1967 = vcmp.eq.f32.partialorder %v537, %v1961
    %vm1968 = vcmp.eq.f32.partialorder %v537, %v1964
    %v1969 = vsel %vm1965, 1, 0
    %v1970 = vsel %vm1966, 1, 0
    %v1971 = vsel %vm1967, 1, 0
    %v1972 = vsel %vm1968, 1, 0
    %v1973 = vcvt.s32.f32 %v1969
    %v1974 = vcvt.s32.f32 %v1970
    %v1975 = vcvt.s32.f32 %v1971
    %v1976 = vcvt.s32.f32 %v1972
    %v1977 = vmul.f32 %v1973, 1e+30
    %v1978 = vmul.f32 %v1974, 1e+30
    %v1979 = vmul.f32 %v1975, 1e+30
    %v1980 = vmul.f32 %v1976, 1e+30
    %v1981 = vadd.f32 %v1696, %v1977
    %v1982 = vadd.f32 %v1697, %v1978
    %v1983 = vadd.f32 %v1698, %v1979
    %v1984 = vadd.f32 %v1699, %v1980
    %v1986 = vsel %vm350, %v1973, 0
    %v1989 = vsel %vm350, %v1974, 0
    %v1992 = vsel %vm350, %v1975, 0
    %v1995 = vsel %vm350, %v1976, 0
    %1997 = vmatprep.subr.mxu0 0.0
    %1998 = vmatpush1.msra.mxu0 %v779
    %1999 = vmatprep.subr.mxu0 0.0
    %2000 = vmatpush1.msra.mxu0 %v780
    %2001 = vmatprep.subr.mxu0 0.0
    %2002 = vmatpush1.msra.mxu0 %v781
    %2003 = vmatprep.subr.mxu0 0.0
    %2004 = vmatpush1.msra.mxu0 %v782
    %2005 = vmatprep.subr.mxu0 0.0
    %2006 = vmatpush1.msra.mxu0 0.0
    %2007 = vmatprep.subr.mxu0 0.0
    %2008 = vmatpush1.msra.mxu0 0.0
    %2009 = vmatprep.subr.mxu0 0.0
    %2010 = vmatpush1.msra.mxu0 0.0
    %2011 = vmatprep.subr.mxu0 0.0
    %2012 = vmatpush1.msra.mxu0 0.0
    %2013 = vmatprep.subr.mxu0 0.0
    %2014 = vmatpush1.msra.mxu0 0.0
    %2015 = vmatprep.subr.mxu0 0.0
    %2016 = vmatpush1.msra.mxu0 0.0
    %2017 = vmatprep.subr.mxu0 0.0
    %2018 = vmatpush1.msra.mxu0 0.0
    %2019 = vmatprep.subr.mxu0 0.0
    %2020 = vmatpush1.msra.mxu0 0.0
    %2021 = vmatprep.subr.mxu0 0.0
    %2022 = vmatpush1.msra.mxu0 0.0
    %2023 = vmatprep.subr.mxu0 0.0
    %2024 = vmatpush1.msra.mxu0 0.0
    %2025 = vmatprep.subr.mxu0 0.0
    %2026 = vmatpush1.msra.mxu0 0.0
    %2027 = vmatprep.subr.mxu0 0.0
    %2028 = vmatpush1.msra.mxu0 0.0
    %2029 = vmatprep.subr.mxu0 0.0
    %2030 = vmatpush1.msra.mxu0 0.0
    %2031 = vmatprep.subr.mxu0 0.0
    %2032 = vmatpush1.msra.mxu0 0.0
    %2033 = vmatprep.subr.mxu0 0.0
    %2034 = vmatpush1.msra.mxu0 0.0
    %2035 = vmatprep.subr.mxu0 0.0
    %2036 = vmatpush1.msra.mxu0 0.0
    %2037 = vmatprep.subr.mxu0 0.0
    %2038 = vmatpush1.msra.mxu0 0.0
    %2039 = vmatprep.subr.mxu0 0.0
    %2040 = vmatpush1.msra.mxu0 0.0
    %2041 = vmatprep.subr.mxu0 0.0
    %2042 = vmatpush1.msra.mxu0 0.0
    %2043 = vmatprep.subr.mxu0 0.0
    %2044 = vmatpush1.msra.mxu0 0.0
    %2045 = vmatprep.subr.mxu0 0.0
    %2046 = vmatpush1.msra.mxu0 0.0
    %2047 = vmatprep.subr.mxu0 0.0
    %2048 = vmatpush1.msra.mxu0 0.0
    %2049 = vmatprep.subr.mxu0 0.0
    %2050 = vmatpush1.msra.mxu0 0.0
    %2051 = vmatprep.subr.mxu0 0.0
    %2052 = vmatpush1.msra.mxu0 0.0
    %2053 = vmatprep.subr.mxu0 0.0
    %2054 = vmatpush1.msra.mxu0 0.0
    %2055 = vmatprep.subr.mxu0 0.0
    %2056 = vmatpush1.msra.mxu0 0.0
    %2057 = vmatprep.subr.mxu0 0.0
    %2058 = vmatpush1.msra.mxu0 0.0
    %2059 = vmatprep.subr.mxu0 0.0
    %2060 = vmatpush1.msra.mxu0 0.0
    %2061 = vmatprep.mubr.f32.mxu0 0.0
    %2062 = vmatmul.mubr.f32.gmra.mrb[0].mxu0 %v1986
    %v2063 = vpop.f32.mrb[0].mxu0
    %v2064 = vadd.f32 0.0, %v2063
    %v2065 = vpop.f32.mrb[0].mxu0
    %2066 = vmatprep.mubr.f32.mxu0 0.0
    %2067 = vmatmul.mubr.f32.gmra.mrb[0].mxu0 %v1989
    %v2068 = vpop.f32.mrb[0].mxu0
    %v2069 = vadd.f32 0.0, %v2068
    %v2070 = vpop.f32.mrb[0].mxu0
    %2071 = vmatprep.mubr.f32.mxu0 0.0
    %2072 = vmatmul.mubr.f32.gmra.mrb[0].mxu0 %v1992
    %v2073 = vpop.f32.mrb[0].mxu0
    %v2074 = vadd.f32 0.0, %v2073
    %v2075 = vpop.f32.mrb[0].mxu0
    %2076 = vmatprep.mubr.f32.mxu0 0.0
    %2077 = vmatmul.mubr.f32.gmra.mrb[0].mxu0 %v1995
    %v2078 = vpop.f32.mrb[0].mxu0
    %v2079 = vadd.f32 0.0, %v2078
    %v2080 = vpop.f32.mrb[0].mxu0
    %2081 = vdwg.mxu0
    %v2082 = vadd.f32 %v1935, %v503
    %v2083 = vadd.f32 %v1938, %v508
    %v2084 = vadd.f32 %v1941, %v513
    %v2085 = vadd.f32 %v1944, %v518
    %v2086 = vmax.f32 %v2082, 0.0
    %v2087 = vmax.f32 %v2083, 0.0
    %v2088 = vmax.f32 %v2084, 0.0
    %v2089 = vmax.f32 %v2085, 0.0
    %v2090 = vrsqrt.pop %v2086
    %v2091 = vmul.f32 %v2086, %v2090
    %vm2092 = vcmp.eq.f32.partialorder %v2086, inf
    %v2093 = vsel %vm2092, %v2086, %v2091
    %vm2094 = vcmp.eq.f32.partialorder %v2086, 0.0
    %v2095 = vand.u32 %v2086, 2147483648
    %v2096 = vsel %vm2094, %v2095, %v2093
    %v2097 = vrsqrt.pop %v2087
    %v2098 = vmul.f32 %v2087, %v2097
    %vm2099 = vcmp.eq.f32.partialorder %v2087, inf
    %v2100 = vsel %vm2099, %v2087, %v2098
    %vm2101 = vcmp.eq.f32.partialorder %v2087, 0.0
    %v2102 = vand.u32 %v2087, 2147483648
    %v2103 = vsel %vm2101, %v2102, %v2100
    %v2104 = vrsqrt.pop %v2088
    %v2105 = vmul.f32 %v2088, %v2104
    %vm2106 = vcmp.eq.f32.partialorder %v2088, inf
    %v2107 = vsel %vm2106, %v2088, %v2105
    %vm2108 = vcmp.eq.f32.partialorder %v2088, 0.0
    %v2109 = vand.u32 %v2088, 2147483648
    %v2110 = vsel %vm2108, %v2109, %v2107
    %v2111 = vrsqrt.pop %v2089
    %v2112 = vmul.f32 %v2089, %v2111
    %vm2113 = vcmp.eq.f32.partialorder %v2089, inf
    %v2114 = vsel %vm2113, %v2089, %v2112
    %vm2115 = vcmp.eq.f32.partialorder %v2089, 0.0
    %v2116 = vand.u32 %v2089, 2147483648
    %v2117 = vsel %vm2115, %v2116, %v2114
    %v2118 = vadd.f32 %v2096, 1e-06
    %v2119 = vadd.f32 %v2103, 1e-06
    %v2120 = vadd.f32 %v2110, 1e-06
    %v2121 = vadd.f32 %v2117, 1e-06
    %v2122 = vrcp.pop %v2118
    %v2123 = vmul.f32 1.0, %v2122
    %v2124 = vrcp.pop %v2119
    %v2125 = vmul.f32 1.0, %v2124
    %v2126 = vrcp.pop %v2120
    %v2127 = vmul.f32 1.0, %v2126
    %v2128 = vrcp.pop %v2121
    %v2129 = vmul.f32 1.0, %v2128
    %2131 = vset.pattern.permute.xlu0 0
    %2132 = vperm.xlu0 %2131, %v2096
    %v2133 = vpop.permute.xlu0 %2132
    %2136 = vset.pattern.permute.xlu0 0
    %2137 = vperm.xlu0 %2136, %v2103
    %v2138 = vpop.permute.xlu0 %2137
    %2141 = vset.pattern.permute.xlu0 0
    %2142 = vperm.xlu0 %2141, %v2110
    %v2143 = vpop.permute.xlu0 %2142
    %2146 = vset.pattern.permute.xlu0 0
    %2147 = vperm.xlu0 %2146, %v2117
    %v2148 = vpop.permute.xlu0 %2147
    %v2150 = vmul.f32 %v2133, %v1005
    %v2151 = vmul.f32 %v2138, %v1005
    %v2152 = vmul.f32 %v2143, %v1005
    %v2153 = vmul.f32 %v2148, %v1005
    %v2154 = vadd.f32 %v2064, %v2150
    %v2155 = vadd.f32 %v2069, %v2151
    %v2156 = vadd.f32 %v2074, %v2152
    %v2157 = vadd.f32 %v2079, %v2153
    %v2158 = vsub.f32 %v2064, %v768
    %v2159 = vsub.f32 %v2069, %v770
    %v2160 = vsub.f32 %v2074, %v772
    %v2161 = vsub.f32 %v2079, %v774
    %2163 = vset.pattern.permute.xlu0 0
    %2164 = vperm.xlu0 %2163, %v2123
    %v2165 = vpop.permute.xlu0 %2164
    %2168 = vset.pattern.permute.xlu0 0
    %2169 = vperm.xlu0 %2168, %v2125
    %v2170 = vpop.permute.xlu0 %2169
    %2173 = vset.pattern.permute.xlu0 0
    %2174 = vperm.xlu0 %2173, %v2127
    %v2175 = vpop.permute.xlu0 %2174
    %2178 = vset.pattern.permute.xlu0 0
    %2179 = vperm.xlu0 %2178, %v2129
    %v2180 = vpop.permute.xlu0 %2179
    %v2182 = vmul.f32 %v2165, %v2158
    %v2183 = vmul.f32 %v2170, %v2159
    %v2184 = vmul.f32 %v2175, %v2160
    %v2185 = vmul.f32 %v2180, %v2161
    %2190 = vrot.lane.b32.xlu0 %v2182, 96
    %v2191 = vpop.permute.xlu0 %2190
    %2192 = vrot.lane.b32.xlu0 %v2183, 96
    %v2193 = vpop.permute.xlu0 %2192
    %2194 = vrot.lane.b32.xlu0 %v2184, 96
    %v2195 = vpop.permute.xlu0 %2194
    %2196 = vrot.lane.b32.xlu0 %v2185, 96
    %v2197 = vpop.permute.xlu0 %2196
    %v2202 = vadd.f32 %v2154, %v2191
    %v2203 = vadd.f32 %v2155, %v2193
    %v2204 = vadd.f32 %v2156, %v2195
    %v2205 = vadd.f32 %v2157, %v2197
    %v2206 = vadd.f32 %v2202, %v1065
    %v2207 = vadd.f32 %v2203, %v1065
    %v2208 = vadd.f32 %v2204, %v1065
    %v2209 = vadd.f32 %v2205, %v1065
    %v2210 = vmax.f32 %v2206, 0.0
    %v2211 = vmax.f32 %v2207, 0.0
    %v2212 = vmax.f32 %v2208, 0.0
    %v2213 = vmax.f32 %v2209, 0.0
    %v2214 = vadd.f32 %v1929, %v2210
    %v2215 = vadd.f32 %v1930, %v2211
    %v2216 = vadd.f32 %v1931, %v2212
    %v2217 = vadd.f32 %v1932, %v2213
    %v2218 = vsel %vm350, %v1981, inf
    %2219 = vmin.xlane.f32.xlu0 %v2218
    %v2220 = vpop.xlane.xlu0 %2219
    %v2221 = vsel %vm350, %v1982, inf
    %2222 = vmin.xlane.f32.xlu0 %v2221
    %v2223 = vpop.xlane.xlu0 %2222
    %v2224 = vsel %vm350, %v1983, inf
    %2225 = vmin.xlane.f32.xlu0 %v2224
    %v2226 = vpop.xlane.xlu0 %2225
    %v2227 = vsel %vm350, %v1984, inf
    %2228 = vmin.xlane.f32.xlu0 %v2227
    %v2229 = vpop.xlane.xlu0 %2228
    %vm2230 = vcmp.eq.f32.partialorder %v1981, %v2220
    %vm2231 = vcmp.eq.f32.partialorder %v1982, %v2223
    %vm2232 = vcmp.eq.f32.partialorder %v1983, %v2226
    %vm2233 = vcmp.eq.f32.partialorder %v1984, %v2229
    %v2234 = vsel %vm2230, %v537, 32.0
    %v2235 = vsel %vm2231, %v537, 32.0
    %v2236 = vsel %vm2232, %v537, 32.0
    %v2237 = vsel %vm2233, %v537, 32.0
    %v2238 = vsel %vm350, %v2234, inf
    %2239 = vmin.xlane.f32.xlu0 %v2238
    %v2240 = vpop.xlane.xlu0 %2239
    %v2241 = vsel %vm350, %v2235, inf
    %2242 = vmin.xlane.f32.xlu0 %v2241
    %v2243 = vpop.xlane.xlu0 %2242
    %v2244 = vsel %vm350, %v2236, inf
    %2245 = vmin.xlane.f32.xlu0 %v2244
    %v2246 = vpop.xlane.xlu0 %2245
    %v2247 = vsel %vm350, %v2237, inf
    %2248 = vmin.xlane.f32.xlu0 %v2247
    %v2249 = vpop.xlane.xlu0 %2248
    %vm2250 = vcmp.eq.f32.partialorder %v537, %v2240
    %vm2251 = vcmp.eq.f32.partialorder %v537, %v2243
    %vm2252 = vcmp.eq.f32.partialorder %v537, %v2246
    %vm2253 = vcmp.eq.f32.partialorder %v537, %v2249
    %v2254 = vsel %vm2250, 1, 0
    %v2255 = vsel %vm2251, 1, 0
    %v2256 = vsel %vm2252, 1, 0
    %v2257 = vsel %vm2253, 1, 0
    %v2258 = vcvt.s32.f32 %v2254
    %v2259 = vcvt.s32.f32 %v2255
    %v2260 = vcvt.s32.f32 %v2256
    %v2261 = vcvt.s32.f32 %v2257
    %v2262 = vmul.f32 %v2258, 1e+30
    %v2263 = vmul.f32 %v2259, 1e+30
    %v2264 = vmul.f32 %v2260, 1e+30
    %v2265 = vmul.f32 %v2261, 1e+30
    %v2266 = vadd.f32 %v1981, %v2262
    %v2267 = vadd.f32 %v1982, %v2263
    %v2268 = vadd.f32 %v1983, %v2264
    %v2269 = vadd.f32 %v1984, %v2265
    %v2271 = vsel %vm350, %v2258, 0
    %v2274 = vsel %vm350, %v2259, 0
    %v2277 = vsel %vm350, %v2260, 0
    %v2280 = vsel %vm350, %v2261, 0
    %2282 = vmatprep.subr.mxu0 0.0
    %2283 = vmatpush1.msra.mxu0 %v779
    %2284 = vmatprep.subr.mxu0 0.0
    %2285 = vmatpush1.msra.mxu0 %v780
    %2286 = vmatprep.subr.mxu0 0.0
    %2287 = vmatpush1.msra.mxu0 %v781
    %2288 = vmatprep.subr.mxu0 0.0
    %2289 = vmatpush1.msra.mxu0 %v782
    %2290 = vmatprep.subr.mxu0 0.0
    %2291 = vmatpush1.msra.mxu0 0.0
    %2292 = vmatprep.subr.mxu0 0.0
    %2293 = vmatpush1.msra.mxu0 0.0
    %2294 = vmatprep.subr.mxu0 0.0
    %2295 = vmatpush1.msra.mxu0 0.0
    %2296 = vmatprep.subr.mxu0 0.0
    %2297 = vmatpush1.msra.mxu0 0.0
    %2298 = vmatprep.subr.mxu0 0.0
    %2299 = vmatpush1.msra.mxu0 0.0
    %2300 = vmatprep.subr.mxu0 0.0
    %2301 = vmatpush1.msra.mxu0 0.0
    %2302 = vmatprep.subr.mxu0 0.0
    %2303 = vmatpush1.msra.mxu0 0.0
    %2304 = vmatprep.subr.mxu0 0.0
    %2305 = vmatpush1.msra.mxu0 0.0
    %2306 = vmatprep.subr.mxu0 0.0
    %2307 = vmatpush1.msra.mxu0 0.0
    %2308 = vmatprep.subr.mxu0 0.0
    %2309 = vmatpush1.msra.mxu0 0.0
    %2310 = vmatprep.subr.mxu0 0.0
    %2311 = vmatpush1.msra.mxu0 0.0
    %2312 = vmatprep.subr.mxu0 0.0
    %2313 = vmatpush1.msra.mxu0 0.0
    %2314 = vmatprep.subr.mxu0 0.0
    %2315 = vmatpush1.msra.mxu0 0.0
    %2316 = vmatprep.subr.mxu0 0.0
    %2317 = vmatpush1.msra.mxu0 0.0
    %2318 = vmatprep.subr.mxu0 0.0
    %2319 = vmatpush1.msra.mxu0 0.0
    %2320 = vmatprep.subr.mxu0 0.0
    %2321 = vmatpush1.msra.mxu0 0.0
    %2322 = vmatprep.subr.mxu0 0.0
    %2323 = vmatpush1.msra.mxu0 0.0
    %2324 = vmatprep.subr.mxu0 0.0
    %2325 = vmatpush1.msra.mxu0 0.0
    %2326 = vmatprep.subr.mxu0 0.0
    %2327 = vmatpush1.msra.mxu0 0.0
    %2328 = vmatprep.subr.mxu0 0.0
    %2329 = vmatpush1.msra.mxu0 0.0
    %2330 = vmatprep.subr.mxu0 0.0
    %2331 = vmatpush1.msra.mxu0 0.0
    %2332 = vmatprep.subr.mxu0 0.0
    %2333 = vmatpush1.msra.mxu0 0.0
    %2334 = vmatprep.subr.mxu0 0.0
    %2335 = vmatpush1.msra.mxu0 0.0
    %2336 = vmatprep.subr.mxu0 0.0
    %2337 = vmatpush1.msra.mxu0 0.0
    %2338 = vmatprep.subr.mxu0 0.0
    %2339 = vmatpush1.msra.mxu0 0.0
    %2340 = vmatprep.subr.mxu0 0.0
    %2341 = vmatpush1.msra.mxu0 0.0
    %2342 = vmatprep.subr.mxu0 0.0
    %2343 = vmatpush1.msra.mxu0 0.0
    %2344 = vmatprep.subr.mxu0 0.0
    %2345 = vmatpush1.msra.mxu0 0.0
    %2346 = vmatprep.mubr.f32.mxu0 0.0
    %2347 = vmatmul.mubr.f32.gmra.mrb[0].mxu0 %v2271
    %v2348 = vpop.f32.mrb[0].mxu0
    %v2349 = vadd.f32 0.0, %v2348
    %v2350 = vpop.f32.mrb[0].mxu0
    %2351 = vmatprep.mubr.f32.mxu0 0.0
    %2352 = vmatmul.mubr.f32.gmra.mrb[0].mxu0 %v2274
    %v2353 = vpop.f32.mrb[0].mxu0
    %v2354 = vadd.f32 0.0, %v2353
    %v2355 = vpop.f32.mrb[0].mxu0
    %2356 = vmatprep.mubr.f32.mxu0 0.0
    %2357 = vmatmul.mubr.f32.gmra.mrb[0].mxu0 %v2277
    %v2358 = vpop.f32.mrb[0].mxu0
    %v2359 = vadd.f32 0.0, %v2358
    %v2360 = vpop.f32.mrb[0].mxu0
    %2361 = vmatprep.mubr.f32.mxu0 0.0
    %2362 = vmatmul.mubr.f32.gmra.mrb[0].mxu0 %v2280
    %v2363 = vpop.f32.mrb[0].mxu0
    %v2364 = vadd.f32 0.0, %v2363
    %v2365 = vpop.f32.mrb[0].mxu0
    %2366 = vdwg.mxu0
    %v2367 = vadd.f32 %v2220, %v503
    %v2368 = vadd.f32 %v2223, %v508
    %v2369 = vadd.f32 %v2226, %v513
    %v2370 = vadd.f32 %v2229, %v518
    %v2371 = vmax.f32 %v2367, 0.0
    %v2372 = vmax.f32 %v2368, 0.0
    %v2373 = vmax.f32 %v2369, 0.0
    %v2374 = vmax.f32 %v2370, 0.0
    %v2375 = vrsqrt.pop %v2371
    %v2376 = vmul.f32 %v2371, %v2375
    %vm2377 = vcmp.eq.f32.partialorder %v2371, inf
    %v2378 = vsel %vm2377, %v2371, %v2376
    %vm2379 = vcmp.eq.f32.partialorder %v2371, 0.0
    %v2380 = vand.u32 %v2371, 2147483648
    %v2381 = vsel %vm2379, %v2380, %v2378
    %v2382 = vrsqrt.pop %v2372
    %v2383 = vmul.f32 %v2372, %v2382
    %vm2384 = vcmp.eq.f32.partialorder %v2372, inf
    %v2385 = vsel %vm2384, %v2372, %v2383
    %vm2386 = vcmp.eq.f32.partialorder %v2372, 0.0
    %v2387 = vand.u32 %v2372, 2147483648
    %v2388 = vsel %vm2386, %v2387, %v2385
    %v2389 = vrsqrt.pop %v2373
    %v2390 = vmul.f32 %v2373, %v2389
    %vm2391 = vcmp.eq.f32.partialorder %v2373, inf
    %v2392 = vsel %vm2391, %v2373, %v2390
    %vm2393 = vcmp.eq.f32.partialorder %v2373, 0.0
    %v2394 = vand.u32 %v2373, 2147483648
    %v2395 = vsel %vm2393, %v2394, %v2392
    %v2396 = vrsqrt.pop %v2374
    %v2397 = vmul.f32 %v2374, %v2396
    %vm2398 = vcmp.eq.f32.partialorder %v2374, inf
    %v2399 = vsel %vm2398, %v2374, %v2397
    %vm2400 = vcmp.eq.f32.partialorder %v2374, 0.0
    %v2401 = vand.u32 %v2374, 2147483648
    %v2402 = vsel %vm2400, %v2401, %v2399
    %v2403 = vadd.f32 %v2381, 1e-06
    %v2404 = vadd.f32 %v2388, 1e-06
    %v2405 = vadd.f32 %v2395, 1e-06
    %v2406 = vadd.f32 %v2402, 1e-06
    %v2407 = vrcp.pop %v2403
    %v2408 = vmul.f32 1.0, %v2407
    %v2409 = vrcp.pop %v2404
    %v2410 = vmul.f32 1.0, %v2409
    %v2411 = vrcp.pop %v2405
    %v2412 = vmul.f32 1.0, %v2411
    %v2413 = vrcp.pop %v2406
    %v2414 = vmul.f32 1.0, %v2413
    %2416 = vset.pattern.permute.xlu0 0
    %2417 = vperm.xlu0 %2416, %v2381
    %v2418 = vpop.permute.xlu0 %2417
    %2421 = vset.pattern.permute.xlu0 0
    %2422 = vperm.xlu0 %2421, %v2388
    %v2423 = vpop.permute.xlu0 %2422
    %2426 = vset.pattern.permute.xlu0 0
    %2427 = vperm.xlu0 %2426, %v2395
    %v2428 = vpop.permute.xlu0 %2427
    %2431 = vset.pattern.permute.xlu0 0
    %2432 = vperm.xlu0 %2431, %v2402
    %v2433 = vpop.permute.xlu0 %2432
    %v2435 = vmul.f32 %v2418, %v1005
    %v2436 = vmul.f32 %v2423, %v1005
    %v2437 = vmul.f32 %v2428, %v1005
    %v2438 = vmul.f32 %v2433, %v1005
    %v2439 = vadd.f32 %v2349, %v2435
    %v2440 = vadd.f32 %v2354, %v2436
    %v2441 = vadd.f32 %v2359, %v2437
    %v2442 = vadd.f32 %v2364, %v2438
    %v2443 = vsub.f32 %v2349, %v768
    %v2444 = vsub.f32 %v2354, %v770
    %v2445 = vsub.f32 %v2359, %v772
    %v2446 = vsub.f32 %v2364, %v774
    %2448 = vset.pattern.permute.xlu0 0
    %2449 = vperm.xlu0 %2448, %v2408
    %v2450 = vpop.permute.xlu0 %2449
    %2453 = vset.pattern.permute.xlu0 0
    %2454 = vperm.xlu0 %2453, %v2410
    %v2455 = vpop.permute.xlu0 %2454
    %2458 = vset.pattern.permute.xlu0 0
    %2459 = vperm.xlu0 %2458, %v2412
    %v2460 = vpop.permute.xlu0 %2459
    %2463 = vset.pattern.permute.xlu0 0
    %2464 = vperm.xlu0 %2463, %v2414
    %v2465 = vpop.permute.xlu0 %2464
    %v2467 = vmul.f32 %v2450, %v2443
    %v2468 = vmul.f32 %v2455, %v2444
    %v2469 = vmul.f32 %v2460, %v2445
    %v2470 = vmul.f32 %v2465, %v2446
    %2475 = vrot.lane.b32.xlu0 %v2467, 96
    %v2476 = vpop.permute.xlu0 %2475
    %2477 = vrot.lane.b32.xlu0 %v2468, 96
    %v2478 = vpop.permute.xlu0 %2477
    %2479 = vrot.lane.b32.xlu0 %v2469, 96
    %v2480 = vpop.permute.xlu0 %2479
    %2481 = vrot.lane.b32.xlu0 %v2470, 96
    %v2482 = vpop.permute.xlu0 %2481
    %v2487 = vadd.f32 %v2439, %v2476
    %v2488 = vadd.f32 %v2440, %v2478
    %v2489 = vadd.f32 %v2441, %v2480
    %v2490 = vadd.f32 %v2442, %v2482
    %v2491 = vadd.f32 %v2487, %v1065
    %v2492 = vadd.f32 %v2488, %v1065
    %v2493 = vadd.f32 %v2489, %v1065
    %v2494 = vadd.f32 %v2490, %v1065
    %v2495 = vmax.f32 %v2491, 0.0
    %v2496 = vmax.f32 %v2492, 0.0
    %v2497 = vmax.f32 %v2493, 0.0
    %v2498 = vmax.f32 %v2494, 0.0
    %v2499 = vadd.f32 %v2214, %v2495
    %v2500 = vadd.f32 %v2215, %v2496
    %v2501 = vadd.f32 %v2216, %v2497
    %v2502 = vadd.f32 %v2217, %v2498
    %v2503 = vsel %vm350, %v2266, inf
    %2504 = vmin.xlane.f32.xlu0 %v2503
    %v2505 = vpop.xlane.xlu0 %2504
    %v2506 = vsel %vm350, %v2267, inf
    %2507 = vmin.xlane.f32.xlu0 %v2506
    %v2508 = vpop.xlane.xlu0 %2507
    %v2509 = vsel %vm350, %v2268, inf
    %2510 = vmin.xlane.f32.xlu0 %v2509
    %v2511 = vpop.xlane.xlu0 %2510
    %v2512 = vsel %vm350, %v2269, inf
    %2513 = vmin.xlane.f32.xlu0 %v2512
    %v2514 = vpop.xlane.xlu0 %2513
    %vm2515 = vcmp.eq.f32.partialorder %v2266, %v2505
    %vm2516 = vcmp.eq.f32.partialorder %v2267, %v2508
    %vm2517 = vcmp.eq.f32.partialorder %v2268, %v2511
    %vm2518 = vcmp.eq.f32.partialorder %v2269, %v2514
    %v2519 = vsel %vm2515, %v537, 32.0
    %v2520 = vsel %vm2516, %v537, 32.0
    %v2521 = vsel %vm2517, %v537, 32.0
    %v2522 = vsel %vm2518, %v537, 32.0
    %v2523 = vsel %vm350, %v2519, inf
    %2524 = vmin.xlane.f32.xlu0 %v2523
    %v2525 = vpop.xlane.xlu0 %2524
    %v2526 = vsel %vm350, %v2520, inf
    %2527 = vmin.xlane.f32.xlu0 %v2526
    %v2528 = vpop.xlane.xlu0 %2527
    %v2529 = vsel %vm350, %v2521, inf
    %2530 = vmin.xlane.f32.xlu0 %v2529
    %v2531 = vpop.xlane.xlu0 %2530
    %v2532 = vsel %vm350, %v2522, inf
    %2533 = vmin.xlane.f32.xlu0 %v2532
    %v2534 = vpop.xlane.xlu0 %2533
    %vm2535 = vcmp.eq.f32.partialorder %v537, %v2525
    %vm2536 = vcmp.eq.f32.partialorder %v537, %v2528
    %vm2537 = vcmp.eq.f32.partialorder %v537, %v2531
    %vm2538 = vcmp.eq.f32.partialorder %v537, %v2534
    %v2539 = vsel %vm2535, 1, 0
    %v2540 = vsel %vm2536, 1, 0
    %v2541 = vsel %vm2537, 1, 0
    %v2542 = vsel %vm2538, 1, 0
    %v2543 = vcvt.s32.f32 %v2539
    %v2544 = vcvt.s32.f32 %v2540
    %v2545 = vcvt.s32.f32 %v2541
    %v2546 = vcvt.s32.f32 %v2542
    %v2547 = vmul.f32 %v2543, 1e+30
    %v2548 = vmul.f32 %v2544, 1e+30
    %v2549 = vmul.f32 %v2545, 1e+30
    %v2550 = vmul.f32 %v2546, 1e+30
    %v2551 = vadd.f32 %v2266, %v2547
    %v2552 = vadd.f32 %v2267, %v2548
    %v2553 = vadd.f32 %v2268, %v2549
    %v2554 = vadd.f32 %v2269, %v2550
    %v2556 = vsel %vm350, %v2543, 0
    %v2559 = vsel %vm350, %v2544, 0
    %v2562 = vsel %vm350, %v2545, 0
    %v2565 = vsel %vm350, %v2546, 0
    %2567 = vmatprep.subr.mxu0 0.0
    %2568 = vmatpush1.msra.mxu0 %v779
    %2569 = vmatprep.subr.mxu0 0.0
    %2570 = vmatpush1.msra.mxu0 %v780
    %2571 = vmatprep.subr.mxu0 0.0
    %2572 = vmatpush1.msra.mxu0 %v781
    %2573 = vmatprep.subr.mxu0 0.0
    %2574 = vmatpush1.msra.mxu0 %v782
    %2575 = vmatprep.subr.mxu0 0.0
    %2576 = vmatpush1.msra.mxu0 0.0
    %2577 = vmatprep.subr.mxu0 0.0
    %2578 = vmatpush1.msra.mxu0 0.0
    %2579 = vmatprep.subr.mxu0 0.0
    %2580 = vmatpush1.msra.mxu0 0.0
    %2581 = vmatprep.subr.mxu0 0.0
    %2582 = vmatpush1.msra.mxu0 0.0
    %2583 = vmatprep.subr.mxu0 0.0
    %2584 = vmatpush1.msra.mxu0 0.0
    %2585 = vmatprep.subr.mxu0 0.0
    %2586 = vmatpush1.msra.mxu0 0.0
    %2587 = vmatprep.subr.mxu0 0.0
    %2588 = vmatpush1.msra.mxu0 0.0
    %2589 = vmatprep.subr.mxu0 0.0
    %2590 = vmatpush1.msra.mxu0 0.0
    %2591 = vmatprep.subr.mxu0 0.0
    %2592 = vmatpush1.msra.mxu0 0.0
    %2593 = vmatprep.subr.mxu0 0.0
    %2594 = vmatpush1.msra.mxu0 0.0
    %2595 = vmatprep.subr.mxu0 0.0
    %2596 = vmatpush1.msra.mxu0 0.0
    %2597 = vmatprep.subr.mxu0 0.0
    %2598 = vmatpush1.msra.mxu0 0.0
    %2599 = vmatprep.subr.mxu0 0.0
    %2600 = vmatpush1.msra.mxu0 0.0
    %2601 = vmatprep.subr.mxu0 0.0
    %2602 = vmatpush1.msra.mxu0 0.0
    %2603 = vmatprep.subr.mxu0 0.0
    %2604 = vmatpush1.msra.mxu0 0.0
    %2605 = vmatprep.subr.mxu0 0.0
    %2606 = vmatpush1.msra.mxu0 0.0
    %2607 = vmatprep.subr.mxu0 0.0
    %2608 = vmatpush1.msra.mxu0 0.0
    %2609 = vmatprep.subr.mxu0 0.0
    %2610 = vmatpush1.msra.mxu0 0.0
    %2611 = vmatprep.subr.mxu0 0.0
    %2612 = vmatpush1.msra.mxu0 0.0
    %2613 = vmatprep.subr.mxu0 0.0
    %2614 = vmatpush1.msra.mxu0 0.0
    %2615 = vmatprep.subr.mxu0 0.0
    %2616 = vmatpush1.msra.mxu0 0.0
    %2617 = vmatprep.subr.mxu0 0.0
    %2618 = vmatpush1.msra.mxu0 0.0
    %2619 = vmatprep.subr.mxu0 0.0
    %2620 = vmatpush1.msra.mxu0 0.0
    %2621 = vmatprep.subr.mxu0 0.0
    %2622 = vmatpush1.msra.mxu0 0.0
    %2623 = vmatprep.subr.mxu0 0.0
    %2624 = vmatpush1.msra.mxu0 0.0
    %2625 = vmatprep.subr.mxu0 0.0
    %2626 = vmatpush1.msra.mxu0 0.0
    %2627 = vmatprep.subr.mxu0 0.0
    %2628 = vmatpush1.msra.mxu0 0.0
    %2629 = vmatprep.subr.mxu0 0.0
    %2630 = vmatpush1.msra.mxu0 0.0
    %2631 = vmatprep.mubr.f32.mxu0 0.0
    %2632 = vmatmul.mubr.f32.gmra.mrb[0].mxu0 %v2556
    %v2633 = vpop.f32.mrb[0].mxu0
    %v2634 = vadd.f32 0.0, %v2633
    %v2635 = vpop.f32.mrb[0].mxu0
    %2636 = vmatprep.mubr.f32.mxu0 0.0
    %2637 = vmatmul.mubr.f32.gmra.mrb[0].mxu0 %v2559
    %v2638 = vpop.f32.mrb[0].mxu0
    %v2639 = vadd.f32 0.0, %v2638
    %v2640 = vpop.f32.mrb[0].mxu0
    %2641 = vmatprep.mubr.f32.mxu0 0.0
    %2642 = vmatmul.mubr.f32.gmra.mrb[0].mxu0 %v2562
    %v2643 = vpop.f32.mrb[0].mxu0
    %v2644 = vadd.f32 0.0, %v2643
    %v2645 = vpop.f32.mrb[0].mxu0
    %2646 = vmatprep.mubr.f32.mxu0 0.0
    %2647 = vmatmul.mubr.f32.gmra.mrb[0].mxu0 %v2565
    %v2648 = vpop.f32.mrb[0].mxu0
    %v2649 = vadd.f32 0.0, %v2648
    %v2650 = vpop.f32.mrb[0].mxu0
    %2651 = vdwg.mxu0
    %v2652 = vadd.f32 %v2505, %v503
    %v2653 = vadd.f32 %v2508, %v508
    %v2654 = vadd.f32 %v2511, %v513
    %v2655 = vadd.f32 %v2514, %v518
    %v2656 = vmax.f32 %v2652, 0.0
    %v2657 = vmax.f32 %v2653, 0.0
    %v2658 = vmax.f32 %v2654, 0.0
    %v2659 = vmax.f32 %v2655, 0.0
    %v2660 = vrsqrt.pop %v2656
    %v2661 = vmul.f32 %v2656, %v2660
    %vm2662 = vcmp.eq.f32.partialorder %v2656, inf
    %v2663 = vsel %vm2662, %v2656, %v2661
    %vm2664 = vcmp.eq.f32.partialorder %v2656, 0.0
    %v2665 = vand.u32 %v2656, 2147483648
    %v2666 = vsel %vm2664, %v2665, %v2663
    %v2667 = vrsqrt.pop %v2657
    %v2668 = vmul.f32 %v2657, %v2667
    %vm2669 = vcmp.eq.f32.partialorder %v2657, inf
    %v2670 = vsel %vm2669, %v2657, %v2668
    %vm2671 = vcmp.eq.f32.partialorder %v2657, 0.0
    %v2672 = vand.u32 %v2657, 2147483648
    %v2673 = vsel %vm2671, %v2672, %v2670
    %v2674 = vrsqrt.pop %v2658
    %v2675 = vmul.f32 %v2658, %v2674
    %vm2676 = vcmp.eq.f32.partialorder %v2658, inf
    %v2677 = vsel %vm2676, %v2658, %v2675
    %vm2678 = vcmp.eq.f32.partialorder %v2658, 0.0
    %v2679 = vand.u32 %v2658, 2147483648
    %v2680 = vsel %vm2678, %v2679, %v2677
    %v2681 = vrsqrt.pop %v2659
    %v2682 = vmul.f32 %v2659, %v2681
    %vm2683 = vcmp.eq.f32.partialorder %v2659, inf
    %v2684 = vsel %vm2683, %v2659, %v2682
    %vm2685 = vcmp.eq.f32.partialorder %v2659, 0.0
    %v2686 = vand.u32 %v2659, 2147483648
    %v2687 = vsel %vm2685, %v2686, %v2684
    %v2688 = vadd.f32 %v2666, 1e-06
    %v2689 = vadd.f32 %v2673, 1e-06
    %v2690 = vadd.f32 %v2680, 1e-06
    %v2691 = vadd.f32 %v2687, 1e-06
    %v2692 = vrcp.pop %v2688
    %v2693 = vmul.f32 1.0, %v2692
    %v2694 = vrcp.pop %v2689
    %v2695 = vmul.f32 1.0, %v2694
    %v2696 = vrcp.pop %v2690
    %v2697 = vmul.f32 1.0, %v2696
    %v2698 = vrcp.pop %v2691
    %v2699 = vmul.f32 1.0, %v2698
    %2701 = vset.pattern.permute.xlu0 0
    %2702 = vperm.xlu0 %2701, %v2666
    %v2703 = vpop.permute.xlu0 %2702
    %2706 = vset.pattern.permute.xlu0 0
    %2707 = vperm.xlu0 %2706, %v2673
    %v2708 = vpop.permute.xlu0 %2707
    %2711 = vset.pattern.permute.xlu0 0
    %2712 = vperm.xlu0 %2711, %v2680
    %v2713 = vpop.permute.xlu0 %2712
    %2716 = vset.pattern.permute.xlu0 0
    %2717 = vperm.xlu0 %2716, %v2687
    %v2718 = vpop.permute.xlu0 %2717
    %v2720 = vmul.f32 %v2703, %v1005
    %v2721 = vmul.f32 %v2708, %v1005
    %v2722 = vmul.f32 %v2713, %v1005
    %v2723 = vmul.f32 %v2718, %v1005
    %v2724 = vadd.f32 %v2634, %v2720
    %v2725 = vadd.f32 %v2639, %v2721
    %v2726 = vadd.f32 %v2644, %v2722
    %v2727 = vadd.f32 %v2649, %v2723
    %v2728 = vsub.f32 %v2634, %v768
    %v2729 = vsub.f32 %v2639, %v770
    %v2730 = vsub.f32 %v2644, %v772
    %v2731 = vsub.f32 %v2649, %v774
    %2733 = vset.pattern.permute.xlu0 0
    %2734 = vperm.xlu0 %2733, %v2693
    %v2735 = vpop.permute.xlu0 %2734
    %2738 = vset.pattern.permute.xlu0 0
    %2739 = vperm.xlu0 %2738, %v2695
    %v2740 = vpop.permute.xlu0 %2739
    %2743 = vset.pattern.permute.xlu0 0
    %2744 = vperm.xlu0 %2743, %v2697
    %v2745 = vpop.permute.xlu0 %2744
    %2748 = vset.pattern.permute.xlu0 0
    %2749 = vperm.xlu0 %2748, %v2699
    %v2750 = vpop.permute.xlu0 %2749
    %v2752 = vmul.f32 %v2735, %v2728
    %v2753 = vmul.f32 %v2740, %v2729
    %v2754 = vmul.f32 %v2745, %v2730
    %v2755 = vmul.f32 %v2750, %v2731
    %2760 = vrot.lane.b32.xlu0 %v2752, 96
    %v2761 = vpop.permute.xlu0 %2760
    %2762 = vrot.lane.b32.xlu0 %v2753, 96
    %v2763 = vpop.permute.xlu0 %2762
    %2764 = vrot.lane.b32.xlu0 %v2754, 96
    %v2765 = vpop.permute.xlu0 %2764
    %2766 = vrot.lane.b32.xlu0 %v2755, 96
    %v2767 = vpop.permute.xlu0 %2766
    %v2772 = vadd.f32 %v2724, %v2761
    %v2773 = vadd.f32 %v2725, %v2763
    %v2774 = vadd.f32 %v2726, %v2765
    %v2775 = vadd.f32 %v2727, %v2767
    %v2776 = vadd.f32 %v2772, %v1065
    %v2777 = vadd.f32 %v2773, %v1065
    %v2778 = vadd.f32 %v2774, %v1065
    %v2779 = vadd.f32 %v2775, %v1065
    %v2780 = vmax.f32 %v2776, 0.0
    %v2781 = vmax.f32 %v2777, 0.0
    %v2782 = vmax.f32 %v2778, 0.0
    %v2783 = vmax.f32 %v2779, 0.0
    %v2784 = vadd.f32 %v2499, %v2780
    %v2785 = vadd.f32 %v2500, %v2781
    %v2786 = vadd.f32 %v2501, %v2782
    %v2787 = vadd.f32 %v2502, %v2783
    %v2788 = vsel %vm350, %v2551, inf
    %2789 = vmin.xlane.f32.xlu0 %v2788
    %v2790 = vpop.xlane.xlu0 %2789
    %v2791 = vsel %vm350, %v2552, inf
    %2792 = vmin.xlane.f32.xlu0 %v2791
    %v2793 = vpop.xlane.xlu0 %2792
    %v2794 = vsel %vm350, %v2553, inf
    %2795 = vmin.xlane.f32.xlu0 %v2794
    %v2796 = vpop.xlane.xlu0 %2795
    %v2797 = vsel %vm350, %v2554, inf
    %2798 = vmin.xlane.f32.xlu0 %v2797
    %v2799 = vpop.xlane.xlu0 %2798
    %vm2800 = vcmp.eq.f32.partialorder %v2551, %v2790
    %vm2801 = vcmp.eq.f32.partialorder %v2552, %v2793
    %vm2802 = vcmp.eq.f32.partialorder %v2553, %v2796
    %vm2803 = vcmp.eq.f32.partialorder %v2554, %v2799
    %v2804 = vsel %vm2800, %v537, 32.0
    %v2805 = vsel %vm2801, %v537, 32.0
    %v2806 = vsel %vm2802, %v537, 32.0
    %v2807 = vsel %vm2803, %v537, 32.0
    %v2808 = vsel %vm350, %v2804, inf
    %2809 = vmin.xlane.f32.xlu0 %v2808
    %v2810 = vpop.xlane.xlu0 %2809
    %v2811 = vsel %vm350, %v2805, inf
    %2812 = vmin.xlane.f32.xlu0 %v2811
    %v2813 = vpop.xlane.xlu0 %2812
    %v2814 = vsel %vm350, %v2806, inf
    %2815 = vmin.xlane.f32.xlu0 %v2814
    %v2816 = vpop.xlane.xlu0 %2815
    %v2817 = vsel %vm350, %v2807, inf
    %2818 = vmin.xlane.f32.xlu0 %v2817
    %v2819 = vpop.xlane.xlu0 %2818
    %vm2820 = vcmp.eq.f32.partialorder %v537, %v2810
    %vm2821 = vcmp.eq.f32.partialorder %v537, %v2813
    %vm2822 = vcmp.eq.f32.partialorder %v537, %v2816
    %vm2823 = vcmp.eq.f32.partialorder %v537, %v2819
    %v2824 = vsel %vm2820, 1, 0
    %v2825 = vsel %vm2821, 1, 0
    %v2826 = vsel %vm2822, 1, 0
    %v2827 = vsel %vm2823, 1, 0
    %v2828 = vcvt.s32.f32 %v2824
    %v2829 = vcvt.s32.f32 %v2825
    %v2830 = vcvt.s32.f32 %v2826
    %v2831 = vcvt.s32.f32 %v2827
    %v2833 = vsel %vm350, %v2828, 0
    %v2836 = vsel %vm350, %v2829, 0
    %v2839 = vsel %vm350, %v2830, 0
    %v2842 = vsel %vm350, %v2831, 0
    %2844 = vmatprep.subr.mxu0 0.0
    %2845 = vmatpush1.msra.mxu0 %v779
    %2846 = vmatprep.subr.mxu0 0.0
    %2847 = vmatpush1.msra.mxu0 %v780
    %2848 = vmatprep.subr.mxu0 0.0
    %2849 = vmatpush1.msra.mxu0 %v781
    %2850 = vmatprep.subr.mxu0 0.0
    %2851 = vmatpush1.msra.mxu0 %v782
    %2852 = vmatprep.subr.mxu0 0.0
    %2853 = vmatpush1.msra.mxu0 0.0
    %2854 = vmatprep.subr.mxu0 0.0
    %2855 = vmatpush1.msra.mxu0 0.0
    %2856 = vmatprep.subr.mxu0 0.0
    %2857 = vmatpush1.msra.mxu0 0.0
    %2858 = vmatprep.subr.mxu0 0.0
    %2859 = vmatpush1.msra.mxu0 0.0
    %2860 = vmatprep.subr.mxu0 0.0
    %2861 = vmatpush1.msra.mxu0 0.0
    %2862 = vmatprep.subr.mxu0 0.0
    %2863 = vmatpush1.msra.mxu0 0.0
    %2864 = vmatprep.subr.mxu0 0.0
    %2865 = vmatpush1.msra.mxu0 0.0
    %2866 = vmatprep.subr.mxu0 0.0
    %2867 = vmatpush1.msra.mxu0 0.0
    %2868 = vmatprep.subr.mxu0 0.0
    %2869 = vmatpush1.msra.mxu0 0.0
    %2870 = vmatprep.subr.mxu0 0.0
    %2871 = vmatpush1.msra.mxu0 0.0
    %2872 = vmatprep.subr.mxu0 0.0
    %2873 = vmatpush1.msra.mxu0 0.0
    %2874 = vmatprep.subr.mxu0 0.0
    %2875 = vmatpush1.msra.mxu0 0.0
    %2876 = vmatprep.subr.mxu0 0.0
    %2877 = vmatpush1.msra.mxu0 0.0
    %2878 = vmatprep.subr.mxu0 0.0
    %2879 = vmatpush1.msra.mxu0 0.0
    %2880 = vmatprep.subr.mxu0 0.0
    %2881 = vmatpush1.msra.mxu0 0.0
    %2882 = vmatprep.subr.mxu0 0.0
    %2883 = vmatpush1.msra.mxu0 0.0
    %2884 = vmatprep.subr.mxu0 0.0
    %2885 = vmatpush1.msra.mxu0 0.0
    %2886 = vmatprep.subr.mxu0 0.0
    %2887 = vmatpush1.msra.mxu0 0.0
    %2888 = vmatprep.subr.mxu0 0.0
    %2889 = vmatpush1.msra.mxu0 0.0
    %2890 = vmatprep.subr.mxu0 0.0
    %2891 = vmatpush1.msra.mxu0 0.0
    %2892 = vmatprep.subr.mxu0 0.0
    %2893 = vmatpush1.msra.mxu0 0.0
    %2894 = vmatprep.subr.mxu0 0.0
    %2895 = vmatpush1.msra.mxu0 0.0
    %2896 = vmatprep.subr.mxu0 0.0
    %2897 = vmatpush1.msra.mxu0 0.0
    %2898 = vmatprep.subr.mxu0 0.0
    %2899 = vmatpush1.msra.mxu0 0.0
    %2900 = vmatprep.subr.mxu0 0.0
    %2901 = vmatpush1.msra.mxu0 0.0
    %2902 = vmatprep.subr.mxu0 0.0
    %2903 = vmatpush1.msra.mxu0 0.0
    %2904 = vmatprep.subr.mxu0 0.0
    %2905 = vmatpush1.msra.mxu0 0.0
    %2906 = vmatprep.subr.mxu0 0.0
    %2907 = vmatpush1.msra.mxu0 0.0
    %2908 = vmatprep.mubr.f32.mxu0 0.0
    %2909 = vmatmul.mubr.f32.gmra.mrb[0].mxu0 %v2833
    %v2910 = vpop.f32.mrb[0].mxu0
    %v2911 = vadd.f32 0.0, %v2910
    %v2912 = vpop.f32.mrb[0].mxu0
    %2913 = vmatprep.mubr.f32.mxu0 0.0
    %2914 = vmatmul.mubr.f32.gmra.mrb[0].mxu0 %v2836
    %v2915 = vpop.f32.mrb[0].mxu0
    %v2916 = vadd.f32 0.0, %v2915
    %v2917 = vpop.f32.mrb[0].mxu0
    %2918 = vmatprep.mubr.f32.mxu0 0.0
    %2919 = vmatmul.mubr.f32.gmra.mrb[0].mxu0 %v2839
    %v2920 = vpop.f32.mrb[0].mxu0
    %v2921 = vadd.f32 0.0, %v2920
    %v2922 = vpop.f32.mrb[0].mxu0
    %2923 = vmatprep.mubr.f32.mxu0 0.0
    %2924 = vmatmul.mubr.f32.gmra.mrb[0].mxu0 %v2842
    %v2925 = vpop.f32.mrb[0].mxu0
    %v2926 = vadd.f32 0.0, %v2925
    %v2927 = vpop.f32.mrb[0].mxu0
    %2928 = vdwg.mxu0
    %v2929 = vadd.f32 %v2790, %v503
    %v2930 = vadd.f32 %v2793, %v508
    %v2931 = vadd.f32 %v2796, %v513
    %v2932 = vadd.f32 %v2799, %v518
    %v2933 = vmax.f32 %v2929, 0.0
    %v2934 = vmax.f32 %v2930, 0.0
    %v2935 = vmax.f32 %v2931, 0.0
    %v2936 = vmax.f32 %v2932, 0.0
    %v2937 = vrsqrt.pop %v2933
    %v2938 = vmul.f32 %v2933, %v2937
    %vm2939 = vcmp.eq.f32.partialorder %v2933, inf
    %v2940 = vsel %vm2939, %v2933, %v2938
    %vm2941 = vcmp.eq.f32.partialorder %v2933, 0.0
    %v2942 = vand.u32 %v2933, 2147483648
    %v2943 = vsel %vm2941, %v2942, %v2940
    %v2944 = vrsqrt.pop %v2934
    %v2945 = vmul.f32 %v2934, %v2944
    %vm2946 = vcmp.eq.f32.partialorder %v2934, inf
    %v2947 = vsel %vm2946, %v2934, %v2945
    %vm2948 = vcmp.eq.f32.partialorder %v2934, 0.0
    %v2949 = vand.u32 %v2934, 2147483648
    %v2950 = vsel %vm2948, %v2949, %v2947
    %v2951 = vrsqrt.pop %v2935
    %v2952 = vmul.f32 %v2935, %v2951
    %vm2953 = vcmp.eq.f32.partialorder %v2935, inf
    %v2954 = vsel %vm2953, %v2935, %v2952
    %vm2955 = vcmp.eq.f32.partialorder %v2935, 0.0
    %v2956 = vand.u32 %v2935, 2147483648
    %v2957 = vsel %vm2955, %v2956, %v2954
    %v2958 = vrsqrt.pop %v2936
    %v2959 = vmul.f32 %v2936, %v2958
    %vm2960 = vcmp.eq.f32.partialorder %v2936, inf
    %v2961 = vsel %vm2960, %v2936, %v2959
    %vm2962 = vcmp.eq.f32.partialorder %v2936, 0.0
    %v2963 = vand.u32 %v2936, 2147483648
    %v2964 = vsel %vm2962, %v2963, %v2961
    %v2965 = vadd.f32 %v2943, 1e-06
    %v2966 = vadd.f32 %v2950, 1e-06
    %v2967 = vadd.f32 %v2957, 1e-06
    %v2968 = vadd.f32 %v2964, 1e-06
    %v2969 = vrcp.pop %v2965
    %v2970 = vmul.f32 1.0, %v2969
    %v2971 = vrcp.pop %v2966
    %v2972 = vmul.f32 1.0, %v2971
    %v2973 = vrcp.pop %v2967
    %v2974 = vmul.f32 1.0, %v2973
    %v2975 = vrcp.pop %v2968
    %v2976 = vmul.f32 1.0, %v2975
    %2978 = vset.pattern.permute.xlu0 0
    %2979 = vperm.xlu0 %2978, %v2943
    %v2980 = vpop.permute.xlu0 %2979
    %2983 = vset.pattern.permute.xlu0 0
    %2984 = vperm.xlu0 %2983, %v2950
    %v2985 = vpop.permute.xlu0 %2984
    %2988 = vset.pattern.permute.xlu0 0
    %2989 = vperm.xlu0 %2988, %v2957
    %v2990 = vpop.permute.xlu0 %2989
    %2993 = vset.pattern.permute.xlu0 0
    %2994 = vperm.xlu0 %2993, %v2964
    %v2995 = vpop.permute.xlu0 %2994
    %v2997 = vmul.f32 %v2980, %v1005
    %v2998 = vmul.f32 %v2985, %v1005
    %v2999 = vmul.f32 %v2990, %v1005
    %v3000 = vmul.f32 %v2995, %v1005
    %v3001 = vadd.f32 %v2911, %v2997
    %v3002 = vadd.f32 %v2916, %v2998
    %v3003 = vadd.f32 %v2921, %v2999
    %v3004 = vadd.f32 %v2926, %v3000
    %v3005 = vsub.f32 %v2911, %v768
    %v3006 = vsub.f32 %v2916, %v770
    %v3007 = vsub.f32 %v2921, %v772
    %v3008 = vsub.f32 %v2926, %v774
    %3010 = vset.pattern.permute.xlu0 0
    %3011 = vperm.xlu0 %3010, %v2970
    %v3012 = vpop.permute.xlu0 %3011
    %3015 = vset.pattern.permute.xlu0 0
    %3016 = vperm.xlu0 %3015, %v2972
    %v3017 = vpop.permute.xlu0 %3016
    %3020 = vset.pattern.permute.xlu0 0
    %3021 = vperm.xlu0 %3020, %v2974
    %v3022 = vpop.permute.xlu0 %3021
    %3025 = vset.pattern.permute.xlu0 0
    %3026 = vperm.xlu0 %3025, %v2976
    %v3027 = vpop.permute.xlu0 %3026
    %v3029 = vmul.f32 %v3012, %v3005
    %v3030 = vmul.f32 %v3017, %v3006
    %v3031 = vmul.f32 %v3022, %v3007
    %v3032 = vmul.f32 %v3027, %v3008
    %3037 = vrot.lane.b32.xlu0 %v3029, 96
    %v3038 = vpop.permute.xlu0 %3037
    %3039 = vrot.lane.b32.xlu0 %v3030, 96
    %v3040 = vpop.permute.xlu0 %3039
    %3041 = vrot.lane.b32.xlu0 %v3031, 96
    %v3042 = vpop.permute.xlu0 %3041
    %3043 = vrot.lane.b32.xlu0 %v3032, 96
    %v3044 = vpop.permute.xlu0 %3043
    %v3049 = vadd.f32 %v3001, %v3038
    %v3050 = vadd.f32 %v3002, %v3040
    %v3051 = vadd.f32 %v3003, %v3042
    %v3052 = vadd.f32 %v3004, %v3044
    %v3053 = vadd.f32 %v3049, %v1065
    %v3054 = vadd.f32 %v3050, %v1065
    %v3055 = vadd.f32 %v3051, %v1065
    %v3056 = vadd.f32 %v3052, %v1065
    %v3057 = vmax.f32 %v3053, 0.0
    %v3058 = vmax.f32 %v3054, 0.0
    %v3059 = vmax.f32 %v3055, 0.0
    %v3060 = vmax.f32 %v3056, 0.0
    %v3061 = vadd.f32 %v2784, %v3057
    %v3062 = vadd.f32 %v2785, %v3058
    %v3063 = vadd.f32 %v2786, %v3059
    %v3064 = vadd.f32 %v2787, %v3060
    %v3065 = vmul.f32 %v3061, 0.125
    %v3066 = vmul.f32 %v3062, 0.125
    %v3067 = vmul.f32 %v3063, 0.125
    %v3068 = vmul.f32 %v3064, 0.125
    %v3069 = vld [vmem:[%s2 + $0x50] sm:$0xff]
    %v3070 = vld [vmem:[%s2 + $0x58] sm:$0xff]
    %v3071 = vld [vmem:[%s2 + $0x60] sm:$0xff]
    %v3072 = vld [vmem:[%s2 + $0x68] sm:$0xff]
    %v3073 = vld [vmem:[%s2 + $0x70] sm:$0xff]
    %v3074 = vld [vmem:[%s2 + $0x78] sm:$0xff]
    %v3075 = vld [vmem:[%s2 + $0x80] sm:$0xff]
    %v3076 = vld [vmem:[%s2 + $0x88] sm:$0xff]
    %v3078 = vsel %vm350, %v3065, 0
    %v3081 = vsel %vm350, %v3066, 0
    %v3084 = vsel %vm350, %v3067, 0
    %v3087 = vsel %vm350, %v3068, 0
    %3089 = vmatprep.subr.mxu0 0.0
    %3090 = vmatpush1.msra.mxu0 %v3073
    %3091 = vmatprep.subr.mxu0 0.0
    %3092 = vmatpush1.msra.mxu0 %v3074
    %3093 = vmatprep.subr.mxu0 0.0
    %3094 = vmatpush1.msra.mxu0 %v3075
    %3095 = vmatprep.subr.mxu0 0.0
    %3096 = vmatpush1.msra.mxu0 %v3076
    %3097 = vmatprep.subr.mxu0 0.0
    %3098 = vmatpush1.msra.mxu0 0.0
    %3099 = vmatprep.subr.mxu0 0.0
    %3100 = vmatpush1.msra.mxu0 0.0
    %3101 = vmatprep.subr.mxu0 0.0
    %3102 = vmatpush1.msra.mxu0 0.0
    %3103 = vmatprep.subr.mxu0 0.0
    %3104 = vmatpush1.msra.mxu0 0.0
    %3105 = vmatprep.subr.mxu0 0.0
    %3106 = vmatpush1.msra.mxu0 0.0
    %3107 = vmatprep.subr.mxu0 0.0
    %3108 = vmatpush1.msra.mxu0 0.0
    %3109 = vmatprep.subr.mxu0 0.0
    %3110 = vmatpush1.msra.mxu0 0.0
    %3111 = vmatprep.subr.mxu0 0.0
    %3112 = vmatpush1.msra.mxu0 0.0
    %3113 = vmatprep.subr.mxu0 0.0
    %3114 = vmatpush1.msra.mxu0 0.0
    %3115 = vmatprep.subr.mxu0 0.0
    %3116 = vmatpush1.msra.mxu0 0.0
    %3117 = vmatprep.subr.mxu0 0.0
    %3118 = vmatpush1.msra.mxu0 0.0
    %3119 = vmatprep.subr.mxu0 0.0
    %3120 = vmatpush1.msra.mxu0 0.0
    %3121 = vmatprep.subr.mxu0 0.0
    %3122 = vmatpush1.msra.mxu0 0.0
    %3123 = vmatprep.subr.mxu0 0.0
    %3124 = vmatpush1.msra.mxu0 0.0
    %3125 = vmatprep.subr.mxu0 0.0
    %3126 = vmatpush1.msra.mxu0 0.0
    %3127 = vmatprep.subr.mxu0 0.0
    %3128 = vmatpush1.msra.mxu0 0.0
    %3129 = vmatprep.subr.mxu0 0.0
    %3130 = vmatpush1.msra.mxu0 0.0
    %3131 = vmatprep.subr.mxu0 0.0
    %3132 = vmatpush1.msra.mxu0 0.0
    %3133 = vmatprep.subr.mxu0 0.0
    %3134 = vmatpush1.msra.mxu0 0.0
    %3135 = vmatprep.subr.mxu0 0.0
    %3136 = vmatpush1.msra.mxu0 0.0
    %3137 = vmatprep.subr.mxu0 0.0
    %3138 = vmatpush1.msra.mxu0 0.0
    %3139 = vmatprep.subr.mxu0 0.0
    %3140 = vmatpush1.msra.mxu0 0.0
    %3141 = vmatprep.subr.mxu0 0.0
    %3142 = vmatpush1.msra.mxu0 0.0
    %3143 = vmatprep.subr.mxu0 0.0
    %3144 = vmatpush1.msra.mxu0 0.0
    %3145 = vmatprep.subr.mxu0 0.0
    %3146 = vmatpush1.msra.mxu0 0.0
    %3147 = vmatprep.subr.mxu0 0.0
    %3148 = vmatpush1.msra.mxu0 0.0
    %3149 = vmatprep.subr.mxu0 0.0
    %3150 = vmatpush1.msra.mxu0 0.0
    %3151 = vmatprep.subr.mxu0 0.0
    %3152 = vmatpush1.msra.mxu0 0.0
    %3153 = vmatprep.mubr.f32.mxu0 0.0
    %3154 = vmatmul.mubr.f32.gmra.mrb[0].mxu0 %v3078
    %v3155 = vpop.f32.mrb[0].mxu0
    %v3156 = vadd.f32 0.0, %v3155
    %v3157 = vpop.f32.mrb[0].mxu0
    %3158 = vmatprep.mubr.f32.mxu0 0.0
    %3159 = vmatmul.mubr.f32.gmra.mrb[0].mxu0 %v3081
    %v3160 = vpop.f32.mrb[0].mxu0
    %v3161 = vadd.f32 0.0, %v3160
    %v3162 = vpop.f32.mrb[0].mxu0
    %3163 = vmatprep.mubr.f32.mxu0 0.0
    %3164 = vmatmul.mubr.f32.gmra.mrb[0].mxu0 %v3084
    %v3165 = vpop.f32.mrb[0].mxu0
    %v3166 = vadd.f32 0.0, %v3165
    %v3167 = vpop.f32.mrb[0].mxu0
    %3168 = vmatprep.mubr.f32.mxu0 0.0
    %3169 = vmatmul.mubr.f32.gmra.mrb[0].mxu0 %v3087
    %v3170 = vpop.f32.mrb[0].mxu0
    %v3171 = vadd.f32 0.0, %v3170
    %v3172 = vpop.f32.mrb[0].mxu0
    %3173 = vdwg.mxu0
    %3174 = vmatprep.subr.mxu0 0.0
    %3175 = vmatpush1.msra.mxu0 %v3069
    %3176 = vmatprep.subr.mxu0 0.0
    %3177 = vmatpush1.msra.mxu0 %v3070
    %3178 = vmatprep.subr.mxu0 0.0
    %3179 = vmatpush1.msra.mxu0 %v3071
    %3180 = vmatprep.subr.mxu0 0.0
    %3181 = vmatpush1.msra.mxu0 %v3072
    %3182 = vmatprep.subr.mxu0 0.0
    %3183 = vmatpush1.msra.mxu0 0.0
    %3184 = vmatprep.subr.mxu0 0.0
    %3185 = vmatpush1.msra.mxu0 0.0
    %3186 = vmatprep.subr.mxu0 0.0
    %3187 = vmatpush1.msra.mxu0 0.0
    %3188 = vmatprep.subr.mxu0 0.0
    %3189 = vmatpush1.msra.mxu0 0.0
    %3190 = vmatprep.subr.mxu0 0.0
    %3191 = vmatpush1.msra.mxu0 0.0
    %3192 = vmatprep.subr.mxu0 0.0
    %3193 = vmatpush1.msra.mxu0 0.0
    %3194 = vmatprep.subr.mxu0 0.0
    %3195 = vmatpush1.msra.mxu0 0.0
    %3196 = vmatprep.subr.mxu0 0.0
    %3197 = vmatpush1.msra.mxu0 0.0
    %3198 = vmatprep.subr.mxu0 0.0
    %3199 = vmatpush1.msra.mxu0 0.0
    %3200 = vmatprep.subr.mxu0 0.0
    %3201 = vmatpush1.msra.mxu0 0.0
    %3202 = vmatprep.subr.mxu0 0.0
    %3203 = vmatpush1.msra.mxu0 0.0
    %3204 = vmatprep.subr.mxu0 0.0
    %3205 = vmatpush1.msra.mxu0 0.0
    %3206 = vmatprep.subr.mxu0 0.0
    %3207 = vmatpush1.msra.mxu0 0.0
    %3208 = vmatprep.subr.mxu0 0.0
    %3209 = vmatpush1.msra.mxu0 0.0
    %3210 = vmatprep.subr.mxu0 0.0
    %3211 = vmatpush1.msra.mxu0 0.0
    %3212 = vmatprep.subr.mxu0 0.0
    %3213 = vmatpush1.msra.mxu0 0.0
    %3214 = vmatprep.subr.mxu0 0.0
    %3215 = vmatpush1.msra.mxu0 0.0
    %3216 = vmatprep.subr.mxu0 0.0
    %3217 = vmatpush1.msra.mxu0 0.0
    %3218 = vmatprep.subr.mxu0 0.0
    %3219 = vmatpush1.msra.mxu0 0.0
    %3220 = vmatprep.subr.mxu0 0.0
    %3221 = vmatpush1.msra.mxu0 0.0
    %3222 = vmatprep.subr.mxu0 0.0
    %3223 = vmatpush1.msra.mxu0 0.0
    %3224 = vmatprep.subr.mxu0 0.0
    %3225 = vmatpush1.msra.mxu0 0.0
    %3226 = vmatprep.subr.mxu0 0.0
    %3227 = vmatpush1.msra.mxu0 0.0
    %3228 = vmatprep.subr.mxu0 0.0
    %3229 = vmatpush1.msra.mxu0 0.0
    %3230 = vmatprep.subr.mxu0 0.0
    %3231 = vmatpush1.msra.mxu0 0.0
    %3232 = vmatprep.subr.mxu0 0.0
    %3233 = vmatpush1.msra.mxu0 0.0
    %3234 = vmatprep.subr.mxu0 0.0
    %3235 = vmatpush1.msra.mxu0 0.0
    %3236 = vmatprep.subr.mxu0 0.0
    %3237 = vmatpush1.msra.mxu0 0.0
    %3238 = vmatprep.mubr.f32.mxu0 0.0
    %3239 = vmatmul.mubr.f32.gmra.mrb[0].mxu0 %v578
    %v3240 = vpop.f32.mrb[0].mxu0
    %v3241 = vadd.f32 %v3156, %v3240
    %v3242 = vpop.f32.mrb[0].mxu0
    %3243 = vmatprep.mubr.f32.mxu0 0.0
    %3244 = vmatmul.mubr.f32.gmra.mrb[0].mxu0 %v581
    %v3245 = vpop.f32.mrb[0].mxu0
    %v3246 = vadd.f32 %v3161, %v3245
    %v3247 = vpop.f32.mrb[0].mxu0
    %3248 = vmatprep.mubr.f32.mxu0 0.0
    %3249 = vmatmul.mubr.f32.gmra.mrb[0].mxu0 %v584
    %v3250 = vpop.f32.mrb[0].mxu0
    %v3251 = vadd.f32 %v3166, %v3250
    %v3252 = vpop.f32.mrb[0].mxu0
    %3253 = vmatprep.mubr.f32.mxu0 0.0
    %3254 = vmatmul.mubr.f32.gmra.mrb[0].mxu0 %v587
    %v3255 = vpop.f32.mrb[0].mxu0
    %v3256 = vadd.f32 %v3171, %v3255
    %v3257 = vpop.f32.mrb[0].mxu0
    %3258 = vdwg.mxu0
    %v3259 = vld [vmem:[%s2 + $0x90] sm:$0x1]
    %v3260 = vlaneseq
    %v3261 = vshrl.u32 %v3260, 7
    %v3262 = vsub.s32 0, %v3261
    %v3263 = vrot.slane %v3259, %v3262
    %v3264 = vadd.f32 %v3241, %v3263
    %v3265 = vadd.f32 %v3246, %v3263
    %v3266 = vadd.f32 %v3251, %v3263
    %v3267 = vadd.f32 %v3256, %v3263
    %v3268 = vmax.f32 %v3264, 0.0
    %v3269 = vmax.f32 %v3265, 0.0
    %v3270 = vmax.f32 %v3266, 0.0
    %v3271 = vmax.f32 %v3267, 0.0
    %vm3272 = vcmp.eq.f32.partialorder %v540, %v521
    %v3273 = vsel %vm3272, 1, 0
    %v3274 = vcvt.s32.f32 %v3273
    %v3275 = vmul.f32 %v3274, 0.0625
    %v3277 = vsel %vm350, %v3275, 0
    %3279 = vmatprep.subr.mxu0 0.0
    %3280 = vmatpush1.msra.mxu0 %v3268
    %3281 = vmatprep.subr.mxu0 0.0
    %3282 = vmatpush1.msra.mxu0 %v3269
    %3283 = vmatprep.subr.mxu0 0.0
    %3284 = vmatpush1.msra.mxu0 %v3270
    %3285 = vmatprep.subr.mxu0 0.0
    %3286 = vmatpush1.msra.mxu0 %v3271
    %3287 = vmatprep.subr.mxu0 0.0
    %3288 = vmatpush1.msra.mxu0 0.0
    %3289 = vmatprep.subr.mxu0 0.0
    %3290 = vmatpush1.msra.mxu0 0.0
    %3291 = vmatprep.subr.mxu0 0.0
    %3292 = vmatpush1.msra.mxu0 0.0
    %3293 = vmatprep.subr.mxu0 0.0
    %3294 = vmatpush1.msra.mxu0 0.0
    %3295 = vmatprep.subr.mxu0 0.0
    %3296 = vmatpush1.msra.mxu0 0.0
    %3297 = vmatprep.subr.mxu0 0.0
    %3298 = vmatpush1.msra.mxu0 0.0
    %3299 = vmatprep.subr.mxu0 0.0
    %3300 = vmatpush1.msra.mxu0 0.0
    %3301 = vmatprep.subr.mxu0 0.0
    %3302 = vmatpush1.msra.mxu0 0.0
    %3303 = vmatprep.subr.mxu0 0.0
    %3304 = vmatpush1.msra.mxu0 0.0
    %3305 = vmatprep.subr.mxu0 0.0
    %3306 = vmatpush1.msra.mxu0 0.0
    %3307 = vmatprep.subr.mxu0 0.0
    %3308 = vmatpush1.msra.mxu0 0.0
    %3309 = vmatprep.subr.mxu0 0.0
    %3310 = vmatpush1.msra.mxu0 0.0
    %3311 = vmatprep.subr.mxu0 0.0
    %3312 = vmatpush1.msra.mxu0 0.0
    %3313 = vmatprep.subr.mxu0 0.0
    %3314 = vmatpush1.msra.mxu0 0.0
    %3315 = vmatprep.subr.mxu0 0.0
    %3316 = vmatpush1.msra.mxu0 0.0
    %3317 = vmatprep.subr.mxu0 0.0
    %3318 = vmatpush1.msra.mxu0 0.0
    %3319 = vmatprep.subr.mxu0 0.0
    %3320 = vmatpush1.msra.mxu0 0.0
    %3321 = vmatprep.subr.mxu0 0.0
    %3322 = vmatpush1.msra.mxu0 0.0
    %3323 = vmatprep.subr.mxu0 0.0
    %3324 = vmatpush1.msra.mxu0 0.0
    %3325 = vmatprep.subr.mxu0 0.0
    %3326 = vmatpush1.msra.mxu0 0.0
    %3327 = vmatprep.subr.mxu0 0.0
    %3328 = vmatpush1.msra.mxu0 0.0
    %3329 = vmatprep.subr.mxu0 0.0
    %3330 = vmatpush1.msra.mxu0 0.0
    %3331 = vmatprep.subr.mxu0 0.0
    %3332 = vmatpush1.msra.mxu0 0.0
    %3333 = vmatprep.subr.mxu0 0.0
    %3334 = vmatpush1.msra.mxu0 0.0
    %3335 = vmatprep.subr.mxu0 0.0
    %3336 = vmatpush1.msra.mxu0 0.0
    %3337 = vmatprep.subr.mxu0 0.0
    %3338 = vmatpush1.msra.mxu0 0.0
    %3339 = vmatprep.subr.mxu0 0.0
    %3340 = vmatpush1.msra.mxu0 0.0
    %3341 = vmatprep.subr.mxu0 0.0
    %3342 = vmatpush1.msra.mxu0 0.0
    %3343 = vmatprep.mubr.f32.mxu0 0.0
    %3344 = vmatmul.mubr.f32.gmra.mrb[0].mxu0 %v3277
    %v3345 = vpop.f32.mrb[0].mxu0
    %v3346 = vadd.f32 0.0, %v3345
    %v3347 = vpop.f32.mrb[0].mxu0
    %3348 = vdwg.mxu0
    %v3349 = vld [vmem:[%s2 + $0x98] sm:$0xff]
    %v3350 = vld [vmem:[%s2 + $0xa0] sm:$0xff]
    %v3351 = vld [vmem:[%s2 + $0xa8] sm:$0xff]
    %v3352 = vld [vmem:[%s2 + $0xb0] sm:$0xff]
    %v3353 = vld [vmem:[%s2 + $0xb8] sm:$0x1]
    %v3354 = vlaneseq
    %v3355 = vshrl.u32 %v3354, 7
    %v3356 = vsub.s32 0, %v3355
    %v3357 = vrot.slane %v3353, %v3356
    %v3359 = vsel %vm350, %v3346, 0
    %3361 = vmatprep.subr.mxu0 0.0
    %3362 = vmatpush1.msra.mxu0 %v3349
    %3363 = vmatprep.subr.mxu0 0.0
    %3364 = vmatpush1.msra.mxu0 %v3350
    %3365 = vmatprep.subr.mxu0 0.0
    %3366 = vmatpush1.msra.mxu0 %v3351
    %3367 = vmatprep.subr.mxu0 0.0
    %3368 = vmatpush1.msra.mxu0 %v3352
    %3369 = vmatprep.subr.mxu0 0.0
    %3370 = vmatpush1.msra.mxu0 0.0
    %3371 = vmatprep.subr.mxu0 0.0
    %3372 = vmatpush1.msra.mxu0 0.0
    %3373 = vmatprep.subr.mxu0 0.0
    %3374 = vmatpush1.msra.mxu0 0.0
    %3375 = vmatprep.subr.mxu0 0.0
    %3376 = vmatpush1.msra.mxu0 0.0
    %3377 = vmatprep.subr.mxu0 0.0
    %3378 = vmatpush1.msra.mxu0 0.0
    %3379 = vmatprep.subr.mxu0 0.0
    %3380 = vmatpush1.msra.mxu0 0.0
    %3381 = vmatprep.subr.mxu0 0.0
    %3382 = vmatpush1.msra.mxu0 0.0
    %3383 = vmatprep.subr.mxu0 0.0
    %3384 = vmatpush1.msra.mxu0 0.0
    %3385 = vmatprep.subr.mxu0 0.0
    %3386 = vmatpush1.msra.mxu0 0.0
    %3387 = vmatprep.subr.mxu0 0.0
    %3388 = vmatpush1.msra.mxu0 0.0
    %3389 = vmatprep.subr.mxu0 0.0
    %3390 = vmatpush1.msra.mxu0 0.0
    %3391 = vmatprep.subr.mxu0 0.0
    %3392 = vmatpush1.msra.mxu0 0.0
    %3393 = vmatprep.subr.mxu0 0.0
    %3394 = vmatpush1.msra.mxu0 0.0
    %3395 = vmatprep.subr.mxu0 0.0
    %3396 = vmatpush1.msra.mxu0 0.0
    %3397 = vmatprep.subr.mxu0 0.0
    %3398 = vmatpush1.msra.mxu0 0.0
    %3399 = vmatprep.subr.mxu0 0.0
    %3400 = vmatpush1.msra.mxu0 0.0
    %3401 = vmatprep.subr.mxu0 0.0
    %3402 = vmatpush1.msra.mxu0 0.0
    %3403 = vmatprep.subr.mxu0 0.0
    %3404 = vmatpush1.msra.mxu0 0.0
    %3405 = vmatprep.subr.mxu0 0.0
    %3406 = vmatpush1.msra.mxu0 0.0
    %3407 = vmatprep.subr.mxu0 0.0
    %3408 = vmatpush1.msra.mxu0 0.0
    %3409 = vmatprep.subr.mxu0 0.0
    %3410 = vmatpush1.msra.mxu0 0.0
    %3411 = vmatprep.subr.mxu0 0.0
    %3412 = vmatpush1.msra.mxu0 0.0
    %3413 = vmatprep.subr.mxu0 0.0
    %3414 = vmatpush1.msra.mxu0 0.0
    %3415 = vmatprep.subr.mxu0 0.0
    %3416 = vmatpush1.msra.mxu0 0.0
    %3417 = vmatprep.subr.mxu0 0.0
    %3418 = vmatpush1.msra.mxu0 0.0
    %3419 = vmatprep.subr.mxu0 0.0
    %3420 = vmatpush1.msra.mxu0 0.0
    %3421 = vmatprep.subr.mxu0 0.0
    %3422 = vmatpush1.msra.mxu0 0.0
    %3423 = vmatprep.subr.mxu0 0.0
    %3424 = vmatpush1.msra.mxu0 0.0
    %3425 = vmatprep.mubr.f32.mxu0 0.0
    %3426 = vmatmul.mubr.f32.gmra.mrb[0].mxu0 %v3359
    %v3427 = vpop.f32.mrb[0].mxu0
    %v3428 = vadd.f32 %v3357, %v3427
    %v3429 = vpop.f32.mrb[0].mxu0
    %3430 = vdwg.mxu0
    %v3431 = vmax.f32 %v3428, 0.0
    %v3432 = vld [vmem:[%s2 + $0xc0] sm:$0xff]
    %v3433 = vld [vmem:[%s2 + $0xc8] sm:$0xff]
    %v3434 = vld [vmem:[%s2 + $0xd0] sm:$0xff]
    %v3435 = vld [vmem:[%s2 + $0xd8] sm:$0xff]
    %v3436 = vld [vmem:[%s2 + $0xe0] sm:$0xff]
    %v3437 = vld [vmem:[%s2 + $0xe8] sm:$0xff]
    %v3438 = vld [vmem:[%s2 + $0xf0] sm:$0xff]
    %v3439 = vld [vmem:[%s2 + $0xf8] sm:$0xff]
    %v3440 = vld [vmem:[%s2 + $0x100] sm:$0x1]
    %v3441 = vlaneseq
    %v3442 = vshrl.u32 %v3441, 7
    %v3443 = vsub.s32 0, %v3442
    %v3444 = vrot.slane %v3440, %v3443
    %vm3445 = vcmask 523264
    %v3447 = vsel %vm3445, %v3431, 0
    %3449 = vmatprep.subr.mxu0 0.0
    %3450 = vmatpush1.msra.mxu0 %v3432
    %3451 = vmatprep.subr.mxu0 0.0
    %3452 = vmatpush1.msra.mxu0 %v3433
    %3453 = vmatprep.subr.mxu0 0.0
    %3454 = vmatpush1.msra.mxu0 %v3434
    %3455 = vmatprep.subr.mxu0 0.0
    %3456 = vmatpush1.msra.mxu0 %v3435
    %3457 = vmatprep.subr.mxu0 0.0
    %3458 = vmatpush1.msra.mxu0 %v3436
    %3459 = vmatprep.subr.mxu0 0.0
    %3460 = vmatpush1.msra.mxu0 %v3437
    %3461 = vmatprep.subr.mxu0 0.0
    %3462 = vmatpush1.msra.mxu0 %v3438
    %3463 = vmatprep.subr.mxu0 0.0
    %3464 = vmatpush1.msra.mxu0 %v3439
    %3465 = vmatprep.subr.mxu0 0.0
    %3466 = vmatpush1.msra.mxu0 0.0
    %3467 = vmatprep.subr.mxu0 0.0
    %3468 = vmatpush1.msra.mxu0 0.0
    %3469 = vmatprep.subr.mxu0 0.0
    %3470 = vmatpush1.msra.mxu0 0.0
    %3471 = vmatprep.subr.mxu0 0.0
    %3472 = vmatpush1.msra.mxu0 0.0
    %3473 = vmatprep.subr.mxu0 0.0
    %3474 = vmatpush1.msra.mxu0 0.0
    %3475 = vmatprep.subr.mxu0 0.0
    %3476 = vmatpush1.msra.mxu0 0.0
    %3477 = vmatprep.subr.mxu0 0.0
    %3478 = vmatpush1.msra.mxu0 0.0
    %3479 = vmatprep.subr.mxu0 0.0
    %3480 = vmatpush1.msra.mxu0 0.0
    %3481 = vmatprep.subr.mxu0 0.0
    %3482 = vmatpush1.msra.mxu0 0.0
    %3483 = vmatprep.subr.mxu0 0.0
    %3484 = vmatpush1.msra.mxu0 0.0
    %3485 = vmatprep.subr.mxu0 0.0
    %3486 = vmatpush1.msra.mxu0 0.0
    %3487 = vmatprep.subr.mxu0 0.0
    %3488 = vmatpush1.msra.mxu0 0.0
    %3489 = vmatprep.subr.mxu0 0.0
    %3490 = vmatpush1.msra.mxu0 0.0
    %3491 = vmatprep.subr.mxu0 0.0
    %3492 = vmatpush1.msra.mxu0 0.0
    %3493 = vmatprep.subr.mxu0 0.0
    %3494 = vmatpush1.msra.mxu0 0.0
    %3495 = vmatprep.subr.mxu0 0.0
    %3496 = vmatpush1.msra.mxu0 0.0
    %3497 = vmatprep.subr.mxu0 0.0
    %3498 = vmatpush1.msra.mxu0 0.0
    %3499 = vmatprep.subr.mxu0 0.0
    %3500 = vmatpush1.msra.mxu0 0.0
    %3501 = vmatprep.subr.mxu0 0.0
    %3502 = vmatpush1.msra.mxu0 0.0
    %3503 = vmatprep.subr.mxu0 0.0
    %3504 = vmatpush1.msra.mxu0 0.0
    %3505 = vmatprep.subr.mxu0 0.0
    %3506 = vmatpush1.msra.mxu0 0.0
    %3507 = vmatprep.subr.mxu0 0.0
    %3508 = vmatpush1.msra.mxu0 0.0
    %3509 = vmatprep.subr.mxu0 0.0
    %3510 = vmatpush1.msra.mxu0 0.0
    %3511 = vmatprep.subr.mxu0 0.0
    %3512 = vmatpush1.msra.mxu0 0.0
    %3513 = vmatprep.mubr.f32.mxu0 0.0
    %3514 = vmatmul.mubr.f32.gmra.mrb[0].mxu0 %v3447
    %v3515 = vpop.f32.mrb[0].mxu0
    %v3516 = vadd.f32 %v3444, %v3515
    %v3517 = vpop.f32.mrb[0].mxu0
    %3518 = vdwg.mxu0
    %v3519 = vmax.f32 %v3516, 0.0
    %v3520 = vld [vmem:[%s2 + $0x108] sm:$0xff]
    %v3521 = vld [vmem:[%s2 + $0x110] sm:$0xff]
    %v3522 = vld [vmem:[%s2 + $0x118] sm:$0xff]
    %v3523 = vld [vmem:[%s2 + $0x120] sm:$0xff]
    %v3524 = vld [vmem:[%s2 + $0x128] sm:$0x1]
    %v3525 = vlaneseq
    %v3526 = vshrl.u32 %v3525, 7
    %v3527 = vsub.s32 0, %v3526
    %v3528 = vrot.slane %v3524, %v3527
    %v3530 = vsel %vm350, %v3519, 0
    %3532 = vmatprep.subr.mxu0 0.0
    %3533 = vmatpush1.msra.mxu0 %v3520
    %3534 = vmatprep.subr.mxu0 0.0
    %3535 = vmatpush1.msra.mxu0 %v3521
    %3536 = vmatprep.subr.mxu0 0.0
    %3537 = vmatpush1.msra.mxu0 %v3522
    %3538 = vmatprep.subr.mxu0 0.0
    %3539 = vmatpush1.msra.mxu0 %v3523
    %3540 = vmatprep.subr.mxu0 0.0
    %3541 = vmatpush1.msra.mxu0 0.0
    %3542 = vmatprep.subr.mxu0 0.0
    %3543 = vmatpush1.msra.mxu0 0.0
    %3544 = vmatprep.subr.mxu0 0.0
    %3545 = vmatpush1.msra.mxu0 0.0
    %3546 = vmatprep.subr.mxu0 0.0
    %3547 = vmatpush1.msra.mxu0 0.0
    %3548 = vmatprep.subr.mxu0 0.0
    %3549 = vmatpush1.msra.mxu0 0.0
    %3550 = vmatprep.subr.mxu0 0.0
    %3551 = vmatpush1.msra.mxu0 0.0
    %3552 = vmatprep.subr.mxu0 0.0
    %3553 = vmatpush1.msra.mxu0 0.0
    %3554 = vmatprep.subr.mxu0 0.0
    %3555 = vmatpush1.msra.mxu0 0.0
    %3556 = vmatprep.subr.mxu0 0.0
    %3557 = vmatpush1.msra.mxu0 0.0
    %3558 = vmatprep.subr.mxu0 0.0
    %3559 = vmatpush1.msra.mxu0 0.0
    %3560 = vmatprep.subr.mxu0 0.0
    %3561 = vmatpush1.msra.mxu0 0.0
    %3562 = vmatprep.subr.mxu0 0.0
    %3563 = vmatpush1.msra.mxu0 0.0
    %3564 = vmatprep.subr.mxu0 0.0
    %3565 = vmatpush1.msra.mxu0 0.0
    %3566 = vmatprep.subr.mxu0 0.0
    %3567 = vmatpush1.msra.mxu0 0.0
    %3568 = vmatprep.subr.mxu0 0.0
    %3569 = vmatpush1.msra.mxu0 0.0
    %3570 = vmatprep.subr.mxu0 0.0
    %3571 = vmatpush1.msra.mxu0 0.0
    %3572 = vmatprep.subr.mxu0 0.0
    %3573 = vmatpush1.msra.mxu0 0.0
    %3574 = vmatprep.subr.mxu0 0.0
    %3575 = vmatpush1.msra.mxu0 0.0
    %3576 = vmatprep.subr.mxu0 0.0
    %3577 = vmatpush1.msra.mxu0 0.0
    %3578 = vmatprep.subr.mxu0 0.0
    %3579 = vmatpush1.msra.mxu0 0.0
    %3580 = vmatprep.subr.mxu0 0.0
    %3581 = vmatpush1.msra.mxu0 0.0
    %3582 = vmatprep.subr.mxu0 0.0
    %3583 = vmatpush1.msra.mxu0 0.0
    %3584 = vmatprep.subr.mxu0 0.0
    %3585 = vmatpush1.msra.mxu0 0.0
    %3586 = vmatprep.subr.mxu0 0.0
    %3587 = vmatpush1.msra.mxu0 0.0
    %3588 = vmatprep.subr.mxu0 0.0
    %3589 = vmatpush1.msra.mxu0 0.0
    %3590 = vmatprep.subr.mxu0 0.0
    %3591 = vmatpush1.msra.mxu0 0.0
    %3592 = vmatprep.subr.mxu0 0.0
    %3593 = vmatpush1.msra.mxu0 0.0
    %3594 = vmatprep.subr.mxu0 0.0
    %3595 = vmatpush1.msra.mxu0 0.0
    %3596 = vmatprep.mubr.f32.mxu0 0.0
    %3597 = vmatmul.mubr.f32.gmra.mrb[0].mxu0 %v3530
    %v3598 = vpop.f32.mrb[0].mxu0
    %v3599 = vadd.f32 %v3528, %v3598
    %v3600 = vpop.f32.mrb[0].mxu0
    %3601 = vdwg.mxu0
    %3602 = vst [vmem:[#allocation2] sm:$0x3] %v3599
    // Predicated region
    $region14: #{base_model_forward.1} parent=1 // pred_check
      _
    $region15: #{base_model_forward.1} parent=1 // pred_check_branch
      %3604 = sbr.rel (0) target = $region17
    $region16: #{base_model_forward.1} parent=1 // pred_region
      %s3606 = ssub.s32 32, 32
      %3607 = vsyncadd [#allocation3], %s3606
      %s3609 = sshll.u32 [#allocation2], 4
      %s3610 = int_to_ptr.vmem [resolvable:$true] %s3609
      %3612 = dma.vmem_to_hbm [thread:$0]  %s3610, 32, %s3, [#allocation3]
    $region17: #{base_model_forward.1} parent=1 // pred_fallthru
      _
    // Predicated region
    $region18: #{base_model_forward.1} parent=1 // pred_check
      _
    $region19: #{base_model_forward.1} parent=1 // pred_check_branch
      %3614 = sbr.rel (0) target = $region21
    $region20: #{base_model_forward.1} parent=1 // pred_region
      %3615 = dma.done [#allocation3], 32
    $region21: #{base_model_forward.1} parent=1 // pred_fallthru
      _
    %3616 = vsyncpa [#allocation3], 1

</llo_original>
